<compile_context>
chip_gen: v7x
topology: tpu7x:2x2x1
jax: 0.10.0
libtpu: 0.0.40
codegen_flags: <defaults>
</compile_context>

<pallas_src>
import math

import jax
import jax.numpy as jnp
import numpy as np
from jax.experimental import pallas as pl
from jax.experimental.pallas import tpu as pltpu


def _round_up(x, m):
    return ((x + m - 1) // m) * m


# --------------------------------------------------------------------------- #
# Kernel
# --------------------------------------------------------------------------- #
def _make_kernel(W, T, rhp):
    """Kernel body for static width W, texture_blocks T, padded rgb-hidden rhp."""
    bf16 = jnp.bfloat16
    f32 = jnp.float32

    def kernel(x_ref, wf_ref, wm_ref, wr2_ref, b_ref, o_ref):
        # x_ref   : [in_pad, tile_n]        bf16  concat[shape,viewdir,tex,ones,0]^T
        # wf_ref  : [(2+T)*W, in_pad]       bf16  fused stage-0 weight (+ folded biases)
        # wm_ref  : [(1+T)*W + rhp, W]      bf16  [A2a; At_0..; Ar1(padded)]
        # wr2_ref : [8, rhp]                bf16  Ar2 padded (rows 3:8, cols rh: zero)
        # b_ref   : [T*W + rhp + 8, 1]      f32   packed mid/rgb bias column
        # o_ref   : [8, tile_n]             f32   rgb rows 0:3, padding rows 3:8
        x = x_ref[...]
        b = b_ref[...]

        # ---- fused stage 0 (one MXU weight push):
        #      [ A1@shape + b1 ; A2b@viewdir + b2 ; Atl_j@tex + btl_j ... ]
        f = jnp.dot(wf_ref[...], x, preferred_element_type=f32)   # [(2+T)W, tile]

        s = f[0:W, :]            # encoding_shape output (linear, bias folded)
        v = f[W:2 * W, :]        # A2b @ viewdir + b2

        # ---- encoding_viewdir: Linear(W+d_viewdir -> W) + ReLU ----------------
        y = jnp.dot(wm_ref[0:W, :], s.astype(bf16), preferred_element_type=f32)
        y = jnp.maximum(y + v, 0.0)

        # ---- texture blocks ---------------------------------------------------
        for j in range(T):
            z = jnp.maximum(f[(2 + j) * W:(3 + j) * W, :], 0.0)   # latent layer
            y = y + z
            y = jnp.dot(wm_ref[(1 + j) * W:(2 + j) * W, :], y.astype(bf16),
                        preferred_element_type=f32)
            y = jnp.maximum(y + b[j * W:(j + 1) * W, :], 0.0)

        # ---- rgb head: Linear(W -> W//2) + ReLU + Linear(W//2 -> 3) + Sigmoid -
        r1o = (1 + T) * W
        bo = T * W
        h = jnp.dot(wm_ref[r1o:r1o + rhp, :], y.astype(bf16),
                    preferred_element_type=f32)
        h = jnp.maximum(h + b[bo:bo + rhp, :], 0.0)
        rgb = jnp.dot(wr2_ref[...], h.astype(bf16), preferred_element_type=f32)
        rgb = jax.nn.sigmoid(rgb + b[bo + rhp:bo + rhp + 8, :])    # [8, tile]
        o_ref[...] = rgb.astype(o_ref.dtype)     # full-tile, unmasked lane-dense store

    return kernel


# --------------------------------------------------------------------------- #
# Parameter packing (done once, outside the kernel)
# --------------------------------------------------------------------------- #
def pack_params(p, W, d_viewdir, latent_dim, moe_out_W, texture_blocks):
    """Pack torch-layout params ([out,in] weights, [out] biases) into 4 operands."""
    T = texture_blocks
    in_total = moe_out_W + d_viewdir + latent_dim
    in_pad = _round_up(in_total + 1, 64)        # +1 = ones row (folded stage-0 biases)
    rh = W // 2
    rhp = _round_up(rh, 8)
    f32 = jnp.float32

    A2 = p["A2"]
    A2a, A2b = A2[:, :W], A2[:, W:]

    # fused stage-0 weight: block structure over [shape | viewdir | texture | 1] cols
    wf = jnp.zeros(((2 + T) * W, in_pad), f32)
    wf = wf.at[0:W, 0:moe_out_W].set(p["A1"])
    wf = wf.at[0:W, in_total].set(p["b1"])
    wf = wf.at[W:2 * W, moe_out_W:moe_out_W + d_viewdir].set(A2b)
    wf = wf.at[W:2 * W, in_total].set(p["b2"])
    off = moe_out_W + d_viewdir
    for j in range(T):
        wf = wf.at[(2 + j) * W:(3 + j) * W, off:off + latent_dim].set(p[f"Atl_{j}"])
        wf = wf.at[(2 + j) * W:(3 + j) * W, in_total].set(p[f"btl_{j}"])

    # stacked mid weights: A2a, texture layers, rgb layer 1 (padded to rhp rows)
    wm = jnp.zeros(((1 + T) * W + rhp, W), f32)
    wm = wm.at[0:W, :].set(A2a)
    for j in range(T):
        wm = wm.at[(1 + j) * W:(2 + j) * W, :].set(p[f"At_{j}"])
    wm = wm.at[(1 + T) * W:(1 + T) * W + rh, :].set(p["Ar1"])

    # rgb layer 2, padded to [8, rhp]
    wr2 = jnp.zeros((8, rhp), f32).at[0:3, 0:rh].set(p["Ar2"])

    # packed bias column for the mid / rgb layers (stage-0 biases live in wf)
    nb = T * W + rhp + 8
    bp = jnp.zeros((nb, 1), f32)
    for j in range(T):
        bp = bp.at[j * W:(j + 1) * W, 0].set(p[f"bt_{j}"])
    bp = bp.at[T * W:T * W + rh, 0].set(p["br1"])
    bp = bp.at[T * W + rhp:T * W + rhp + 3, 0].set(p["br2"])

    return dict(
        wfused=wf.astype(jnp.bfloat16),
        wmid=wm.astype(jnp.bfloat16),
        wr2=wr2.astype(jnp.bfloat16),
        bias=bp,
        W=W, T=T, rhp=rhp, in_total=in_total, in_pad=in_pad,
    )


# --------------------------------------------------------------------------- #
# Wrapper
# --------------------------------------------------------------------------- #
def code_nerf_rgb_head(shape_out, viewdir, texture_latent, packed,
                       *, tile_n=2048, transpose_output=True):
    """Pallas implementation of CodeNeRFRGBHead.forward.

    Returns [N, 3] f32 (or [3, N] if transpose_output=False, saving one HBM pass).
    """
    W, T = packed["W"], packed["T"]
    rhp, in_total, in_pad = packed["rhp"], packed["in_total"], packed["in_pad"]
    N = shape_out.shape[0]
    bf16 = jnp.bfloat16

    # ---- tile choice: lane-aligned, <=8192 (stays far under the 32 MiB scoped
    # VMEM default even double-buffered), and >=2 grid steps when N allows so
    # dimension_semantics=("parallel",) shards across both v7x TensorCores.
    tile_n = max(128, min(int(tile_n), 8192))
    if N <= 128:
        tile_n = 128
    else:
        tile_n = min(tile_n, _round_up(pl.cdiv(N, 2), 128))
    n_pad = -N % tile_n
    Np = N + n_pad

    # ---- build feature-major bf16 slab [in_pad, Np] (cast to bf16 *before*
    # concat/pad/transpose so the wrapper passes move half the bytes).
    #   rows [0, in_total)  : concat(shape_out, viewdir, texture_latent)^T
    #   row  in_total       : 1.0 (ones row -> stage-0 biases folded into wfused)
    #   rows (in_total, in_pad), cols [N, Np) : 0
    x = jnp.concatenate(
        [shape_out.astype(bf16), viewdir.astype(bf16),
         texture_latent.astype(bf16), jnp.ones((N, 1), bf16)], axis=-1)
    x = jnp.pad(x, ((0, n_pad), (0, in_pad - (in_total + 1))))
    x_t = x.T                                              # [in_pad, Np] bf16

    grid = (Np // tile_n,)
    kernel = _make_kernel(W, T, rhp)

    def const_spec(arr):
        return pl.BlockSpec(arr.shape, lambda i: (0, 0))

    flops = 2 * Np * (in_pad * (2 + T) * W + (1 + T) * W * W + rhp * W + 8 * rhp)
    bytes_accessed = (Np * in_pad * 2 + Np * 8 * 4
                      + 2 * (packed["wfused"].size + packed["wmid"].size
                             + packed["wr2"].size)
                      + 4 * packed["bias"].size)
    cost = pl.CostEstimate(flops=flops, transcendentals=8 * Np,
                           bytes_accessed=bytes_accessed)

    out_t = pl.pallas_call(
        kernel,
        out_shape=jax.ShapeDtypeStruct((8, Np), jnp.float32),   # sublane-full output
        grid_spec=pltpu.PrefetchScalarGridSpec(
            num_scalar_prefetch=0,
            grid=grid,
            in_specs=[pl.BlockSpec((in_pad, tile_n), lambda i: (0, i)),
                      const_spec(packed["wfused"]),
                      const_spec(packed["wmid"]),
                      const_spec(packed["wr2"]),
                      const_spec(packed["bias"])],
            out_specs=pl.BlockSpec((8, tile_n), lambda i: (0, i)),
        ),
        compiler_params=pltpu.CompilerParams(dimension_semantics=("parallel",)),
        cost_estimate=cost,
    )(x_t, packed["wfused"], packed["wmid"], packed["wr2"], packed["bias"])

    rgb = out_t[0:3, :N]                                   # drop pad rows / cols
    return rgb.T if transpose_output else rgb              # [N, 3] (or [3, N])


# --------------------------------------------------------------------------- #
# Synthetic params + pure-JAX reference (torch nn.Linear convention: [out, in])
# --------------------------------------------------------------------------- #
def init_params(key, W, d_viewdir, latent_dim, moe_out_W, texture_blocks=1):
    n_keys = 2 * (4 + 2 * texture_blocks)
    keys = jax.random.split(key, n_keys)
    ki = iter(range(n_keys))

    def linear(out_f, in_f):
        bound = 1.0 / math.sqrt(in_f)
        A = jax.random.uniform(keys[next(ki)], (out_f, in_f), jnp.float32, -bound, bound)
        b = jax.random.uniform(keys[next(ki)], (out_f,), jnp.float32, -bound, bound)
        return A, b

    p = {}
    p["A1"], p["b1"] = linear(W, moe_out_W)                 # encoding_shape
    p["A2"], p["b2"] = linear(W, W + d_viewdir)             # encoding_viewdir
    for j in range(texture_blocks):
        p[f"Atl_{j}"], p[f"btl_{j}"] = linear(W, latent_dim)
        p[f"At_{j}"], p[f"bt_{j}"] = linear(W, W)
    p["Ar1"], p["br1"] = linear(W // 2, W)
    p["Ar2"], p["br2"] = linear(3, W // 2)
    return p


def reference_forward(shape_out, viewdir, texture_latent, p, texture_blocks=1):
    y = shape_out @ p["A1"].T + p["b1"]
    y = jnp.concatenate([y, viewdir], axis=-1)
    y = jax.nn.relu(y @ p["A2"].T + p["b2"])
    for j in range(texture_blocks):
        z = jax.nn.relu(texture_latent @ p[f"Atl_{j}"].T + p[f"btl_{j}"])
        y = y + z
        y = jax.nn.relu(y @ p[f"At_{j}"].T + p[f"bt_{j}"])
    h = jax.nn.relu(y @ p["Ar1"].T + p["br1"])
    return jax.nn.sigmoid(h @ p["Ar2"].T + p["br2"])


# --------------------------------------------------------------------------- #
if __name__ == "__main__":
    W, d_viewdir, latent_dim, moe_out_W, T = 32, 8, 16, 32, 1
    N, TILE_N = 4096, 2048          # grid of 2 even steps -> both v7x cores busy

    key = jax.random.PRNGKey(0)
    kp, ks, kv, kt = jax.random.split(key, 4)
    params = init_params(kp, W, d_viewdir, latent_dim, moe_out_W, T)
    shape_out = jax.random.normal(ks, (N, moe_out_W), jnp.float32)
    viewdir = jax.random.normal(kv, (N, d_viewdir), jnp.float32)
    texture_latent = jax.random.normal(kt, (N, latent_dim), jnp.float32)

    packed = pack_params(params, W, d_viewdir, latent_dim, moe_out_W, T)

    rgb = code_nerf_rgb_head(shape_out, viewdir, texture_latent, packed, tile_n=TILE_N)
    rgb = jax.block_until_ready(rgb)

    ref = reference_forward(shape_out, viewdir, texture_latent, params, T)
    # bf16 MXU inputs with f32 accumulation -> loosened tolerance vs f32 reference
    np.testing.assert_allclose(np.asarray(rgb), np.asarray(ref), atol=2e-2, rtol=2e-2)

    print("KERNEL_OK")
</pallas_src>

<mosaic_0001>
module attributes {stable_mosaic.version = 11 : i64} {
  func.func @kernel(%arg0: i32, %arg1: memref<64x2048xbf16, #tpu.memory_space<vmem>>, %arg2: memref<96x64xbf16, #tpu.memory_space<vmem>>, %arg3: memref<80x32xbf16, #tpu.memory_space<vmem>>, %arg4: memref<8x16xbf16, #tpu.memory_space<vmem>>, %arg5: memref<56x1xf32, #tpu.memory_space<vmem>>, %arg6: memref<8x2048xf32, #tpu.memory_space<vmem>>) attributes {dimension_semantics = [#tpu.dimension_semantics<parallel>], iteration_bounds = array<i64: 2>, scalar_prefetch = 0 : i64, scratch_operands = 0 : i64, tpu.core_type = #tpu.core_type<tc>, window_params = [{transform_indices = @transform_0, window_bounds = array<i64: 64, 2048>}, {pipeline_mode = #tpu.pipeline_mode<synchronous>, transform_indices = @transform_1, window_bounds = array<i64: 96, 64>}, {pipeline_mode = #tpu.pipeline_mode<synchronous>, transform_indices = @transform_2, window_bounds = array<i64: 80, 32>}, {pipeline_mode = #tpu.pipeline_mode<synchronous>, transform_indices = @transform_3, window_bounds = array<i64: 8, 16>}, {pipeline_mode = #tpu.pipeline_mode<synchronous>, transform_indices = @transform_4, window_bounds = array<i64: 56, 1>}, {transform_indices = @transform_5, window_bounds = array<i64: 8, 2048>}]} {
    %c0 = arith.constant 0 : index
    %c0_0 = arith.constant 0 : index
    %0 = vector.load %arg1[%c0, %c0_0] : memref<64x2048xbf16, #tpu.memory_space<vmem>>, vector<64x2048xbf16>
    %c0_1 = arith.constant 0 : index
    %c0_2 = arith.constant 0 : index
    %1 = vector.load %arg5[%c0_1, %c0_2] : memref<56x1xf32, #tpu.memory_space<vmem>>, vector<56x1xf32>
    %c0_3 = arith.constant 0 : index
    %c0_4 = arith.constant 0 : index
    %2 = vector.load %arg2[%c0_3, %c0_4] : memref<96x64xbf16, #tpu.memory_space<vmem>>, vector<96x64xbf16>
    %cst = arith.constant dense<0.000000e+00> : vector<96x2048xf32>
    %3 = tpu.matmul %2, %0, %cst {dimension_numbers = #tpu.dot_dimension_numbers<[1], [0], [0], [1], [0, 0, 1, 1], [], []>} : vector<96x64xbf16>, vector<64x2048xbf16>, vector<96x2048xf32> -> vector<96x2048xf32>
    %4 = vector.extract_strided_slice %3 {offsets = [0, 0], sizes = [32, 2048], strides = [1, 1]} : vector<96x2048xf32> to vector<32x2048xf32>
    %5 = vector.extract_strided_slice %3 {offsets = [32, 0], sizes = [32, 2048], strides = [1, 1]} : vector<96x2048xf32> to vector<32x2048xf32>
    %c0_5 = arith.constant 0 : index
    %c0_6 = arith.constant 0 : index
    %6 = vector.load %arg3[%c0_5, %c0_6] : memref<80x32xbf16, #tpu.memory_space<vmem>>, vector<32x32xbf16>
    %7 = arith.truncf %4 : vector<32x2048xf32> to vector<32x2048xbf16>
    %cst_7 = arith.constant dense<0.000000e+00> : vector<32x2048xf32>
    %8 = tpu.matmul %6, %7, %cst_7 {dimension_numbers = #tpu.dot_dimension_numbers<[1], [0], [0], [1], [0, 0, 1, 1], [], []>} : vector<32x32xbf16>, vector<32x2048xbf16>, vector<32x2048xf32> -> vector<32x2048xf32>
    %9 = arith.addf %8, %5 : vector<32x2048xf32>
    %cst_8 = arith.constant 0.000000e+00 : f32
    %10 = vector.broadcast %cst_8 : f32 to vector<32x2048xf32>
    %11 = arith.maximumf %9, %10 : vector<32x2048xf32>
    %12 = vector.extract_strided_slice %3 {offsets = [64, 0], sizes = [32, 2048], strides = [1, 1]} : vector<96x2048xf32> to vector<32x2048xf32>
    %cst_9 = arith.constant 0.000000e+00 : f32
    %13 = vector.broadcast %cst_9 : f32 to vector<32x2048xf32>
    %14 = arith.maximumf %12, %13 : vector<32x2048xf32>
    %15 = arith.addf %11, %14 : vector<32x2048xf32>
    %c32 = arith.constant 32 : index
    %c0_10 = arith.constant 0 : index
    %16 = vector.load %arg3[%c32, %c0_10] : memref<80x32xbf16, #tpu.memory_space<vmem>>, vector<32x32xbf16>
    %17 = arith.truncf %15 : vector<32x2048xf32> to vector<32x2048xbf16>
    %cst_11 = arith.constant dense<0.000000e+00> : vector<32x2048xf32>
    %18 = tpu.matmul %16, %17, %cst_11 {dimension_numbers = #tpu.dot_dimension_numbers<[1], [0], [0], [1], [0, 0, 1, 1], [], []>} : vector<32x32xbf16>, vector<32x2048xbf16>, vector<32x2048xf32> -> vector<32x2048xf32>
    %19 = vector.extract_strided_slice %1 {offsets = [0, 0], sizes = [32, 1], strides = [1, 1]} : vector<56x1xf32> to vector<32x1xf32>
    %20 = vector.broadcast %19 : vector<32x1xf32> to vector<32x2048xf32>
    %21 = arith.addf %18, %20 : vector<32x2048xf32>
    %cst_12 = arith.constant 0.000000e+00 : f32
    %22 = vector.broadcast %cst_12 : f32 to vector<32x2048xf32>
    %23 = arith.maximumf %21, %22 : vector<32x2048xf32>
    %c64 = arith.constant 64 : index
    %c0_13 = arith.constant 0 : index
    %24 = vector.load %arg3[%c64, %c0_13] : memref<80x32xbf16, #tpu.memory_space<vmem>>, vector<16x32xbf16>
    %25 = arith.truncf %23 : vector<32x2048xf32> to vector<32x2048xbf16>
    %cst_14 = arith.constant dense<0.000000e+00> : vector<16x2048xf32>
    %26 = tpu.matmul %24, %25, %cst_14 {dimension_numbers = #tpu.dot_dimension_numbers<[1], [0], [0], [1], [0, 0, 1, 1], [], []>} : vector<16x32xbf16>, vector<32x2048xbf16>, vector<16x2048xf32> -> vector<16x2048xf32>
    %27 = vector.extract_strided_slice %1 {offsets = [32, 0], sizes = [16, 1], strides = [1, 1]} : vector<56x1xf32> to vector<16x1xf32>
    %28 = vector.broadcast %27 : vector<16x1xf32> to vector<16x2048xf32>
    %29 = arith.addf %26, %28 : vector<16x2048xf32>
    %cst_15 = arith.constant 0.000000e+00 : f32
    %30 = vector.broadcast %cst_15 : f32 to vector<16x2048xf32>
    %31 = arith.maximumf %29, %30 : vector<16x2048xf32>
    %c0_16 = arith.constant 0 : index
    %c0_17 = arith.constant 0 : index
    %32 = vector.load %arg4[%c0_16, %c0_17] : memref<8x16xbf16, #tpu.memory_space<vmem>>, vector<8x16xbf16>
    %33 = arith.truncf %31 : vector<16x2048xf32> to vector<16x2048xbf16>
    %cst_18 = arith.constant dense<0.000000e+00> : vector<8x2048xf32>
    %34 = tpu.matmul %32, %33, %cst_18 {dimension_numbers = #tpu.dot_dimension_numbers<[1], [0], [0], [1], [0, 0, 1, 1], [], []>} : vector<8x16xbf16>, vector<16x2048xbf16>, vector<8x2048xf32> -> vector<8x2048xf32>
    %35 = vector.extract_strided_slice %1 {offsets = [48, 0], sizes = [8, 1], strides = [1, 1]} : vector<56x1xf32> to vector<8x1xf32>
    %36 = vector.broadcast %35 : vector<8x1xf32> to vector<8x2048xf32>
    %37 = arith.addf %34, %36 : vector<8x2048xf32>
    %38 = arith.negf %37 : vector<8x2048xf32>
    %39 = math.exp %38 : vector<8x2048xf32>
    %cst_19 = arith.constant 1.000000e+00 : f32
    %40 = vector.broadcast %cst_19 : f32 to vector<8x2048xf32>
    %41 = arith.addf %40, %39 : vector<8x2048xf32>
    %42 = arith.divf %40, %41 : vector<8x2048xf32>
    %c0_20 = arith.constant 0 : index
    %c0_21 = arith.constant 0 : index
    %43 = vector.load %arg6[%c0_20, %c0_21] : memref<8x2048xf32, #tpu.memory_space<vmem>>, vector<8x2048xf32>
    tpu.vector_store %arg6[%c0_20, %c0_21], %42 {strides = array<i32>} : memref<8x2048xf32, #tpu.memory_space<vmem>>, vector<8x2048xf32>,
    return
  }
  func.func @transform_0(%arg0: i32) -> (i32, i32) {
    %c0_i32 = arith.constant 0 : i32
    %c0_i32_0 = arith.constant 0 : i32
    return %c0_i32, %arg0 : i32, i32
  }
  func.func @transform_1(%arg0: i32) -> (i32, i32) {
    %c0_i32 = arith.constant 0 : i32
    %c0_i32_0 = arith.constant 0 : i32
    %c0_i32_1 = arith.constant 0 : i32
    return %c0_i32, %c0_i32_0 : i32, i32
  }
  func.func @transform_2(%arg0: i32) -> (i32, i32) {
    %c0_i32 = arith.constant 0 : i32
    %c0_i32_0 = arith.constant 0 : i32
    %c0_i32_1 = arith.constant 0 : i32
    return %c0_i32, %c0_i32_0 : i32, i32
  }
  func.func @transform_3(%arg0: i32) -> (i32, i32) {
    %c0_i32 = arith.constant 0 : i32
    %c0_i32_0 = arith.constant 0 : i32
    %c0_i32_1 = arith.constant 0 : i32
    return %c0_i32, %c0_i32_0 : i32, i32
  }
  func.func @transform_4(%arg0: i32) -> (i32, i32) {
    %c0_i32 = arith.constant 0 : i32
    %c0_i32_0 = arith.constant 0 : i32
    %c0_i32_1 = arith.constant 0 : i32
    return %c0_i32, %c0_i32_0 : i32, i32
  }
  func.func @transform_5(%arg0: i32) -> (i32, i32) {
    %c0_i32 = arith.constant 0 : i32
    %c0_i32_0 = arith.constant 0 : i32
    return %c0_i32, %arg0 : i32, i32
  }
}

</mosaic_0001>

<llo_original>
// kernel: tpu_custom_call.1
$region0: #{tpu_custom_call.1}
  #allocation0 [shape = 'u32[]', space=smem, size = 0x4, offset = 0x4, fixed_abs, tag = 'smem constant byte address 0x4 - core index']
  #allocation1 [shape = 'u32[144,128]{1,0:T(1,128)}', space=vmem, size = 0x12000, scoped, tag = 'internal scratch']
  %s0 = inlined_call_operand.hbm [shape: bf16[64,4096], index: 0, kind: input, shape index: {}]
  %s1 = inlined_call_operand.vmem [shape: bf16[96,64], index: 1, kind: input, shape index: {}]
  %s2 = inlined_call_operand.vmem [shape: bf16[80,32], index: 2, kind: input, shape index: {}]
  %s3 = inlined_call_operand.vmem [shape: bf16[8,16], index: 3, kind: input, shape index: {}]
  %s4 = inlined_call_operand.vmem [shape: f32[56,1], index: 4, kind: input, shape index: {}]
  %s5 = inlined_call_operand.hbm [shape: f32[8,4096], index: 5, kind: output, shape index: {}]
  %s6 = sld [smem:[#allocation0]]
  $region57: #{tpu_custom_call.1} parent=0
    _
  %s8 = ssub.s32 1, %s6
  %s9 = scalar_select 0, %s8, %s6
  $region1: #{tpu_custom_call.1} parent=0
    #allocation2 [shape = 'u8[524288]{0}', space=vmem, size = 0x80000, scoped, tag = 'input window, operand 0']
    #allocation3 [shape = 's32[2]{0}', space=sflag, size = 0x8, scoped, tag = 'scoped memory for tpu_custom_call.1']
    #allocation4 [shape = 's32[2]{0}', space=sflag, size = 0x8, scoped, tag = 'scoped memory for tpu_custom_call.1']
    #allocation5 [shape = 'u8[131072]{0}', space=vmem, size = 0x20000, scoped, tag = 'output window, operand 0']
    %10 = vsyncpa [#allocation3], 0
    %s11 = scalar_lea.sflag [#allocation3], 1
    %12 = vsyncpa %s11, 0
    %13 = vsyncpa [#allocation4], 0
    %s14 = scalar_lea.sflag [#allocation4], 1
    %15 = vsyncpa %s14, 0
    loop: start=0, step=1, limit=4
    $region2: #{tpu_custom_call.1} parent=1 // loop_pre_header
      _
    $region3: #{tpu_custom_call.1} parent=1 // loop_header
      %s17 = sphi 0, %s21
      %p18 = scmp.ge.s32.totalorder %s17, 4
      %s27 = sphi 0, %s29
      %s30 = sphi 0, %s27
      %s31 = sphi 0, %s30
      %s47 = sphi 0, %s31
      %s51 = sphi 0, %s51
      %s53 = sphi 0, %s51
      %s54 = sphi 0, %s53
      %s68 = sphi 0, %s54
      %s72 = sphi 0, %s72
      %s74 = sphi 0, %s72
      %s75 = sphi 0, %s74
      %s89 = sphi 0, %s75
      %s93 = sphi 0, %s93
      %s95 = sphi 0, %s93
      %s96 = sphi 0, %s95
      %s110 = sphi 0, %s96
      %s114 = sphi 0, %s114
      %s116 = sphi 0, %s114
      %s117 = sphi 0, %s116
      %s131 = sphi 0, %s117
      %s137 = sphi 0, %s139
      %s140 = sphi 0, %s137
      %s141 = sphi 0, %s140
      %s157 = sphi 0, %s141
    $region4: #{tpu_custom_call.1} parent=1 // loop_header_branch
      %20 = sbr.rel (%p18) target = $region8
    $region5: #{tpu_custom_call.1} parent=1 // loop_body
      %s22 = ssub.s32 %s17, 1
      %s23 = ssub.s32 %s17, 2
      %s24 = sadd.s32 %s17, 1
      %s25 = ssub.s32 %s17, %s24
      %p26 = scmp.eq.s32.totalorder %s25, 0
      %s28 = sadd.s32 %s27, 1
      %s29 = scalar_select %p26, %s27, %s28
      %p32 = pneg %p26
      %p33 = scmp.eq.s32.totalorder %s17, 1
      %p34 = por %p32, %p33
      %p35 = scmp.ne.s32.totalorder %s27, %s30
      %p36 = scmp.eq.s32.totalorder %s17, 0
      %p37 = por %p35, %p36
      %p38 = scmp.ne.s32.totalorder %s27, %s30
      %p39 = scmp.eq.s32.totalorder %s22, 1
      %p40 = por %p38, %p39
      %p41 = scmp.ne.s32.totalorder %s30, %s31
      %p42 = scmp.eq.s32.totalorder %s22, 0
      %p43 = por %p41, %p42
      %p44 = scmp.ne.s32.totalorder %s30, %s31
      %p45 = scmp.eq.s32.totalorder %s23, 1
      %p46 = por %p44, %p45
      %p48 = scmp.ne.s32.totalorder %s31, %s47
      %p49 = scmp.eq.s32.totalorder %s23, 0
      %p50 = por %p48, %p49
      %s52 = sadd.s32 %s51, 1
      %p55 = scmp.eq.s32.totalorder %s17, 1
      %p56 = scmp.ne.s32.totalorder %s51, %s53
      %p57 = scmp.eq.s32.totalorder %s17, 0
      %p58 = por %p56, %p57
      %p59 = scmp.ne.s32.totalorder %s51, %s53
      %p60 = scmp.eq.s32.totalorder %s22, 1
      %p61 = por %p59, %p60
      %p62 = scmp.ne.s32.totalorder %s53, %s54
      %p63 = scmp.eq.s32.totalorder %s22, 0
      %p64 = por %p62, %p63
      %p65 = scmp.ne.s32.totalorder %s53, %s54
      %p66 = scmp.eq.s32.totalorder %s23, 1
      %p67 = por %p65, %p66
      %p69 = scmp.ne.s32.totalorder %s54, %s68
      %p70 = scmp.eq.s32.totalorder %s23, 0
      %p71 = por %p69, %p70
      %s73 = sadd.s32 %s72, 1
      %p76 = scmp.eq.s32.totalorder %s17, 1
      %p77 = scmp.ne.s32.totalorder %s72, %s74
      %p78 = scmp.eq.s32.totalorder %s17, 0
      %p79 = por %p77, %p78
      %p80 = scmp.ne.s32.totalorder %s72, %s74
      %p81 = scmp.eq.s32.totalorder %s22, 1
      %p82 = por %p80, %p81
      %p83 = scmp.ne.s32.totalorder %s74, %s75
      %p84 = scmp.eq.s32.totalorder %s22, 0
      %p85 = por %p83, %p84
      %p86 = scmp.ne.s32.totalorder %s74, %s75
      %p87 = scmp.eq.s32.totalorder %s23, 1
      %p88 = por %p86, %p87
      %p90 = scmp.ne.s32.totalorder %s75, %s89
      %p91 = scmp.eq.s32.totalorder %s23, 0
      %p92 = por %p90, %p91
      %s94 = sadd.s32 %s93, 1
      %p97 = scmp.eq.s32.totalorder %s17, 1
      %p98 = scmp.ne.s32.totalorder %s93, %s95
      %p99 = scmp.eq.s32.totalorder %s17, 0
      %p100 = por %p98, %p99
      %p101 = scmp.ne.s32.totalorder %s93, %s95
      %p102 = scmp.eq.s32.totalorder %s22, 1
      %p103 = por %p101, %p102
      %p104 = scmp.ne.s32.totalorder %s95, %s96
      %p105 = scmp.eq.s32.totalorder %s22, 0
      %p106 = por %p104, %p105
      %p107 = scmp.ne.s32.totalorder %s95, %s96
      %p108 = scmp.eq.s32.totalorder %s23, 1
      %p109 = por %p107, %p108
      %p111 = scmp.ne.s32.totalorder %s96, %s110
      %p112 = scmp.eq.s32.totalorder %s23, 0
      %p113 = por %p111, %p112
      %s115 = sadd.s32 %s114, 1
      %p118 = scmp.eq.s32.totalorder %s17, 1
      %p119 = scmp.ne.s32.totalorder %s114, %s116
      %p120 = scmp.eq.s32.totalorder %s17, 0
      %p121 = por %p119, %p120
      %p122 = scmp.ne.s32.totalorder %s114, %s116
      %p123 = scmp.eq.s32.totalorder %s22, 1
      %p124 = por %p122, %p123
      %p125 = scmp.ne.s32.totalorder %s116, %s117
      %p126 = scmp.eq.s32.totalorder %s22, 0
      %p127 = por %p125, %p126
      %p128 = scmp.ne.s32.totalorder %s116, %s117
      %p129 = scmp.eq.s32.totalorder %s23, 1
      %p130 = por %p128, %p129
      %p132 = scmp.ne.s32.totalorder %s117, %s131
      %p133 = scmp.eq.s32.totalorder %s23, 0
      %p134 = por %p132, %p133
      %s135 = ssub.s32 %s17, %s24
      %p136 = scmp.eq.s32.totalorder %s135, 0
      %s138 = sadd.s32 %s137, 1
      %s139 = scalar_select %p136, %s137, %s138
      %p142 = pneg %p136
      %p143 = scmp.eq.s32.totalorder %s17, 1
      %p144 = por %p142, %p143
      %p145 = scmp.ne.s32.totalorder %s137, %s140
      %p146 = scmp.eq.s32.totalorder %s17, 0
      %p147 = por %p145, %p146
      %p148 = scmp.ne.s32.totalorder %s137, %s140
      %p149 = scmp.eq.s32.totalorder %s22, 1
      %p150 = por %p148, %p149
      %p151 = scmp.ne.s32.totalorder %s140, %s141
      %p152 = scmp.eq.s32.totalorder %s22, 0
      %p153 = por %p151, %p152
      %p154 = scmp.ne.s32.totalorder %s140, %s141
      %p155 = scmp.eq.s32.totalorder %s23, 1
      %p156 = por %p154, %p155
      %p158 = scmp.ne.s32.totalorder %s141, %s157
      %p159 = scmp.eq.s32.totalorder %s23, 0
      %p160 = por %p158, %p159
      %p161 = scmp.le.s32.totalorder 1, %s17
      %p162 = scmp.lt.s32.totalorder %s17, 3
      %p163 = pnand %p161, %p162
      %p164 = pneg %p163
      // Predicated region
      $region9: #{tpu_custom_call.1} parent=5 // pred_check
        _
      $region10: #{tpu_custom_call.1} parent=5 // pred_check_branch
        %166 = sbr.rel (%p163) target = $region12
      $region11: #{tpu_custom_call.1} parent=5 // pred_region
        %s167 = ssub.s32 %s17, 1
        // Predicated region
        $region13: #{tpu_custom_call.1} parent=11 // pred_check
          %p168 = pneg %p64
        $region14: #{tpu_custom_call.1} parent=11 // pred_check_branch
          %170 = sbr.rel (%p168) target = $region16
        $region15: #{tpu_custom_call.1} parent=11 // pred_region
          _
        $region16: #{tpu_custom_call.1} parent=11 // pred_fallthru
          _
        // Predicated region
        $region17: #{tpu_custom_call.1} parent=11 // pred_check
          %p171 = pneg %p85
        $region18: #{tpu_custom_call.1} parent=11 // pred_check_branch
          %173 = sbr.rel (%p171) target = $region20
        $region19: #{tpu_custom_call.1} parent=11 // pred_region
          _
        $region20: #{tpu_custom_call.1} parent=11 // pred_fallthru
          _
        // Predicated region
        $region21: #{tpu_custom_call.1} parent=11 // pred_check
          %p174 = pneg %p106
        $region22: #{tpu_custom_call.1} parent=11 // pred_check_branch
          %176 = sbr.rel (%p174) target = $region24
        $region23: #{tpu_custom_call.1} parent=11 // pred_region
          _
        $region24: #{tpu_custom_call.1} parent=11 // pred_fallthru
          _
        // Predicated region
        $region25: #{tpu_custom_call.1} parent=11 // pred_check
          %p177 = pneg %p127
        $region26: #{tpu_custom_call.1} parent=11 // pred_check_branch
          %179 = sbr.rel (%p177) target = $region28
        $region27: #{tpu_custom_call.1} parent=11 // pred_region
          _
        $region28: #{tpu_custom_call.1} parent=11 // pred_fallthru
          _
      $region12: #{tpu_custom_call.1} parent=5 // pred_fallthru
        _
      %p180 = scmp.lt.s32.totalorder %s17, 2
      // Predicated region
      $region29: #{tpu_custom_call.1} parent=5 // pred_check
        %p181 = pneg %p180
      $region30: #{tpu_custom_call.1} parent=5 // pred_check_branch
        %183 = sbr.rel (%p181) target = $region32
      $region31: #{tpu_custom_call.1} parent=5 // pred_region
        // Predicated region
        $region33: #{tpu_custom_call.1} parent=31 // pred_check
          %p184 = pneg %p37
        $region34: #{tpu_custom_call.1} parent=31 // pred_check_branch
          %186 = sbr.rel (%p184) target = $region36
        $region35: #{tpu_custom_call.1} parent=31 // pred_region
          %s187 = sand.u32 %s27, 1
          %s188 = scalar_lea.sflag [#allocation3], %s187
          %s189 = sand.u32 %s27, 1
          %s190 = smul.addr %s189, 512
          %s191 = scalar_lea.vmem [#allocation2], %s190
          %s192 = smul.u32 16, %s17
          %s194 = ssub.s32 8192, 8192
          %195 = vsyncadd %s188, %s194
          %s196 = smul.addr %s192, 64
          %s197 = scalar_lea.hbm %s0, %s196
          %s198 = sshll.u32 %s191, 4
          %s199 = int_to_ptr.vmem [resolvable:$true] %s198
          %204 = dma.hbm_to_vmem [thread:$0]  %s197, 8192, %s199, %s188, 2048, 1024, 64
        $region36: #{tpu_custom_call.1} parent=31 // pred_fallthru
          _
      $region32: #{tpu_custom_call.1} parent=5 // pred_fallthru
        _
      %p205 = scmp.le.s32.totalorder 1, %s17
      %p206 = scmp.lt.s32.totalorder %s17, 3
      %p207 = pnand %p205, %p206
      %p208 = pneg %p207
      // Predicated region
      $region37: #{tpu_custom_call.1} parent=5 // pred_check
        _
      $region38: #{tpu_custom_call.1} parent=5 // pred_check_branch
        %210 = sbr.rel (%p207) target = $region40
      $region39: #{tpu_custom_call.1} parent=5 // pred_region
        %s211 = ssub.s32 %s17, 1
        %s212 = sand.u32 %s30, 1
        %s213 = scalar_lea.sflag [#allocation3], %s212
        %s214 = sand.u32 %s30, 1
        %s215 = smul.addr %s214, 512
        %s216 = scalar_lea.vmem [#allocation2], %s215
        // Predicated region
        $region41: #{tpu_custom_call.1} parent=39 // pred_check
          %p217 = pneg %p43
        $region42: #{tpu_custom_call.1} parent=39 // pred_check_branch
          %219 = sbr.rel (%p217) target = $region44
        $region43: #{tpu_custom_call.1} parent=39 // pred_region
          %220 = dma.done %s213, 8192
        $region44: #{tpu_custom_call.1} parent=39 // pred_fallthru
          _
        %s221 = sand.u32 %s30, 1
        %s222 = scalar_lea.sflag [#allocation3], %s221
        %s223 = sand.u32 %s30, 1
        %s224 = smul.addr %s223, 512
        %s225 = scalar_lea.vmem [#allocation2], %s224
        %p226 = pneg %p43
        %p227 = pneg %p40
        %p228 = pneg %p64
        %p229 = pneg %p61
        %p230 = pneg %p85
        %p231 = pneg %p82
        %p232 = pneg %p106
        %p233 = pneg %p103
        %p234 = pneg %p127
        %p235 = pneg %p124
        %p236 = pneg %p153
        %p237 = pneg %p150
        %s238 = sand.u32 %s140, 1
        %s239 = scalar_lea.sflag [#allocation4], %s238
        %s240 = sand.u32 %s140, 1
        %s241 = smul.addr %s240, 128
        %s242 = scalar_lea.vmem [#allocation5], %s241
        %s243 = smul.u32 16, %s22
        %s244 = smul.u32 16, %s22
        %v246 = vld [vmem:[%s216] sm:$0xff]
        %v247 = vld [vmem:[%s216 + $0x8] sm:$0xff]
        %v248 = vld [vmem:[%s216 + $0x10] sm:$0xff]
        %v249 = vld [vmem:[%s216 + $0x18] sm:$0xff]
        %v250 = vld [vmem:[%s216 + $0x20] sm:$0xff]
        %v251 = vld [vmem:[%s216 + $0x28] sm:$0xff]
        %v252 = vld [vmem:[%s216 + $0x30] sm:$0xff]
        %v253 = vld [vmem:[%s216 + $0x38] sm:$0xff]
        %v254 = vld [vmem:[%s216 + $0x40] sm:$0xff]
        %v255 = vld [vmem:[%s216 + $0x48] sm:$0xff]
        %v256 = vld [vmem:[%s216 + $0x50] sm:$0xff]
        %v257 = vld [vmem:[%s216 + $0x58] sm:$0xff]
        %v258 = vld [vmem:[%s216 + $0x60] sm:$0xff]
        %v259 = vld [vmem:[%s216 + $0x68] sm:$0xff]
        %v260 = vld [vmem:[%s216 + $0x70] sm:$0xff]
        %v261 = vld [vmem:[%s216 + $0x78] sm:$0xff]
        %v262 = vld [vmem:[%s216 + $0x80] sm:$0xff]
        %v263 = vld [vmem:[%s216 + $0x88] sm:$0xff]
        %v264 = vld [vmem:[%s216 + $0x90] sm:$0xff]
        %v265 = vld [vmem:[%s216 + $0x98] sm:$0xff]
        %v266 = vld [vmem:[%s216 + $0xa0] sm:$0xff]
        %v267 = vld [vmem:[%s216 + $0xa8] sm:$0xff]
        %v268 = vld [vmem:[%s216 + $0xb0] sm:$0xff]
        %v269 = vld [vmem:[%s216 + $0xb8] sm:$0xff]
        %v270 = vld [vmem:[%s216 + $0xc0] sm:$0xff]
        %v271 = vld [vmem:[%s216 + $0xc8] sm:$0xff]
        %v272 = vld [vmem:[%s216 + $0xd0] sm:$0xff]
        %v273 = vld [vmem:[%s216 + $0xd8] sm:$0xff]
        %v274 = vld [vmem:[%s216 + $0xe0] sm:$0xff]
        %v275 = vld [vmem:[%s216 + $0xe8] sm:$0xff]
        %v276 = vld [vmem:[%s216 + $0xf0] sm:$0xff]
        %v277 = vld [vmem:[%s216 + $0xf8] sm:$0xff]
        %v278 = vld [vmem:[%s216 + $0x100] sm:$0xff]
        %v279 = vld [vmem:[%s216 + $0x108] sm:$0xff]
        %v280 = vld [vmem:[%s216 + $0x110] sm:$0xff]
        %v281 = vld [vmem:[%s216 + $0x118] sm:$0xff]
        %v282 = vld [vmem:[%s216 + $0x120] sm:$0xff]
        %v283 = vld [vmem:[%s216 + $0x128] sm:$0xff]
        %v284 = vld [vmem:[%s216 + $0x130] sm:$0xff]
        %v285 = vld [vmem:[%s216 + $0x138] sm:$0xff]
        %v286 = vld [vmem:[%s216 + $0x140] sm:$0xff]
        %v287 = vld [vmem:[%s216 + $0x148] sm:$0xff]
        %v288 = vld [vmem:[%s216 + $0x150] sm:$0xff]
        %v289 = vld [vmem:[%s216 + $0x158] sm:$0xff]
        %v290 = vld [vmem:[%s216 + $0x160] sm:$0xff]
        %v291 = vld [vmem:[%s216 + $0x168] sm:$0xff]
        %v292 = vld [vmem:[%s216 + $0x170] sm:$0xff]
        %v293 = vld [vmem:[%s216 + $0x178] sm:$0xff]
        %v294 = vld [vmem:[%s216 + $0x180] sm:$0xff]
        %v295 = vld [vmem:[%s216 + $0x188] sm:$0xff]
        %v296 = vld [vmem:[%s216 + $0x190] sm:$0xff]
        %v297 = vld [vmem:[%s216 + $0x198] sm:$0xff]
        %v298 = vld [vmem:[%s216 + $0x1a0] sm:$0xff]
        %v299 = vld [vmem:[%s216 + $0x1a8] sm:$0xff]
        %v300 = vld [vmem:[%s216 + $0x1b0] sm:$0xff]
        %v301 = vld [vmem:[%s216 + $0x1b8] sm:$0xff]
        %v302 = vld [vmem:[%s216 + $0x1c0] sm:$0xff]
        %v303 = vld [vmem:[%s216 + $0x1c8] sm:$0xff]
        %v304 = vld [vmem:[%s216 + $0x1d0] sm:$0xff]
        %v305 = vld [vmem:[%s216 + $0x1d8] sm:$0xff]
        %v306 = vld [vmem:[%s216 + $0x1e0] sm:$0xff]
        %v307 = vld [vmem:[%s216 + $0x1e8] sm:$0xff]
        %v308 = vld [vmem:[%s216 + $0x1f0] sm:$0xff]
        %v309 = vld [vmem:[%s216 + $0x1f8] sm:$0xff]
        %v310 = vld [vmem:[%s4] sm:$0xff]
        %v311 = vld [vmem:[%s4 + $0x8] sm:$0xff]
        %v312 = vld [vmem:[%s4 + $0x10] sm:$0xff]
        %v313 = vld [vmem:[%s4 + $0x18] sm:$0xff]
        %v314 = vld [vmem:[%s4 + $0x20] sm:$0xff]
        %v315 = vld [vmem:[%s4 + $0x28] sm:$0xff]
        %v316 = vld [vmem:[%s4 + $0x30] sm:$0xff]
        %v317 = vld [vmem:[%s1] sm:$0xf]
        %v318 = vld [vmem:[%s1 + $0x4] sm:$0xf]
        %v319 = vld [vmem:[%s1 + $0x8] sm:$0xf]
        %v320 = vld [vmem:[%s1 + $0xc] sm:$0xf]
        %v321 = vld [vmem:[%s1 + $0x10] sm:$0xf]
        %v322 = vld [vmem:[%s1 + $0x14] sm:$0xf]
        %v323 = vld [vmem:[%s1 + $0x18] sm:$0xf]
        %v324 = vld [vmem:[%s1 + $0x1c] sm:$0xf]
        %v325 = vld [vmem:[%s1 + $0x20] sm:$0xf]
        %v326 = vld [vmem:[%s1 + $0x24] sm:$0xf]
        %v327 = vld [vmem:[%s1 + $0x28] sm:$0xf]
        %v328 = vld [vmem:[%s1 + $0x2c] sm:$0xf]
        %v341 = vunpack.c.l.b16 %v317
        %v342 = vunpack.c.l.b16 %v318
        %v343 = vunpack.c.l.b16 %v319
        %v344 = vunpack.c.l.b16 %v320
        %v345 = vunpack.c.l.b16 %v321
        %v346 = vunpack.c.l.b16 %v322
        %v347 = vunpack.c.l.b16 %v323
        %v348 = vunpack.c.l.b16 %v324
        %v349 = vunpack.c.l.b16 %v325
        %v350 = vunpack.c.l.b16 %v326
        %v351 = vunpack.c.l.b16 %v327
        %v352 = vunpack.c.l.b16 %v328
        %v353 = vpack.c.b16 %v342, %v341
        %v354 = vpack.c.b16 %v344, %v343
        %v355 = vpack.c.b16 %v346, %v345
        %v356 = vpack.c.b16 %v348, %v347
        %v357 = vpack.c.b16 %v350, %v349
        %v358 = vpack.c.b16 %v352, %v351
        %v423 = vunpack.c.l.b16 %v246
        %v424 = vunpack.c.h.b16 %v246
        %v425 = vunpack.c.l.b16 %v247
        %v426 = vunpack.c.h.b16 %v247
        %v427 = vunpack.c.l.b16 %v248
        %v428 = vunpack.c.h.b16 %v248
        %v429 = vunpack.c.l.b16 %v249
        %v430 = vunpack.c.h.b16 %v249
        %v431 = vunpack.c.l.b16 %v250
        %v432 = vunpack.c.h.b16 %v250
        %v433 = vunpack.c.l.b16 %v251
        %v434 = vunpack.c.h.b16 %v251
        %v435 = vunpack.c.l.b16 %v252
        %v436 = vunpack.c.h.b16 %v252
        %v437 = vunpack.c.l.b16 %v253
        %v438 = vunpack.c.h.b16 %v253
        %v439 = vunpack.c.l.b16 %v254
        %v440 = vunpack.c.h.b16 %v254
        %v441 = vunpack.c.l.b16 %v255
        %v442 = vunpack.c.h.b16 %v255
        %v443 = vunpack.c.l.b16 %v256
        %v444 = vunpack.c.h.b16 %v256
        %v445 = vunpack.c.l.b16 %v257
        %v446 = vunpack.c.h.b16 %v257
        %v447 = vunpack.c.l.b16 %v258
        %v448 = vunpack.c.h.b16 %v258
        %v449 = vunpack.c.l.b16 %v259
        %v450 = vunpack.c.h.b16 %v259
        %v451 = vunpack.c.l.b16 %v260
        %v452 = vunpack.c.h.b16 %v260
        %v453 = vunpack.c.l.b16 %v261
        %v454 = vunpack.c.h.b16 %v261
        %v455 = vunpack.c.l.b16 %v262
        %v456 = vunpack.c.h.b16 %v262
        %v457 = vunpack.c.l.b16 %v263
        %v458 = vunpack.c.h.b16 %v263
        %v459 = vunpack.c.l.b16 %v264
        %v460 = vunpack.c.h.b16 %v264
        %v461 = vunpack.c.l.b16 %v265
        %v462 = vunpack.c.h.b16 %v265
        %v463 = vunpack.c.l.b16 %v266
        %v464 = vunpack.c.h.b16 %v266
        %v465 = vunpack.c.l.b16 %v267
        %v466 = vunpack.c.h.b16 %v267
        %v467 = vunpack.c.l.b16 %v268
        %v468 = vunpack.c.h.b16 %v268
        %v469 = vunpack.c.l.b16 %v269
        %v470 = vunpack.c.h.b16 %v269
        %v471 = vunpack.c.l.b16 %v270
        %v472 = vunpack.c.h.b16 %v270
        %v473 = vunpack.c.l.b16 %v271
        %v474 = vunpack.c.h.b16 %v271
        %v475 = vunpack.c.l.b16 %v272
        %v476 = vunpack.c.h.b16 %v272
        %v477 = vunpack.c.l.b16 %v273
        %v478 = vunpack.c.h.b16 %v273
        %v479 = vunpack.c.l.b16 %v274
        %v480 = vunpack.c.h.b16 %v274
        %v481 = vunpack.c.l.b16 %v275
        %v482 = vunpack.c.h.b16 %v275
        %v483 = vunpack.c.l.b16 %v276
        %v484 = vunpack.c.h.b16 %v276
        %v485 = vunpack.c.l.b16 %v277
        %v486 = vunpack.c.h.b16 %v277
        %v487 = vunpack.c.l.b16 %v278
        %v488 = vunpack.c.h.b16 %v278
        %v489 = vunpack.c.l.b16 %v279
        %v490 = vunpack.c.h.b16 %v279
        %v491 = vunpack.c.l.b16 %v280
        %v492 = vunpack.c.h.b16 %v280
        %v493 = vunpack.c.l.b16 %v281
        %v494 = vunpack.c.h.b16 %v281
        %v495 = vunpack.c.l.b16 %v282
        %v496 = vunpack.c.h.b16 %v282
        %v497 = vunpack.c.l.b16 %v283
        %v498 = vunpack.c.h.b16 %v283
        %v499 = vunpack.c.l.b16 %v284
        %v500 = vunpack.c.h.b16 %v284
        %v501 = vunpack.c.l.b16 %v285
        %v502 = vunpack.c.h.b16 %v285
        %v503 = vunpack.c.l.b16 %v286
        %v504 = vunpack.c.h.b16 %v286
        %v505 = vunpack.c.l.b16 %v287
        %v506 = vunpack.c.h.b16 %v287
        %v507 = vunpack.c.l.b16 %v288
        %v508 = vunpack.c.h.b16 %v288
        %v509 = vunpack.c.l.b16 %v289
        %v510 = vunpack.c.h.b16 %v289
        %v511 = vunpack.c.l.b16 %v290
        %v512 = vunpack.c.h.b16 %v290
        %v513 = vunpack.c.l.b16 %v291
        %v514 = vunpack.c.h.b16 %v291
        %v515 = vunpack.c.l.b16 %v292
        %v516 = vunpack.c.h.b16 %v292
        %v517 = vunpack.c.l.b16 %v293
        %v518 = vunpack.c.h.b16 %v293
        %v519 = vunpack.c.l.b16 %v294
        %v520 = vunpack.c.h.b16 %v294
        %v521 = vunpack.c.l.b16 %v295
        %v522 = vunpack.c.h.b16 %v295
        %v523 = vunpack.c.l.b16 %v296
        %v524 = vunpack.c.h.b16 %v296
        %v525 = vunpack.c.l.b16 %v297
        %v526 = vunpack.c.h.b16 %v297
        %v527 = vunpack.c.l.b16 %v298
        %v528 = vunpack.c.h.b16 %v298
        %v529 = vunpack.c.l.b16 %v299
        %v530 = vunpack.c.h.b16 %v299
        %v531 = vunpack.c.l.b16 %v300
        %v532 = vunpack.c.h.b16 %v300
        %v533 = vunpack.c.l.b16 %v301
        %v534 = vunpack.c.h.b16 %v301
        %v535 = vunpack.c.l.b16 %v302
        %v536 = vunpack.c.h.b16 %v302
        %v537 = vunpack.c.l.b16 %v303
        %v538 = vunpack.c.h.b16 %v303
        %v539 = vunpack.c.l.b16 %v304
        %v540 = vunpack.c.h.b16 %v304
        %v541 = vunpack.c.l.b16 %v305
        %v542 = vunpack.c.h.b16 %v305
        %v543 = vunpack.c.l.b16 %v306
        %v544 = vunpack.c.h.b16 %v306
        %v545 = vunpack.c.l.b16 %v307
        %v546 = vunpack.c.h.b16 %v307
        %v547 = vunpack.c.l.b16 %v308
        %v548 = vunpack.c.h.b16 %v308
        %v549 = vunpack.c.l.b16 %v309
        %v550 = vunpack.c.h.b16 %v309
        %v551 = vpack.c.b16 %v439, %v423
        %v552 = vpack.c.b16 %v440, %v424
        %v553 = vpack.c.b16 %v441, %v425
        %v554 = vpack.c.b16 %v442, %v426
        %v555 = vpack.c.b16 %v443, %v427
        %v556 = vpack.c.b16 %v444, %v428
        %v557 = vpack.c.b16 %v445, %v429
        %v558 = vpack.c.b16 %v446, %v430
        %v559 = vpack.c.b16 %v447, %v431
        %v560 = vpack.c.b16 %v448, %v432
        %v561 = vpack.c.b16 %v449, %v433
        %v562 = vpack.c.b16 %v450, %v434
        %v563 = vpack.c.b16 %v451, %v435
        %v564 = vpack.c.b16 %v452, %v436
        %v565 = vpack.c.b16 %v453, %v437
        %v566 = vpack.c.b16 %v454, %v438
        %v567 = vpack.c.b16 %v471, %v455
        %v568 = vpack.c.b16 %v472, %v456
        %v569 = vpack.c.b16 %v473, %v457
        %v570 = vpack.c.b16 %v474, %v458
        %v571 = vpack.c.b16 %v475, %v459
        %v572 = vpack.c.b16 %v476, %v460
        %v573 = vpack.c.b16 %v477, %v461
        %v574 = vpack.c.b16 %v478, %v462
        %v575 = vpack.c.b16 %v479, %v463
        %v576 = vpack.c.b16 %v480, %v464
        %v577 = vpack.c.b16 %v481, %v465
        %v578 = vpack.c.b16 %v482, %v466
        %v579 = vpack.c.b16 %v483, %v467
        %v580 = vpack.c.b16 %v484, %v468
        %v581 = vpack.c.b16 %v485, %v469
        %v582 = vpack.c.b16 %v486, %v470
        %v583 = vpack.c.b16 %v503, %v487
        %v584 = vpack.c.b16 %v504, %v488
        %v585 = vpack.c.b16 %v505, %v489
        %v586 = vpack.c.b16 %v506, %v490
        %v587 = vpack.c.b16 %v507, %v491
        %v588 = vpack.c.b16 %v508, %v492
        %v589 = vpack.c.b16 %v509, %v493
        %v590 = vpack.c.b16 %v510, %v494
        %v591 = vpack.c.b16 %v511, %v495
        %v592 = vpack.c.b16 %v512, %v496
        %v593 = vpack.c.b16 %v513, %v497
        %v594 = vpack.c.b16 %v514, %v498
        %v595 = vpack.c.b16 %v515, %v499
        %v596 = vpack.c.b16 %v516, %v500
        %v597 = vpack.c.b16 %v517, %v501
        %v598 = vpack.c.b16 %v518, %v502
        %v599 = vpack.c.b16 %v535, %v519
        %v600 = vpack.c.b16 %v536, %v520
        %v601 = vpack.c.b16 %v537, %v521
        %v602 = vpack.c.b16 %v538, %v522
        %v603 = vpack.c.b16 %v539, %v523
        %v604 = vpack.c.b16 %v540, %v524
        %v605 = vpack.c.b16 %v541, %v525
        %v606 = vpack.c.b16 %v542, %v526
        %v607 = vpack.c.b16 %v543, %v527
        %v608 = vpack.c.b16 %v544, %v528
        %v609 = vpack.c.b16 %v545, %v529
        %v610 = vpack.c.b16 %v546, %v530
        %v611 = vpack.c.b16 %v547, %v531
        %v612 = vpack.c.b16 %v548, %v532
        %v613 = vpack.c.b16 %v549, %v533
        %v614 = vpack.c.b16 %v550, %v534
        %vm679 = vcmask 523264
        %v681 = vsel %vm679, %v353, 0
        %v684 = vsel %vm679, %v354, 0
        %v687 = vsel %vm679, %v355, 0
        %v690 = vsel %vm679, %v356, 0
        %v693 = vsel %vm679, %v357, 0
        %v696 = vsel %vm679, %v358, 0
        %698 = vmatprep.subr.bf16.mxu0 %v552
        %699 = vmatpush1.bf16.msra.mxu0 %v551
        %700 = vmatprep.subr.bf16.mxu0 %v568
        %701 = vmatpush1.bf16.msra.mxu0 %v567
        %702 = vmatprep.subr.bf16.mxu0 %v584
        %703 = vmatpush1.bf16.msra.mxu0 %v583
        %704 = vmatprep.subr.bf16.mxu0 %v600
        %705 = vmatpush1.bf16.msra.mxu0 %v599
        %706 = vmatprep.subr.bf16.mxu0 0
        %707 = vmatpush1.bf16.msra.mxu0 0
        %708 = vmatprep.subr.bf16.mxu0 0
        %709 = vmatpush1.bf16.msra.mxu0 0
        %710 = vmatprep.subr.bf16.mxu0 0
        %711 = vmatpush1.bf16.msra.mxu0 0
        %712 = vmatprep.subr.bf16.mxu0 0
        %713 = vmatpush1.bf16.msra.mxu0 0
        %714 = vmatprep.subr.bf16.mxu0 0
        %715 = vmatpush1.bf16.msra.mxu0 0
        %716 = vmatprep.subr.bf16.mxu0 0
        %717 = vmatpush1.bf16.msra.mxu0 0
        %718 = vmatprep.subr.bf16.mxu0 0
        %719 = vmatpush1.bf16.msra.mxu0 0
        %720 = vmatprep.subr.bf16.mxu0 0
        %721 = vmatpush1.bf16.msra.mxu0 0
        %722 = vmatprep.subr.bf16.mxu0 0
        %723 = vmatpush1.bf16.msra.mxu0 0
        %724 = vmatprep.subr.bf16.mxu0 0
        %725 = vmatpush1.bf16.msra.mxu0 0
        %726 = vmatprep.subr.bf16.mxu0 0
        %727 = vmatpush1.bf16.msra.mxu0 0
        %728 = vmatprep.subr.bf16.mxu0 0
        %729 = vmatpush1.bf16.msra.mxu0 0
        %730 = vmatprep.mubr.bf16.mxu0 0
        %731 = vmatmul.mubr.bf16.gmra.mrb[0].mxu0 %v681
        %v732 = vpop.f32.mrb[0].mxu0
        %v733 = vadd.f32 0.0, %v732
        %v734 = vpop.f32.mrb[0].mxu0
        %v735 = vadd.f32 0.0, %v734
        %v736 = vpop.f32.mrb[0].mxu0
        %v737 = vadd.f32 0.0, %v736
        %v738 = vpop.f32.mrb[0].mxu0
        %v739 = vadd.f32 0.0, %v738
        %740 = vmatprep.mubr.bf16.mxu0 0
        %741 = vmatmul.mubr.bf16.gmra.mrb[0].mxu0 %v684
        %v742 = vpop.f32.mrb[0].mxu0
        %v743 = vadd.f32 0.0, %v742
        %v744 = vpop.f32.mrb[0].mxu0
        %v745 = vadd.f32 0.0, %v744
        %v746 = vpop.f32.mrb[0].mxu0
        %v747 = vadd.f32 0.0, %v746
        %v748 = vpop.f32.mrb[0].mxu0
        %v749 = vadd.f32 0.0, %v748
        %750 = vmatprep.mubr.bf16.mxu0 0
        %751 = vmatmul.mubr.bf16.gmra.mrb[0].mxu0 %v687
        %v752 = vpop.f32.mrb[0].mxu0
        %v753 = vadd.f32 0.0, %v752
        %v754 = vpop.f32.mrb[0].mxu0
        %v755 = vadd.f32 0.0, %v754
        %v756 = vpop.f32.mrb[0].mxu0
        %v757 = vadd.f32 0.0, %v756
        %v758 = vpop.f32.mrb[0].mxu0
        %v759 = vadd.f32 0.0, %v758
        %760 = vmatprep.mubr.bf16.mxu0 0
        %761 = vmatmul.mubr.bf16.gmra.mrb[0].mxu0 %v690
        %v762 = vpop.f32.mrb[0].mxu0
        %v763 = vadd.f32 0.0, %v762
        %v764 = vpop.f32.mrb[0].mxu0
        %v765 = vadd.f32 0.0, %v764
        %v766 = vpop.f32.mrb[0].mxu0
        %v767 = vadd.f32 0.0, %v766
        %v768 = vpop.f32.mrb[0].mxu0
        %v769 = vadd.f32 0.0, %v768
        %770 = vmatprep.mubr.bf16.mxu0 0
        %771 = vmatmul.mubr.bf16.gmra.mrb[0].mxu0 %v693
        %v772 = vpop.f32.mrb[0].mxu0
        %v773 = vadd.f32 0.0, %v772
        %v774 = vpop.f32.mrb[0].mxu0
        %v775 = vadd.f32 0.0, %v774
        %v776 = vpop.f32.mrb[0].mxu0
        %v777 = vadd.f32 0.0, %v776
        %v778 = vpop.f32.mrb[0].mxu0
        %v779 = vadd.f32 0.0, %v778
        %780 = vmatprep.mubr.bf16.mxu0 0
        %781 = vmatmul.mubr.bf16.gmra.mrb[0].mxu0 %v696
        %v782 = vpop.f32.mrb[0].mxu0
        %v783 = vadd.f32 0.0, %v782
        %v784 = vpop.f32.mrb[0].mxu0
        %v785 = vadd.f32 0.0, %v784
        %v786 = vpop.f32.mrb[0].mxu0
        %v787 = vadd.f32 0.0, %v786
        %v788 = vpop.f32.mrb[0].mxu0
        %v789 = vadd.f32 0.0, %v788
        %790 = vdwg.mxu0
        %791 = vmatprep.subr.bf16.mxu0 %v554
        %792 = vmatpush1.bf16.msra.mxu0 %v553
        %793 = vmatprep.subr.bf16.mxu0 %v570
        %794 = vmatpush1.bf16.msra.mxu0 %v569
        %795 = vmatprep.subr.bf16.mxu0 %v586
        %796 = vmatpush1.bf16.msra.mxu0 %v585
        %797 = vmatprep.subr.bf16.mxu0 %v602
        %798 = vmatpush1.bf16.msra.mxu0 %v601
        %799 = vmatprep.subr.bf16.mxu0 0
        %800 = vmatpush1.bf16.msra.mxu0 0
        %801 = vmatprep.subr.bf16.mxu0 0
        %802 = vmatpush1.bf16.msra.mxu0 0
        %803 = vmatprep.subr.bf16.mxu0 0
        %804 = vmatpush1.bf16.msra.mxu0 0
        %805 = vmatprep.subr.bf16.mxu0 0
        %806 = vmatpush1.bf16.msra.mxu0 0
        %807 = vmatprep.subr.bf16.mxu0 0
        %808 = vmatpush1.bf16.msra.mxu0 0
        %809 = vmatprep.subr.bf16.mxu0 0
        %810 = vmatpush1.bf16.msra.mxu0 0
        %811 = vmatprep.subr.bf16.mxu0 0
        %812 = vmatpush1.bf16.msra.mxu0 0
        %813 = vmatprep.subr.bf16.mxu0 0
        %814 = vmatpush1.bf16.msra.mxu0 0
        %815 = vmatprep.subr.bf16.mxu0 0
        %816 = vmatpush1.bf16.msra.mxu0 0
        %817 = vmatprep.subr.bf16.mxu0 0
        %818 = vmatpush1.bf16.msra.mxu0 0
        %819 = vmatprep.subr.bf16.mxu0 0
        %820 = vmatpush1.bf16.msra.mxu0 0
        %821 = vmatprep.subr.bf16.mxu0 0
        %822 = vmatpush1.bf16.msra.mxu0 0
        %823 = vmatprep.mubr.bf16.mxu0 0
        %824 = vmatmul.mubr.bf16.gmra.mrb[0].mxu0 %v681
        %v825 = vpop.f32.mrb[0].mxu0
        %v826 = vadd.f32 0.0, %v825
        %v827 = vpop.f32.mrb[0].mxu0
        %v828 = vadd.f32 0.0, %v827
        %v829 = vpop.f32.mrb[0].mxu0
        %v830 = vadd.f32 0.0, %v829
        %v831 = vpop.f32.mrb[0].mxu0
        %v832 = vadd.f32 0.0, %v831
        %833 = vmatprep.mubr.bf16.mxu0 0
        %834 = vmatmul.mubr.bf16.gmra.mrb[0].mxu0 %v684
        %v835 = vpop.f32.mrb[0].mxu0
        %v836 = vadd.f32 0.0, %v835
        %v837 = vpop.f32.mrb[0].mxu0
        %v838 = vadd.f32 0.0, %v837
        %v839 = vpop.f32.mrb[0].mxu0
        %v840 = vadd.f32 0.0, %v839
        %v841 = vpop.f32.mrb[0].mxu0
        %v842 = vadd.f32 0.0, %v841
        %843 = vmatprep.mubr.bf16.mxu0 0
        %844 = vmatmul.mubr.bf16.gmra.mrb[0].mxu0 %v687
        %v845 = vpop.f32.mrb[0].mxu0
        %v846 = vadd.f32 0.0, %v845
        %v847 = vpop.f32.mrb[0].mxu0
        %v848 = vadd.f32 0.0, %v847
        %v849 = vpop.f32.mrb[0].mxu0
        %v850 = vadd.f32 0.0, %v849
        %v851 = vpop.f32.mrb[0].mxu0
        %v852 = vadd.f32 0.0, %v851
        %853 = vmatprep.mubr.bf16.mxu0 0
        %854 = vmatmul.mubr.bf16.gmra.mrb[0].mxu0 %v690
        %v855 = vpop.f32.mrb[0].mxu0
        %v856 = vadd.f32 0.0, %v855
        %v857 = vpop.f32.mrb[0].mxu0
        %v858 = vadd.f32 0.0, %v857
        %v859 = vpop.f32.mrb[0].mxu0
        %v860 = vadd.f32 0.0, %v859
        %v861 = vpop.f32.mrb[0].mxu0
        %v862 = vadd.f32 0.0, %v861
        %863 = vmatprep.mubr.bf16.mxu0 0
        %864 = vmatmul.mubr.bf16.gmra.mrb[0].mxu0 %v693
        %v865 = vpop.f32.mrb[0].mxu0
        %v866 = vadd.f32 0.0, %v865
        %v867 = vpop.f32.mrb[0].mxu0
        %v868 = vadd.f32 0.0, %v867
        %v869 = vpop.f32.mrb[0].mxu0
        %v870 = vadd.f32 0.0, %v869
        %v871 = vpop.f32.mrb[0].mxu0
        %v872 = vadd.f32 0.0, %v871
        %873 = vmatprep.mubr.bf16.mxu0 0
        %874 = vmatmul.mubr.bf16.gmra.mrb[0].mxu0 %v696
        %v875 = vpop.f32.mrb[0].mxu0
        %v876 = vadd.f32 0.0, %v875
        %v877 = vpop.f32.mrb[0].mxu0
        %v878 = vadd.f32 0.0, %v877
        %v879 = vpop.f32.mrb[0].mxu0
        %v880 = vadd.f32 0.0, %v879
        %v881 = vpop.f32.mrb[0].mxu0
        %v882 = vadd.f32 0.0, %v881
        %883 = vdwg.mxu0
        %884 = vmatprep.subr.bf16.mxu0 %v556
        %885 = vmatpush1.bf16.msra.mxu0 %v555
        %886 = vmatprep.subr.bf16.mxu0 %v572
        %887 = vmatpush1.bf16.msra.mxu0 %v571
        %888 = vmatprep.subr.bf16.mxu0 %v588
        %889 = vmatpush1.bf16.msra.mxu0 %v587
        %890 = vmatprep.subr.bf16.mxu0 %v604
        %891 = vmatpush1.bf16.msra.mxu0 %v603
        %892 = vmatprep.subr.bf16.mxu0 0
        %893 = vmatpush1.bf16.msra.mxu0 0
        %894 = vmatprep.subr.bf16.mxu0 0
        %895 = vmatpush1.bf16.msra.mxu0 0
        %896 = vmatprep.subr.bf16.mxu0 0
        %897 = vmatpush1.bf16.msra.mxu0 0
        %898 = vmatprep.subr.bf16.mxu0 0
        %899 = vmatpush1.bf16.msra.mxu0 0
        %900 = vmatprep.subr.bf16.mxu0 0
        %901 = vmatpush1.bf16.msra.mxu0 0
        %902 = vmatprep.subr.bf16.mxu0 0
        %903 = vmatpush1.bf16.msra.mxu0 0
        %904 = vmatprep.subr.bf16.mxu0 0
        %905 = vmatpush1.bf16.msra.mxu0 0
        %906 = vmatprep.subr.bf16.mxu0 0
        %907 = vmatpush1.bf16.msra.mxu0 0
        %908 = vmatprep.subr.bf16.mxu0 0
        %909 = vmatpush1.bf16.msra.mxu0 0
        %910 = vmatprep.subr.bf16.mxu0 0
        %911 = vmatpush1.bf16.msra.mxu0 0
        %912 = vmatprep.subr.bf16.mxu0 0
        %913 = vmatpush1.bf16.msra.mxu0 0
        %914 = vmatprep.subr.bf16.mxu0 0
        %915 = vmatpush1.bf16.msra.mxu0 0
        %916 = vmatprep.mubr.bf16.mxu0 0
        %917 = vmatmul.mubr.bf16.gmra.mrb[0].mxu0 %v681
        %v918 = vpop.f32.mrb[0].mxu0
        %v919 = vadd.f32 0.0, %v918
        %v920 = vpop.f32.mrb[0].mxu0
        %v921 = vadd.f32 0.0, %v920
        %v922 = vpop.f32.mrb[0].mxu0
        %v923 = vadd.f32 0.0, %v922
        %v924 = vpop.f32.mrb[0].mxu0
        %v925 = vadd.f32 0.0, %v924
        %926 = vmatprep.mubr.bf16.mxu0 0
        %927 = vmatmul.mubr.bf16.gmra.mrb[0].mxu0 %v684
        %v928 = vpop.f32.mrb[0].mxu0
        %v929 = vadd.f32 0.0, %v928
        %v930 = vpop.f32.mrb[0].mxu0
        %v931 = vadd.f32 0.0, %v930
        %v932 = vpop.f32.mrb[0].mxu0
        %v933 = vadd.f32 0.0, %v932
        %v934 = vpop.f32.mrb[0].mxu0
        %v935 = vadd.f32 0.0, %v934
        %936 = vmatprep.mubr.bf16.mxu0 0
        %937 = vmatmul.mubr.bf16.gmra.mrb[0].mxu0 %v687
        %v938 = vpop.f32.mrb[0].mxu0
        %v939 = vadd.f32 0.0, %v938
        %v940 = vpop.f32.mrb[0].mxu0
        %v941 = vadd.f32 0.0, %v940
        %v942 = vpop.f32.mrb[0].mxu0
        %v943 = vadd.f32 0.0, %v942
        %v944 = vpop.f32.mrb[0].mxu0
        %v945 = vadd.f32 0.0, %v944
        %946 = vmatprep.mubr.bf16.mxu0 0
        %947 = vmatmul.mubr.bf16.gmra.mrb[0].mxu0 %v690
        %v948 = vpop.f32.mrb[0].mxu0
        %v949 = vadd.f32 0.0, %v948
        %v950 = vpop.f32.mrb[0].mxu0
        %v951 = vadd.f32 0.0, %v950
        %v952 = vpop.f32.mrb[0].mxu0
        %v953 = vadd.f32 0.0, %v952
        %v954 = vpop.f32.mrb[0].mxu0
        %v955 = vadd.f32 0.0, %v954
        %956 = vmatprep.mubr.bf16.mxu0 0
        %957 = vmatmul.mubr.bf16.gmra.mrb[0].mxu0 %v693
        %v958 = vpop.f32.mrb[0].mxu0
        %v959 = vadd.f32 0.0, %v958
        %v960 = vpop.f32.mrb[0].mxu0
        %v961 = vadd.f32 0.0, %v960
        %v962 = vpop.f32.mrb[0].mxu0
        %v963 = vadd.f32 0.0, %v962
        %v964 = vpop.f32.mrb[0].mxu0
        %v965 = vadd.f32 0.0, %v964
        %966 = vmatprep.mubr.bf16.mxu0 0
        %967 = vmatmul.mubr.bf16.gmra.mrb[0].mxu0 %v696
        %v968 = vpop.f32.mrb[0].mxu0
        %v969 = vadd.f32 0.0, %v968
        %v970 = vpop.f32.mrb[0].mxu0
        %v971 = vadd.f32 0.0, %v970
        %v972 = vpop.f32.mrb[0].mxu0
        %v973 = vadd.f32 0.0, %v972
        %v974 = vpop.f32.mrb[0].mxu0
        %v975 = vadd.f32 0.0, %v974
        %976 = vdwg.mxu0
        %977 = vmatprep.subr.bf16.mxu0 %v558
        %978 = vmatpush1.bf16.msra.mxu0 %v557
        %979 = vmatprep.subr.bf16.mxu0 %v574
        %980 = vmatpush1.bf16.msra.mxu0 %v573
        %981 = vmatprep.subr.bf16.mxu0 %v590
        %982 = vmatpush1.bf16.msra.mxu0 %v589
        %983 = vmatprep.subr.bf16.mxu0 %v606
        %984 = vmatpush1.bf16.msra.mxu0 %v605
        %985 = vmatprep.subr.bf16.mxu0 0
        %986 = vmatpush1.bf16.msra.mxu0 0
        %987 = vmatprep.subr.bf16.mxu0 0
        %988 = vmatpush1.bf16.msra.mxu0 0
        %989 = vmatprep.subr.bf16.mxu0 0
        %990 = vmatpush1.bf16.msra.mxu0 0
        %991 = vmatprep.subr.bf16.mxu0 0
        %992 = vmatpush1.bf16.msra.mxu0 0
        %993 = vmatprep.subr.bf16.mxu0 0
        %994 = vmatpush1.bf16.msra.mxu0 0
        %995 = vmatprep.subr.bf16.mxu0 0
        %996 = vmatpush1.bf16.msra.mxu0 0
        %997 = vmatprep.subr.bf16.mxu0 0
        %998 = vmatpush1.bf16.msra.mxu0 0
        %999 = vmatprep.subr.bf16.mxu0 0
        %1000 = vmatpush1.bf16.msra.mxu0 0
        %1001 = vmatprep.subr.bf16.mxu0 0
        %1002 = vmatpush1.bf16.msra.mxu0 0
        %1003 = vmatprep.subr.bf16.mxu0 0
        %1004 = vmatpush1.bf16.msra.mxu0 0
        %1005 = vmatprep.subr.bf16.mxu0 0
        %1006 = vmatpush1.bf16.msra.mxu0 0
        %1007 = vmatprep.subr.bf16.mxu0 0
        %1008 = vmatpush1.bf16.msra.mxu0 0
        %1009 = vmatprep.mubr.bf16.mxu0 0
        %1010 = vmatmul.mubr.bf16.gmra.mrb[0].mxu0 %v681
        %v1011 = vpop.f32.mrb[0].mxu0
        %v1012 = vadd.f32 0.0, %v1011
        %v1013 = vpop.f32.mrb[0].mxu0
        %v1014 = vadd.f32 0.0, %v1013
        %v1015 = vpop.f32.mrb[0].mxu0
        %v1016 = vadd.f32 0.0, %v1015
        %v1017 = vpop.f32.mrb[0].mxu0
        %v1018 = vadd.f32 0.0, %v1017
        %1019 = vmatprep.mubr.bf16.mxu0 0
        %1020 = vmatmul.mubr.bf16.gmra.mrb[0].mxu0 %v684
        %v1021 = vpop.f32.mrb[0].mxu0
        %v1022 = vadd.f32 0.0, %v1021
        %v1023 = vpop.f32.mrb[0].mxu0
        %v1024 = vadd.f32 0.0, %v1023
        %v1025 = vpop.f32.mrb[0].mxu0
        %v1026 = vadd.f32 0.0, %v1025
        %v1027 = vpop.f32.mrb[0].mxu0
        %v1028 = vadd.f32 0.0, %v1027
        %1029 = vmatprep.mubr.bf16.mxu0 0
        %1030 = vmatmul.mubr.bf16.gmra.mrb[0].mxu0 %v687
        %v1031 = vpop.f32.mrb[0].mxu0
        %v1032 = vadd.f32 0.0, %v1031
        %v1033 = vpop.f32.mrb[0].mxu0
        %v1034 = vadd.f32 0.0, %v1033
        %v1035 = vpop.f32.mrb[0].mxu0
        %v1036 = vadd.f32 0.0, %v1035
        %v1037 = vpop.f32.mrb[0].mxu0
        %v1038 = vadd.f32 0.0, %v1037
        %1039 = vmatprep.mubr.bf16.mxu0 0
        %1040 = vmatmul.mubr.bf16.gmra.mrb[0].mxu0 %v690
        %v1041 = vpop.f32.mrb[0].mxu0
        %v1042 = vadd.f32 0.0, %v1041
        %v1043 = vpop.f32.mrb[0].mxu0
        %v1044 = vadd.f32 0.0, %v1043
        %v1045 = vpop.f32.mrb[0].mxu0
        %v1046 = vadd.f32 0.0, %v1045
        %v1047 = vpop.f32.mrb[0].mxu0
        %v1048 = vadd.f32 0.0, %v1047
        %1049 = vmatprep.mubr.bf16.mxu0 0
        %1050 = vmatmul.mubr.bf16.gmra.mrb[0].mxu0 %v693
        %v1051 = vpop.f32.mrb[0].mxu0
        %v1052 = vadd.f32 0.0, %v1051
        %v1053 = vpop.f32.mrb[0].mxu0
        %v1054 = vadd.f32 0.0, %v1053
        %v1055 = vpop.f32.mrb[0].mxu0
        %v1056 = vadd.f32 0.0, %v1055
        %v1057 = vpop.f32.mrb[0].mxu0
        %v1058 = vadd.f32 0.0, %v1057
        %1059 = vmatprep.mubr.bf16.mxu0 0
        %1060 = vmatmul.mubr.bf16.gmra.mrb[0].mxu0 %v696
        %v1061 = vpop.f32.mrb[0].mxu0
        %v1062 = vadd.f32 0.0, %v1061
        %v1063 = vpop.f32.mrb[0].mxu0
        %v1064 = vadd.f32 0.0, %v1063
        %v1065 = vpop.f32.mrb[0].mxu0
        %v1066 = vadd.f32 0.0, %v1065
        %v1067 = vpop.f32.mrb[0].mxu0
        %v1068 = vadd.f32 0.0, %v1067
        %1069 = vdwg.mxu0
        %1070 = vmatprep.subr.bf16.mxu0 %v560
        %1071 = vmatpush1.bf16.msra.mxu0 %v559
        %1072 = vmatprep.subr.bf16.mxu0 %v576
        %1073 = vmatpush1.bf16.msra.mxu0 %v575
        %1074 = vmatprep.subr.bf16.mxu0 %v592
        %1075 = vmatpush1.bf16.msra.mxu0 %v591
        %1076 = vmatprep.subr.bf16.mxu0 %v608
        %1077 = vmatpush1.bf16.msra.mxu0 %v607
        %1078 = vmatprep.subr.bf16.mxu0 0
        %1079 = vmatpush1.bf16.msra.mxu0 0
        %1080 = vmatprep.subr.bf16.mxu0 0
        %1081 = vmatpush1.bf16.msra.mxu0 0
        %1082 = vmatprep.subr.bf16.mxu0 0
        %1083 = vmatpush1.bf16.msra.mxu0 0
        %1084 = vmatprep.subr.bf16.mxu0 0
        %1085 = vmatpush1.bf16.msra.mxu0 0
        %1086 = vmatprep.subr.bf16.mxu0 0
        %1087 = vmatpush1.bf16.msra.mxu0 0
        %1088 = vmatprep.subr.bf16.mxu0 0
        %1089 = vmatpush1.bf16.msra.mxu0 0
        %1090 = vmatprep.subr.bf16.mxu0 0
        %1091 = vmatpush1.bf16.msra.mxu0 0
        %1092 = vmatprep.subr.bf16.mxu0 0
        %1093 = vmatpush1.bf16.msra.mxu0 0
        %1094 = vmatprep.subr.bf16.mxu0 0
        %1095 = vmatpush1.bf16.msra.mxu0 0
        %1096 = vmatprep.subr.bf16.mxu0 0
        %1097 = vmatpush1.bf16.msra.mxu0 0
        %1098 = vmatprep.subr.bf16.mxu0 0
        %1099 = vmatpush1.bf16.msra.mxu0 0
        %1100 = vmatprep.subr.bf16.mxu0 0
        %1101 = vmatpush1.bf16.msra.mxu0 0
        %1102 = vmatprep.mubr.bf16.mxu0 0
        %1103 = vmatmul.mubr.bf16.gmra.mrb[0].mxu0 %v681
        %v1104 = vpop.f32.mrb[0].mxu0
        %v1105 = vadd.f32 0.0, %v1104
        %v1106 = vpop.f32.mrb[0].mxu0
        %v1107 = vadd.f32 0.0, %v1106
        %v1108 = vpop.f32.mrb[0].mxu0
        %v1109 = vadd.f32 0.0, %v1108
        %v1110 = vpop.f32.mrb[0].mxu0
        %v1111 = vadd.f32 0.0, %v1110
        %1112 = vmatprep.mubr.bf16.mxu0 0
        %1113 = vmatmul.mubr.bf16.gmra.mrb[0].mxu0 %v684
        %v1114 = vpop.f32.mrb[0].mxu0
        %v1115 = vadd.f32 0.0, %v1114
        %v1116 = vpop.f32.mrb[0].mxu0
        %v1117 = vadd.f32 0.0, %v1116
        %v1118 = vpop.f32.mrb[0].mxu0
        %v1119 = vadd.f32 0.0, %v1118
        %v1120 = vpop.f32.mrb[0].mxu0
        %v1121 = vadd.f32 0.0, %v1120
        %1122 = vmatprep.mubr.bf16.mxu0 0
        %1123 = vmatmul.mubr.bf16.gmra.mrb[0].mxu0 %v687
        %v1124 = vpop.f32.mrb[0].mxu0
        %v1125 = vadd.f32 0.0, %v1124
        %v1126 = vpop.f32.mrb[0].mxu0
        %v1127 = vadd.f32 0.0, %v1126
        %v1128 = vpop.f32.mrb[0].mxu0
        %v1129 = vadd.f32 0.0, %v1128
        %v1130 = vpop.f32.mrb[0].mxu0
        %v1131 = vadd.f32 0.0, %v1130
        %1132 = vmatprep.mubr.bf16.mxu0 0
        %1133 = vmatmul.mubr.bf16.gmra.mrb[0].mxu0 %v690
        %v1134 = vpop.f32.mrb[0].mxu0
        %v1135 = vadd.f32 0.0, %v1134
        %v1136 = vpop.f32.mrb[0].mxu0
        %v1137 = vadd.f32 0.0, %v1136
        %v1138 = vpop.f32.mrb[0].mxu0
        %v1139 = vadd.f32 0.0, %v1138
        %v1140 = vpop.f32.mrb[0].mxu0
        %v1141 = vadd.f32 0.0, %v1140
        %1142 = vmatprep.mubr.bf16.mxu0 0
        %1143 = vmatmul.mubr.bf16.gmra.mrb[0].mxu0 %v693
        %v1144 = vpop.f32.mrb[0].mxu0
        %v1145 = vadd.f32 0.0, %v1144
        %v1146 = vpop.f32.mrb[0].mxu0
        %v1147 = vadd.f32 0.0, %v1146
        %v1148 = vpop.f32.mrb[0].mxu0
        %v1149 = vadd.f32 0.0, %v1148
        %v1150 = vpop.f32.mrb[0].mxu0
        %v1151 = vadd.f32 0.0, %v1150
        %1152 = vmatprep.mubr.bf16.mxu0 0
        %1153 = vmatmul.mubr.bf16.gmra.mrb[0].mxu0 %v696
        %v1154 = vpop.f32.mrb[0].mxu0
        %v1155 = vadd.f32 0.0, %v1154
        %v1156 = vpop.f32.mrb[0].mxu0
        %v1157 = vadd.f32 0.0, %v1156
        %v1158 = vpop.f32.mrb[0].mxu0
        %v1159 = vadd.f32 0.0, %v1158
        %v1160 = vpop.f32.mrb[0].mxu0
        %v1161 = vadd.f32 0.0, %v1160
        %1162 = vdwg.mxu0
        %1163 = vmatprep.subr.bf16.mxu0 %v562
        %1164 = vmatpush1.bf16.msra.mxu0 %v561
        %1165 = vmatprep.subr.bf16.mxu0 %v578
        %1166 = vmatpush1.bf16.msra.mxu0 %v577
        %1167 = vmatprep.subr.bf16.mxu0 %v594
        %1168 = vmatpush1.bf16.msra.mxu0 %v593
        %1169 = vmatprep.subr.bf16.mxu0 %v610
        %1170 = vmatpush1.bf16.msra.mxu0 %v609
        %1171 = vmatprep.subr.bf16.mxu0 0
        %1172 = vmatpush1.bf16.msra.mxu0 0
        %1173 = vmatprep.subr.bf16.mxu0 0
        %1174 = vmatpush1.bf16.msra.mxu0 0
        %1175 = vmatprep.subr.bf16.mxu0 0
        %1176 = vmatpush1.bf16.msra.mxu0 0
        %1177 = vmatprep.subr.bf16.mxu0 0
        %1178 = vmatpush1.bf16.msra.mxu0 0
        %1179 = vmatprep.subr.bf16.mxu0 0
        %1180 = vmatpush1.bf16.msra.mxu0 0
        %1181 = vmatprep.subr.bf16.mxu0 0
        %1182 = vmatpush1.bf16.msra.mxu0 0
        %1183 = vmatprep.subr.bf16.mxu0 0
        %1184 = vmatpush1.bf16.msra.mxu0 0
        %1185 = vmatprep.subr.bf16.mxu0 0
        %1186 = vmatpush1.bf16.msra.mxu0 0
        %1187 = vmatprep.subr.bf16.mxu0 0
        %1188 = vmatpush1.bf16.msra.mxu0 0
        %1189 = vmatprep.subr.bf16.mxu0 0
        %1190 = vmatpush1.bf16.msra.mxu0 0
        %1191 = vmatprep.subr.bf16.mxu0 0
        %1192 = vmatpush1.bf16.msra.mxu0 0
        %1193 = vmatprep.subr.bf16.mxu0 0
        %1194 = vmatpush1.bf16.msra.mxu0 0
        %1195 = vmatprep.mubr.bf16.mxu0 0
        %1196 = vmatmul.mubr.bf16.gmra.mrb[0].mxu0 %v681
        %v1197 = vpop.f32.mrb[0].mxu0
        %v1198 = vadd.f32 0.0, %v1197
        %v1199 = vpop.f32.mrb[0].mxu0
        %v1200 = vadd.f32 0.0, %v1199
        %v1201 = vpop.f32.mrb[0].mxu0
        %v1202 = vadd.f32 0.0, %v1201
        %v1203 = vpop.f32.mrb[0].mxu0
        %v1204 = vadd.f32 0.0, %v1203
        %1205 = vmatprep.mubr.bf16.mxu0 0
        %1206 = vmatmul.mubr.bf16.gmra.mrb[0].mxu0 %v684
        %v1207 = vpop.f32.mrb[0].mxu0
        %v1208 = vadd.f32 0.0, %v1207
        %v1209 = vpop.f32.mrb[0].mxu0
        %v1210 = vadd.f32 0.0, %v1209
        %v1211 = vpop.f32.mrb[0].mxu0
        %v1212 = vadd.f32 0.0, %v1211
        %v1213 = vpop.f32.mrb[0].mxu0
        %v1214 = vadd.f32 0.0, %v1213
        %1215 = vmatprep.mubr.bf16.mxu0 0
        %1216 = vmatmul.mubr.bf16.gmra.mrb[0].mxu0 %v687
        %v1217 = vpop.f32.mrb[0].mxu0
        %v1218 = vadd.f32 0.0, %v1217
        %v1219 = vpop.f32.mrb[0].mxu0
        %v1220 = vadd.f32 0.0, %v1219
        %v1221 = vpop.f32.mrb[0].mxu0
        %v1222 = vadd.f32 0.0, %v1221
        %v1223 = vpop.f32.mrb[0].mxu0
        %v1224 = vadd.f32 0.0, %v1223
        %1225 = vmatprep.mubr.bf16.mxu0 0
        %1226 = vmatmul.mubr.bf16.gmra.mrb[0].mxu0 %v690
        %v1227 = vpop.f32.mrb[0].mxu0
        %v1228 = vadd.f32 0.0, %v1227
        %v1229 = vpop.f32.mrb[0].mxu0
        %v1230 = vadd.f32 0.0, %v1229
        %v1231 = vpop.f32.mrb[0].mxu0
        %v1232 = vadd.f32 0.0, %v1231
        %v1233 = vpop.f32.mrb[0].mxu0
        %v1234 = vadd.f32 0.0, %v1233
        %1235 = vmatprep.mubr.bf16.mxu0 0
        %1236 = vmatmul.mubr.bf16.gmra.mrb[0].mxu0 %v693
        %v1237 = vpop.f32.mrb[0].mxu0
        %v1238 = vadd.f32 0.0, %v1237
        %v1239 = vpop.f32.mrb[0].mxu0
        %v1240 = vadd.f32 0.0, %v1239
        %v1241 = vpop.f32.mrb[0].mxu0
        %v1242 = vadd.f32 0.0, %v1241
        %v1243 = vpop.f32.mrb[0].mxu0
        %v1244 = vadd.f32 0.0, %v1243
        %1245 = vmatprep.mubr.bf16.mxu0 0
        %1246 = vmatmul.mubr.bf16.gmra.mrb[0].mxu0 %v696
        %v1247 = vpop.f32.mrb[0].mxu0
        %v1248 = vadd.f32 0.0, %v1247
        %v1249 = vpop.f32.mrb[0].mxu0
        %v1250 = vadd.f32 0.0, %v1249
        %v1251 = vpop.f32.mrb[0].mxu0
        %v1252 = vadd.f32 0.0, %v1251
        %v1253 = vpop.f32.mrb[0].mxu0
        %v1254 = vadd.f32 0.0, %v1253
        %1255 = vdwg.mxu0
        %1256 = vmatprep.subr.bf16.mxu0 %v564
        %1257 = vmatpush1.bf16.msra.mxu0 %v563
        %1258 = vmatprep.subr.bf16.mxu0 %v580
        %1259 = vmatpush1.bf16.msra.mxu0 %v579
        %1260 = vmatprep.subr.bf16.mxu0 %v596
        %1261 = vmatpush1.bf16.msra.mxu0 %v595
        %1262 = vmatprep.subr.bf16.mxu0 %v612
        %1263 = vmatpush1.bf16.msra.mxu0 %v611
        %1264 = vmatprep.subr.bf16.mxu0 0
        %1265 = vmatpush1.bf16.msra.mxu0 0
        %1266 = vmatprep.subr.bf16.mxu0 0
        %1267 = vmatpush1.bf16.msra.mxu0 0
        %1268 = vmatprep.subr.bf16.mxu0 0
        %1269 = vmatpush1.bf16.msra.mxu0 0
        %1270 = vmatprep.subr.bf16.mxu0 0
        %1271 = vmatpush1.bf16.msra.mxu0 0
        %1272 = vmatprep.subr.bf16.mxu0 0
        %1273 = vmatpush1.bf16.msra.mxu0 0
        %1274 = vmatprep.subr.bf16.mxu0 0
        %1275 = vmatpush1.bf16.msra.mxu0 0
        %1276 = vmatprep.subr.bf16.mxu0 0
        %1277 = vmatpush1.bf16.msra.mxu0 0
        %1278 = vmatprep.subr.bf16.mxu0 0
        %1279 = vmatpush1.bf16.msra.mxu0 0
        %1280 = vmatprep.subr.bf16.mxu0 0
        %1281 = vmatpush1.bf16.msra.mxu0 0
        %1282 = vmatprep.subr.bf16.mxu0 0
        %1283 = vmatpush1.bf16.msra.mxu0 0
        %1284 = vmatprep.subr.bf16.mxu0 0
        %1285 = vmatpush1.bf16.msra.mxu0 0
        %1286 = vmatprep.subr.bf16.mxu0 0
        %1287 = vmatpush1.bf16.msra.mxu0 0
        %1288 = vmatprep.mubr.bf16.mxu0 0
        %1289 = vmatmul.mubr.bf16.gmra.mrb[0].mxu0 %v681
        %v1290 = vpop.f32.mrb[0].mxu0
        %v1291 = vadd.f32 0.0, %v1290
        %v1292 = vpop.f32.mrb[0].mxu0
        %v1293 = vadd.f32 0.0, %v1292
        %v1294 = vpop.f32.mrb[0].mxu0
        %v1295 = vadd.f32 0.0, %v1294
        %v1296 = vpop.f32.mrb[0].mxu0
        %v1297 = vadd.f32 0.0, %v1296
        %1298 = vmatprep.mubr.bf16.mxu0 0
        %1299 = vmatmul.mubr.bf16.gmra.mrb[0].mxu0 %v684
        %v1300 = vpop.f32.mrb[0].mxu0
        %v1301 = vadd.f32 0.0, %v1300
        %v1302 = vpop.f32.mrb[0].mxu0
        %v1303 = vadd.f32 0.0, %v1302
        %v1304 = vpop.f32.mrb[0].mxu0
        %v1305 = vadd.f32 0.0, %v1304
        %v1306 = vpop.f32.mrb[0].mxu0
        %v1307 = vadd.f32 0.0, %v1306
        %1308 = vmatprep.mubr.bf16.mxu0 0
        %1309 = vmatmul.mubr.bf16.gmra.mrb[0].mxu0 %v687
        %v1310 = vpop.f32.mrb[0].mxu0
        %v1311 = vadd.f32 0.0, %v1310
        %v1312 = vpop.f32.mrb[0].mxu0
        %v1313 = vadd.f32 0.0, %v1312
        %v1314 = vpop.f32.mrb[0].mxu0
        %v1315 = vadd.f32 0.0, %v1314
        %v1316 = vpop.f32.mrb[0].mxu0
        %v1317 = vadd.f32 0.0, %v1316
        %1318 = vmatprep.mubr.bf16.mxu0 0
        %1319 = vmatmul.mubr.bf16.gmra.mrb[0].mxu0 %v690
        %v1320 = vpop.f32.mrb[0].mxu0
        %v1321 = vadd.f32 0.0, %v1320
        %v1322 = vpop.f32.mrb[0].mxu0
        %v1323 = vadd.f32 0.0, %v1322
        %v1324 = vpop.f32.mrb[0].mxu0
        %v1325 = vadd.f32 0.0, %v1324
        %v1326 = vpop.f32.mrb[0].mxu0
        %v1327 = vadd.f32 0.0, %v1326
        %1328 = vmatprep.mubr.bf16.mxu0 0
        %1329 = vmatmul.mubr.bf16.gmra.mrb[0].mxu0 %v693
        %v1330 = vpop.f32.mrb[0].mxu0
        %v1331 = vadd.f32 0.0, %v1330
        %v1332 = vpop.f32.mrb[0].mxu0
        %v1333 = vadd.f32 0.0, %v1332
        %v1334 = vpop.f32.mrb[0].mxu0
        %v1335 = vadd.f32 0.0, %v1334
        %v1336 = vpop.f32.mrb[0].mxu0
        %v1337 = vadd.f32 0.0, %v1336
        %1338 = vmatprep.mubr.bf16.mxu0 0
        %1339 = vmatmul.mubr.bf16.gmra.mrb[0].mxu0 %v696
        %v1340 = vpop.f32.mrb[0].mxu0
        %v1341 = vadd.f32 0.0, %v1340
        %v1342 = vpop.f32.mrb[0].mxu0
        %v1343 = vadd.f32 0.0, %v1342
        %v1344 = vpop.f32.mrb[0].mxu0
        %v1345 = vadd.f32 0.0, %v1344
        %v1346 = vpop.f32.mrb[0].mxu0
        %v1347 = vadd.f32 0.0, %v1346
        %1348 = vdwg.mxu0
        %1349 = vmatprep.subr.bf16.mxu0 %v566
        %1350 = vmatpush1.bf16.msra.mxu0 %v565
        %1351 = vmatprep.subr.bf16.mxu0 %v582
        %1352 = vmatpush1.bf16.msra.mxu0 %v581
        %1353 = vmatprep.subr.bf16.mxu0 %v598
        %1354 = vmatpush1.bf16.msra.mxu0 %v597
        %1355 = vmatprep.subr.bf16.mxu0 %v614
        %1356 = vmatpush1.bf16.msra.mxu0 %v613
        %1357 = vmatprep.subr.bf16.mxu0 0
        %1358 = vmatpush1.bf16.msra.mxu0 0
        %1359 = vmatprep.subr.bf16.mxu0 0
        %1360 = vmatpush1.bf16.msra.mxu0 0
        %1361 = vmatprep.subr.bf16.mxu0 0
        %1362 = vmatpush1.bf16.msra.mxu0 0
        %1363 = vmatprep.subr.bf16.mxu0 0
        %1364 = vmatpush1.bf16.msra.mxu0 0
        %1365 = vmatprep.subr.bf16.mxu0 0
        %1366 = vmatpush1.bf16.msra.mxu0 0
        %1367 = vmatprep.subr.bf16.mxu0 0
        %1368 = vmatpush1.bf16.msra.mxu0 0
        %1369 = vmatprep.subr.bf16.mxu0 0
        %1370 = vmatpush1.bf16.msra.mxu0 0
        %1371 = vmatprep.subr.bf16.mxu0 0
        %1372 = vmatpush1.bf16.msra.mxu0 0
        %1373 = vmatprep.subr.bf16.mxu0 0
        %1374 = vmatpush1.bf16.msra.mxu0 0
        %1375 = vmatprep.subr.bf16.mxu0 0
        %1376 = vmatpush1.bf16.msra.mxu0 0
        %1377 = vmatprep.subr.bf16.mxu0 0
        %1378 = vmatpush1.bf16.msra.mxu0 0
        %1379 = vmatprep.subr.bf16.mxu0 0
        %1380 = vmatpush1.bf16.msra.mxu0 0
        %1381 = vmatprep.mubr.bf16.mxu0 0
        %1382 = vmatmul.mubr.bf16.gmra.mrb[0].mxu0 %v681
        %v1383 = vpop.f32.mrb[0].mxu0
        %v1384 = vadd.f32 0.0, %v1383
        %v1385 = vpop.f32.mrb[0].mxu0
        %v1386 = vadd.f32 0.0, %v1385
        %v1387 = vpop.f32.mrb[0].mxu0
        %v1388 = vadd.f32 0.0, %v1387
        %v1389 = vpop.f32.mrb[0].mxu0
        %v1390 = vadd.f32 0.0, %v1389
        %1391 = vmatprep.mubr.bf16.mxu0 0
        %1392 = vmatmul.mubr.bf16.gmra.mrb[0].mxu0 %v684
        %v1393 = vpop.f32.mrb[0].mxu0
        %v1394 = vadd.f32 0.0, %v1393
        %v1395 = vpop.f32.mrb[0].mxu0
        %v1396 = vadd.f32 0.0, %v1395
        %v1397 = vpop.f32.mrb[0].mxu0
        %v1398 = vadd.f32 0.0, %v1397
        %v1399 = vpop.f32.mrb[0].mxu0
        %v1400 = vadd.f32 0.0, %v1399
        %1401 = vmatprep.mubr.bf16.mxu0 0
        %1402 = vmatmul.mubr.bf16.gmra.mrb[0].mxu0 %v687
        %v1403 = vpop.f32.mrb[0].mxu0
        %v1404 = vadd.f32 0.0, %v1403
        %v1405 = vpop.f32.mrb[0].mxu0
        %v1406 = vadd.f32 0.0, %v1405
        %v1407 = vpop.f32.mrb[0].mxu0
        %v1408 = vadd.f32 0.0, %v1407
        %v1409 = vpop.f32.mrb[0].mxu0
        %v1410 = vadd.f32 0.0, %v1409
        %1411 = vmatprep.mubr.bf16.mxu0 0
        %1412 = vmatmul.mubr.bf16.gmra.mrb[0].mxu0 %v690
        %v1413 = vpop.f32.mrb[0].mxu0
        %v1414 = vadd.f32 0.0, %v1413
        %v1415 = vpop.f32.mrb[0].mxu0
        %v1416 = vadd.f32 0.0, %v1415
        %v1417 = vpop.f32.mrb[0].mxu0
        %v1418 = vadd.f32 0.0, %v1417
        %v1419 = vpop.f32.mrb[0].mxu0
        %v1420 = vadd.f32 0.0, %v1419
        %1421 = vmatprep.mubr.bf16.mxu0 0
        %1422 = vmatmul.mubr.bf16.gmra.mrb[0].mxu0 %v693
        %v1423 = vpop.f32.mrb[0].mxu0
        %v1424 = vadd.f32 0.0, %v1423
        %v1425 = vpop.f32.mrb[0].mxu0
        %v1426 = vadd.f32 0.0, %v1425
        %v1427 = vpop.f32.mrb[0].mxu0
        %v1428 = vadd.f32 0.0, %v1427
        %v1429 = vpop.f32.mrb[0].mxu0
        %v1430 = vadd.f32 0.0, %v1429
        %1431 = vmatprep.mubr.bf16.mxu0 0
        %1432 = vmatmul.mubr.bf16.gmra.mrb[0].mxu0 %v696
        %v1433 = vpop.f32.mrb[0].mxu0
        %v1434 = vadd.f32 0.0, %v1433
        %v1435 = vpop.f32.mrb[0].mxu0
        %v1436 = vadd.f32 0.0, %v1435
        %v1437 = vpop.f32.mrb[0].mxu0
        %v1438 = vadd.f32 0.0, %v1437
        %v1439 = vpop.f32.mrb[0].mxu0
        %v1440 = vadd.f32 0.0, %v1439
        %1441 = vdwg.mxu0
        %v1442 = vld [vmem:[%s2] sm:$0xf]
        %v1443 = vld [vmem:[%s2 + $0x4] sm:$0xf]
        %v1444 = vld [vmem:[%s2 + $0x8] sm:$0xf]
        %v1445 = vld [vmem:[%s2 + $0xc] sm:$0xf]
        %v1446 = vpack.c.bf16 %v737, %v733
        %v1447 = vpack.c.bf16 %v739, %v735
        %v1448 = vpack.c.bf16 %v830, %v826
        %v1449 = vpack.c.bf16 %v832, %v828
        %v1450 = vpack.c.bf16 %v923, %v919
        %v1451 = vpack.c.bf16 %v925, %v921
        %v1452 = vpack.c.bf16 %v1016, %v1012
        %v1453 = vpack.c.bf16 %v1018, %v1014
        %v1454 = vpack.c.bf16 %v1109, %v1105
        %v1455 = vpack.c.bf16 %v1111, %v1107
        %v1456 = vpack.c.bf16 %v1202, %v1198
        %v1457 = vpack.c.bf16 %v1204, %v1200
        %v1458 = vpack.c.bf16 %v1295, %v1291
        %v1459 = vpack.c.bf16 %v1297, %v1293
        %v1460 = vpack.c.bf16 %v1388, %v1384
        %v1461 = vpack.c.bf16 %v1390, %v1386
        %v1462 = vpack.c.bf16 %v747, %v743
        %v1463 = vpack.c.bf16 %v749, %v745
        %v1464 = vpack.c.bf16 %v840, %v836
        %v1465 = vpack.c.bf16 %v842, %v838
        %v1466 = vpack.c.bf16 %v933, %v929
        %v1467 = vpack.c.bf16 %v935, %v931
        %v1468 = vpack.c.bf16 %v1026, %v1022
        %v1469 = vpack.c.bf16 %v1028, %v1024
        %v1470 = vpack.c.bf16 %v1119, %v1115
        %v1471 = vpack.c.bf16 %v1121, %v1117
        %v1472 = vpack.c.bf16 %v1212, %v1208
        %v1473 = vpack.c.bf16 %v1214, %v1210
        %v1474 = vpack.c.bf16 %v1305, %v1301
        %v1475 = vpack.c.bf16 %v1307, %v1303
        %v1476 = vpack.c.bf16 %v1398, %v1394
        %v1477 = vpack.c.bf16 %v1400, %v1396
        %v1482 = vunpack.c.l.b16 %v1442
        %v1483 = vunpack.c.l.b16 %v1443
        %v1484 = vunpack.c.l.b16 %v1444
        %v1485 = vunpack.c.l.b16 %v1445
        %v1486 = vpack.c.b16 %v1483, %v1482
        %v1487 = vpack.c.b16 %v1485, %v1484
        %vm1488 = vcmask 261120
        %v1490 = vsel %vm1488, %v1486, 0
        %v1493 = vsel %vm1488, %v1487, 0
        %1495 = vmatprep.subr.bf16.mxu0 %v1447
        %1496 = vmatpush1.bf16.msra.mxu0 %v1446
        %1497 = vmatprep.subr.bf16.mxu0 %v1463
        %1498 = vmatpush1.bf16.msra.mxu0 %v1462
        %1499 = vmatprep.subr.bf16.mxu0 0
        %1500 = vmatpush1.bf16.msra.mxu0 0
        %1501 = vmatprep.subr.bf16.mxu0 0
        %1502 = vmatpush1.bf16.msra.mxu0 0
        %1503 = vmatprep.subr.bf16.mxu0 0
        %1504 = vmatpush1.bf16.msra.mxu0 0
        %1505 = vmatprep.subr.bf16.mxu0 0
        %1506 = vmatpush1.bf16.msra.mxu0 0
        %1507 = vmatprep.subr.bf16.mxu0 0
        %1508 = vmatpush1.bf16.msra.mxu0 0
        %1509 = vmatprep.subr.bf16.mxu0 0
        %1510 = vmatpush1.bf16.msra.mxu0 0
        %1511 = vmatprep.subr.bf16.mxu0 0
        %1512 = vmatpush1.bf16.msra.mxu0 0
        %1513 = vmatprep.subr.bf16.mxu0 0
        %1514 = vmatpush1.bf16.msra.mxu0 0
        %1515 = vmatprep.subr.bf16.mxu0 0
        %1516 = vmatpush1.bf16.msra.mxu0 0
        %1517 = vmatprep.subr.bf16.mxu0 0
        %1518 = vmatpush1.bf16.msra.mxu0 0
        %1519 = vmatprep.subr.bf16.mxu0 0
        %1520 = vmatpush1.bf16.msra.mxu0 0
        %1521 = vmatprep.subr.bf16.mxu0 0
        %1522 = vmatpush1.bf16.msra.mxu0 0
        %1523 = vmatprep.subr.bf16.mxu0 0
        %1524 = vmatpush1.bf16.msra.mxu0 0
        %1525 = vmatprep.subr.bf16.mxu0 0
        %1526 = vmatpush1.bf16.msra.mxu0 0
        %1527 = vmatprep.mubr.bf16.mxu0 0
        %1528 = vmatmul.mubr.bf16.gmra.mrb[0].mxu0 %v1490
        %v1529 = vpop.f32.mrb[0].mxu0
        %v1530 = vadd.f32 %v753, %v1529
        %v1531 = vpop.f32.mrb[0].mxu0
        %v1532 = vadd.f32 %v755, %v1531
        %v1533 = vpop.f32.mrb[0].mxu0
        %v1534 = vadd.f32 %v757, %v1533
        %v1535 = vpop.f32.mrb[0].mxu0
        %v1536 = vadd.f32 %v759, %v1535
        %1537 = vmatprep.mubr.bf16.mxu0 0
        %1538 = vmatmul.mubr.bf16.gmra.mrb[0].mxu0 %v1493
        %v1539 = vpop.f32.mrb[0].mxu0
        %v1540 = vadd.f32 %v763, %v1539
        %v1541 = vpop.f32.mrb[0].mxu0
        %v1542 = vadd.f32 %v765, %v1541
        %v1543 = vpop.f32.mrb[0].mxu0
        %v1544 = vadd.f32 %v767, %v1543
        %v1545 = vpop.f32.mrb[0].mxu0
        %v1546 = vadd.f32 %v769, %v1545
        %1547 = vdwg.mxu0
        %1548 = vmatprep.subr.bf16.mxu0 %v1449
        %1549 = vmatpush1.bf16.msra.mxu0 %v1448
        %1550 = vmatprep.subr.bf16.mxu0 %v1465
        %1551 = vmatpush1.bf16.msra.mxu0 %v1464
        %1552 = vmatprep.subr.bf16.mxu0 0
        %1553 = vmatpush1.bf16.msra.mxu0 0
        %1554 = vmatprep.subr.bf16.mxu0 0
        %1555 = vmatpush1.bf16.msra.mxu0 0
        %1556 = vmatprep.subr.bf16.mxu0 0
        %1557 = vmatpush1.bf16.msra.mxu0 0
        %1558 = vmatprep.subr.bf16.mxu0 0
        %1559 = vmatpush1.bf16.msra.mxu0 0
        %1560 = vmatprep.subr.bf16.mxu0 0
        %1561 = vmatpush1.bf16.msra.mxu0 0
        %1562 = vmatprep.subr.bf16.mxu0 0
        %1563 = vmatpush1.bf16.msra.mxu0 0
        %1564 = vmatprep.subr.bf16.mxu0 0
        %1565 = vmatpush1.bf16.msra.mxu0 0
        %1566 = vmatprep.subr.bf16.mxu0 0
        %1567 = vmatpush1.bf16.msra.mxu0 0
        %1568 = vmatprep.subr.bf16.mxu0 0
        %1569 = vmatpush1.bf16.msra.mxu0 0
        %1570 = vmatprep.subr.bf16.mxu0 0
        %1571 = vmatpush1.bf16.msra.mxu0 0
        %1572 = vmatprep.subr.bf16.mxu0 0
        %1573 = vmatpush1.bf16.msra.mxu0 0
        %1574 = vmatprep.subr.bf16.mxu0 0
        %1575 = vmatpush1.bf16.msra.mxu0 0
        %1576 = vmatprep.subr.bf16.mxu0 0
        %1577 = vmatpush1.bf16.msra.mxu0 0
        %1578 = vmatprep.subr.bf16.mxu0 0
        %1579 = vmatpush1.bf16.msra.mxu0 0
        %1580 = vmatprep.mubr.bf16.mxu0 0
        %1581 = vmatmul.mubr.bf16.gmra.mrb[0].mxu0 %v1490
        %v1582 = vpop.f32.mrb[0].mxu0
        %v1583 = vadd.f32 %v846, %v1582
        %v1584 = vpop.f32.mrb[0].mxu0
        %v1585 = vadd.f32 %v848, %v1584
        %v1586 = vpop.f32.mrb[0].mxu0
        %v1587 = vadd.f32 %v850, %v1586
        %v1588 = vpop.f32.mrb[0].mxu0
        %v1589 = vadd.f32 %v852, %v1588
        %1590 = vmatprep.mubr.bf16.mxu0 0
        %1591 = vmatmul.mubr.bf16.gmra.mrb[0].mxu0 %v1493
        %v1592 = vpop.f32.mrb[0].mxu0
        %v1593 = vadd.f32 %v856, %v1592
        %v1594 = vpop.f32.mrb[0].mxu0
        %v1595 = vadd.f32 %v858, %v1594
        %v1596 = vpop.f32.mrb[0].mxu0
        %v1597 = vadd.f32 %v860, %v1596
        %v1598 = vpop.f32.mrb[0].mxu0
        %v1599 = vadd.f32 %v862, %v1598
        %1600 = vdwg.mxu0
        %1601 = vmatprep.subr.bf16.mxu0 %v1451
        %1602 = vmatpush1.bf16.msra.mxu0 %v1450
        %1603 = vmatprep.subr.bf16.mxu0 %v1467
        %1604 = vmatpush1.bf16.msra.mxu0 %v1466
        %1605 = vmatprep.subr.bf16.mxu0 0
        %1606 = vmatpush1.bf16.msra.mxu0 0
        %1607 = vmatprep.subr.bf16.mxu0 0
        %1608 = vmatpush1.bf16.msra.mxu0 0
        %1609 = vmatprep.subr.bf16.mxu0 0
        %1610 = vmatpush1.bf16.msra.mxu0 0
        %1611 = vmatprep.subr.bf16.mxu0 0
        %1612 = vmatpush1.bf16.msra.mxu0 0
        %1613 = vmatprep.subr.bf16.mxu0 0
        %1614 = vmatpush1.bf16.msra.mxu0 0
        %1615 = vmatprep.subr.bf16.mxu0 0
        %1616 = vmatpush1.bf16.msra.mxu0 0
        %1617 = vmatprep.subr.bf16.mxu0 0
        %1618 = vmatpush1.bf16.msra.mxu0 0
        %1619 = vmatprep.subr.bf16.mxu0 0
        %1620 = vmatpush1.bf16.msra.mxu0 0
        %1621 = vmatprep.subr.bf16.mxu0 0
        %1622 = vmatpush1.bf16.msra.mxu0 0
        %1623 = vmatprep.subr.bf16.mxu0 0
        %1624 = vmatpush1.bf16.msra.mxu0 0
        %1625 = vmatprep.subr.bf16.mxu0 0
        %1626 = vmatpush1.bf16.msra.mxu0 0
        %1627 = vmatprep.subr.bf16.mxu0 0
        %1628 = vmatpush1.bf16.msra.mxu0 0
        %1629 = vmatprep.subr.bf16.mxu0 0
        %1630 = vmatpush1.bf16.msra.mxu0 0
        %1631 = vmatprep.subr.bf16.mxu0 0
        %1632 = vmatpush1.bf16.msra.mxu0 0
        %1633 = vmatprep.mubr.bf16.mxu0 0
        %1634 = vmatmul.mubr.bf16.gmra.mrb[0].mxu0 %v1490
        %v1635 = vpop.f32.mrb[0].mxu0
        %v1636 = vadd.f32 %v939, %v1635
        %v1637 = vpop.f32.mrb[0].mxu0
        %v1638 = vadd.f32 %v941, %v1637
        %v1639 = vpop.f32.mrb[0].mxu0
        %v1640 = vadd.f32 %v943, %v1639
        %v1641 = vpop.f32.mrb[0].mxu0
        %v1642 = vadd.f32 %v945, %v1641
        %1643 = vmatprep.mubr.bf16.mxu0 0
        %1644 = vmatmul.mubr.bf16.gmra.mrb[0].mxu0 %v1493
        %v1645 = vpop.f32.mrb[0].mxu0
        %v1646 = vadd.f32 %v949, %v1645
        %v1647 = vpop.f32.mrb[0].mxu0
        %v1648 = vadd.f32 %v951, %v1647
        %v1649 = vpop.f32.mrb[0].mxu0
        %v1650 = vadd.f32 %v953, %v1649
        %v1651 = vpop.f32.mrb[0].mxu0
        %v1652 = vadd.f32 %v955, %v1651
        %1653 = vdwg.mxu0
        %1654 = vmatprep.subr.bf16.mxu0 %v1453
        %1655 = vmatpush1.bf16.msra.mxu0 %v1452
        %1656 = vmatprep.subr.bf16.mxu0 %v1469
        %1657 = vmatpush1.bf16.msra.mxu0 %v1468
        %1658 = vmatprep.subr.bf16.mxu0 0
        %1659 = vmatpush1.bf16.msra.mxu0 0
        %1660 = vmatprep.subr.bf16.mxu0 0
        %1661 = vmatpush1.bf16.msra.mxu0 0
        %1662 = vmatprep.subr.bf16.mxu0 0
        %1663 = vmatpush1.bf16.msra.mxu0 0
        %1664 = vmatprep.subr.bf16.mxu0 0
        %1665 = vmatpush1.bf16.msra.mxu0 0
        %1666 = vmatprep.subr.bf16.mxu0 0
        %1667 = vmatpush1.bf16.msra.mxu0 0
        %1668 = vmatprep.subr.bf16.mxu0 0
        %1669 = vmatpush1.bf16.msra.mxu0 0
        %1670 = vmatprep.subr.bf16.mxu0 0
        %1671 = vmatpush1.bf16.msra.mxu0 0
        %1672 = vmatprep.subr.bf16.mxu0 0
        %1673 = vmatpush1.bf16.msra.mxu0 0
        %1674 = vmatprep.subr.bf16.mxu0 0
        %1675 = vmatpush1.bf16.msra.mxu0 0
        %1676 = vmatprep.subr.bf16.mxu0 0
        %1677 = vmatpush1.bf16.msra.mxu0 0
        %1678 = vmatprep.subr.bf16.mxu0 0
        %1679 = vmatpush1.bf16.msra.mxu0 0
        %1680 = vmatprep.subr.bf16.mxu0 0
        %1681 = vmatpush1.bf16.msra.mxu0 0
        %1682 = vmatprep.subr.bf16.mxu0 0
        %1683 = vmatpush1.bf16.msra.mxu0 0
        %1684 = vmatprep.subr.bf16.mxu0 0
        %1685 = vmatpush1.bf16.msra.mxu0 0
        %1686 = vmatprep.mubr.bf16.mxu0 0
        %1687 = vmatmul.mubr.bf16.gmra.mrb[0].mxu0 %v1490
        %v1688 = vpop.f32.mrb[0].mxu0
        %v1689 = vadd.f32 %v1032, %v1688
        %v1690 = vpop.f32.mrb[0].mxu0
        %v1691 = vadd.f32 %v1034, %v1690
        %v1692 = vpop.f32.mrb[0].mxu0
        %v1693 = vadd.f32 %v1036, %v1692
        %v1694 = vpop.f32.mrb[0].mxu0
        %v1695 = vadd.f32 %v1038, %v1694
        %1696 = vmatprep.mubr.bf16.mxu0 0
        %1697 = vmatmul.mubr.bf16.gmra.mrb[0].mxu0 %v1493
        %v1698 = vpop.f32.mrb[0].mxu0
        %v1699 = vadd.f32 %v1042, %v1698
        %v1700 = vpop.f32.mrb[0].mxu0
        %v1701 = vadd.f32 %v1044, %v1700
        %v1702 = vpop.f32.mrb[0].mxu0
        %v1703 = vadd.f32 %v1046, %v1702
        %v1704 = vpop.f32.mrb[0].mxu0
        %v1705 = vadd.f32 %v1048, %v1704
        %1706 = vdwg.mxu0
        %1707 = vmatprep.subr.bf16.mxu0 %v1455
        %1708 = vmatpush1.bf16.msra.mxu0 %v1454
        %1709 = vmatprep.subr.bf16.mxu0 %v1471
        %1710 = vmatpush1.bf16.msra.mxu0 %v1470
        %1711 = vmatprep.subr.bf16.mxu0 0
        %1712 = vmatpush1.bf16.msra.mxu0 0
        %1713 = vmatprep.subr.bf16.mxu0 0
        %1714 = vmatpush1.bf16.msra.mxu0 0
        %1715 = vmatprep.subr.bf16.mxu0 0
        %1716 = vmatpush1.bf16.msra.mxu0 0
        %1717 = vmatprep.subr.bf16.mxu0 0
        %1718 = vmatpush1.bf16.msra.mxu0 0
        %1719 = vmatprep.subr.bf16.mxu0 0
        %1720 = vmatpush1.bf16.msra.mxu0 0
        %1721 = vmatprep.subr.bf16.mxu0 0
        %1722 = vmatpush1.bf16.msra.mxu0 0
        %1723 = vmatprep.subr.bf16.mxu0 0
        %1724 = vmatpush1.bf16.msra.mxu0 0
        %1725 = vmatprep.subr.bf16.mxu0 0
        %1726 = vmatpush1.bf16.msra.mxu0 0
        %1727 = vmatprep.subr.bf16.mxu0 0
        %1728 = vmatpush1.bf16.msra.mxu0 0
        %1729 = vmatprep.subr.bf16.mxu0 0
        %1730 = vmatpush1.bf16.msra.mxu0 0
        %1731 = vmatprep.subr.bf16.mxu0 0
        %1732 = vmatpush1.bf16.msra.mxu0 0
        %1733 = vmatprep.subr.bf16.mxu0 0
        %1734 = vmatpush1.bf16.msra.mxu0 0
        %1735 = vmatprep.subr.bf16.mxu0 0
        %1736 = vmatpush1.bf16.msra.mxu0 0
        %1737 = vmatprep.subr.bf16.mxu0 0
        %1738 = vmatpush1.bf16.msra.mxu0 0
        %1739 = vmatprep.mubr.bf16.mxu0 0
        %1740 = vmatmul.mubr.bf16.gmra.mrb[0].mxu0 %v1490
        %v1741 = vpop.f32.mrb[0].mxu0
        %v1742 = vadd.f32 %v1125, %v1741
        %v1743 = vpop.f32.mrb[0].mxu0
        %v1744 = vadd.f32 %v1127, %v1743
        %v1745 = vpop.f32.mrb[0].mxu0
        %v1746 = vadd.f32 %v1129, %v1745
        %v1747 = vpop.f32.mrb[0].mxu0
        %v1748 = vadd.f32 %v1131, %v1747
        %1749 = vmatprep.mubr.bf16.mxu0 0
        %1750 = vmatmul.mubr.bf16.gmra.mrb[0].mxu0 %v1493
        %v1751 = vpop.f32.mrb[0].mxu0
        %v1752 = vadd.f32 %v1135, %v1751
        %v1753 = vpop.f32.mrb[0].mxu0
        %v1754 = vadd.f32 %v1137, %v1753
        %v1755 = vpop.f32.mrb[0].mxu0
        %v1756 = vadd.f32 %v1139, %v1755
        %v1757 = vpop.f32.mrb[0].mxu0
        %v1758 = vadd.f32 %v1141, %v1757
        %1759 = vdwg.mxu0
        %1760 = vmatprep.subr.bf16.mxu0 %v1457
        %1761 = vmatpush1.bf16.msra.mxu0 %v1456
        %1762 = vmatprep.subr.bf16.mxu0 %v1473
        %1763 = vmatpush1.bf16.msra.mxu0 %v1472
        %1764 = vmatprep.subr.bf16.mxu0 0
        %1765 = vmatpush1.bf16.msra.mxu0 0
        %1766 = vmatprep.subr.bf16.mxu0 0
        %1767 = vmatpush1.bf16.msra.mxu0 0
        %1768 = vmatprep.subr.bf16.mxu0 0
        %1769 = vmatpush1.bf16.msra.mxu0 0
        %1770 = vmatprep.subr.bf16.mxu0 0
        %1771 = vmatpush1.bf16.msra.mxu0 0
        %1772 = vmatprep.subr.bf16.mxu0 0
        %1773 = vmatpush1.bf16.msra.mxu0 0
        %1774 = vmatprep.subr.bf16.mxu0 0
        %1775 = vmatpush1.bf16.msra.mxu0 0
        %1776 = vmatprep.subr.bf16.mxu0 0
        %1777 = vmatpush1.bf16.msra.mxu0 0
        %1778 = vmatprep.subr.bf16.mxu0 0
        %1779 = vmatpush1.bf16.msra.mxu0 0
        %1780 = vmatprep.subr.bf16.mxu0 0
        %1781 = vmatpush1.bf16.msra.mxu0 0
        %1782 = vmatprep.subr.bf16.mxu0 0
        %1783 = vmatpush1.bf16.msra.mxu0 0
        %1784 = vmatprep.subr.bf16.mxu0 0
        %1785 = vmatpush1.bf16.msra.mxu0 0
        %1786 = vmatprep.subr.bf16.mxu0 0
        %1787 = vmatpush1.bf16.msra.mxu0 0
        %1788 = vmatprep.subr.bf16.mxu0 0
        %1789 = vmatpush1.bf16.msra.mxu0 0
        %1790 = vmatprep.subr.bf16.mxu0 0
        %1791 = vmatpush1.bf16.msra.mxu0 0
        %1792 = vmatprep.mubr.bf16.mxu0 0
        %1793 = vmatmul.mubr.bf16.gmra.mrb[0].mxu0 %v1490
        %v1794 = vpop.f32.mrb[0].mxu0
        %v1795 = vadd.f32 %v1218, %v1794
        %v1796 = vpop.f32.mrb[0].mxu0
        %v1797 = vadd.f32 %v1220, %v1796
        %v1798 = vpop.f32.mrb[0].mxu0
        %v1799 = vadd.f32 %v1222, %v1798
        %v1800 = vpop.f32.mrb[0].mxu0
        %v1801 = vadd.f32 %v1224, %v1800
        %1802 = vmatprep.mubr.bf16.mxu0 0
        %1803 = vmatmul.mubr.bf16.gmra.mrb[0].mxu0 %v1493
        %v1804 = vpop.f32.mrb[0].mxu0
        %v1805 = vadd.f32 %v1228, %v1804
        %v1806 = vpop.f32.mrb[0].mxu0
        %v1807 = vadd.f32 %v1230, %v1806
        %v1808 = vpop.f32.mrb[0].mxu0
        %v1809 = vadd.f32 %v1232, %v1808
        %v1810 = vpop.f32.mrb[0].mxu0
        %v1811 = vadd.f32 %v1234, %v1810
        %1812 = vdwg.mxu0
        %1813 = vmatprep.subr.bf16.mxu0 %v1459
        %1814 = vmatpush1.bf16.msra.mxu0 %v1458
        %1815 = vmatprep.subr.bf16.mxu0 %v1475
        %1816 = vmatpush1.bf16.msra.mxu0 %v1474
        %1817 = vmatprep.subr.bf16.mxu0 0
        %1818 = vmatpush1.bf16.msra.mxu0 0
        %1819 = vmatprep.subr.bf16.mxu0 0
        %1820 = vmatpush1.bf16.msra.mxu0 0
        %1821 = vmatprep.subr.bf16.mxu0 0
        %1822 = vmatpush1.bf16.msra.mxu0 0
        %1823 = vmatprep.subr.bf16.mxu0 0
        %1824 = vmatpush1.bf16.msra.mxu0 0
        %1825 = vmatprep.subr.bf16.mxu0 0
        %1826 = vmatpush1.bf16.msra.mxu0 0
        %1827 = vmatprep.subr.bf16.mxu0 0
        %1828 = vmatpush1.bf16.msra.mxu0 0
        %1829 = vmatprep.subr.bf16.mxu0 0
        %1830 = vmatpush1.bf16.msra.mxu0 0
        %1831 = vmatprep.subr.bf16.mxu0 0
        %1832 = vmatpush1.bf16.msra.mxu0 0
        %1833 = vmatprep.subr.bf16.mxu0 0
        %1834 = vmatpush1.bf16.msra.mxu0 0
        %1835 = vmatprep.subr.bf16.mxu0 0
        %1836 = vmatpush1.bf16.msra.mxu0 0
        %1837 = vmatprep.subr.bf16.mxu0 0
        %1838 = vmatpush1.bf16.msra.mxu0 0
        %1839 = vmatprep.subr.bf16.mxu0 0
        %1840 = vmatpush1.bf16.msra.mxu0 0
        %1841 = vmatprep.subr.bf16.mxu0 0
        %1842 = vmatpush1.bf16.msra.mxu0 0
        %1843 = vmatprep.subr.bf16.mxu0 0
        %1844 = vmatpush1.bf16.msra.mxu0 0
        %1845 = vmatprep.mubr.bf16.mxu0 0
        %1846 = vmatmul.mubr.bf16.gmra.mrb[0].mxu0 %v1490
        %v1847 = vpop.f32.mrb[0].mxu0
        %v1848 = vadd.f32 %v1311, %v1847
        %v1849 = vpop.f32.mrb[0].mxu0
        %v1850 = vadd.f32 %v1313, %v1849
        %v1851 = vpop.f32.mrb[0].mxu0
        %v1852 = vadd.f32 %v1315, %v1851
        %v1853 = vpop.f32.mrb[0].mxu0
        %v1854 = vadd.f32 %v1317, %v1853
        %1855 = vmatprep.mubr.bf16.mxu0 0
        %1856 = vmatmul.mubr.bf16.gmra.mrb[0].mxu0 %v1493
        %v1857 = vpop.f32.mrb[0].mxu0
        %v1858 = vadd.f32 %v1321, %v1857
        %v1859 = vpop.f32.mrb[0].mxu0
        %v1860 = vadd.f32 %v1323, %v1859
        %v1861 = vpop.f32.mrb[0].mxu0
        %v1862 = vadd.f32 %v1325, %v1861
        %v1863 = vpop.f32.mrb[0].mxu0
        %v1864 = vadd.f32 %v1327, %v1863
        %1865 = vdwg.mxu0
        %1866 = vmatprep.subr.bf16.mxu0 %v1461
        %1867 = vmatpush1.bf16.msra.mxu0 %v1460
        %1868 = vmatprep.subr.bf16.mxu0 %v1477
        %1869 = vmatpush1.bf16.msra.mxu0 %v1476
        %1870 = vmatprep.subr.bf16.mxu0 0
        %1871 = vmatpush1.bf16.msra.mxu0 0
        %1872 = vmatprep.subr.bf16.mxu0 0
        %1873 = vmatpush1.bf16.msra.mxu0 0
        %1874 = vmatprep.subr.bf16.mxu0 0
        %1875 = vmatpush1.bf16.msra.mxu0 0
        %1876 = vmatprep.subr.bf16.mxu0 0
        %1877 = vmatpush1.bf16.msra.mxu0 0
        %1878 = vmatprep.subr.bf16.mxu0 0
        %1879 = vmatpush1.bf16.msra.mxu0 0
        %1880 = vmatprep.subr.bf16.mxu0 0
        %1881 = vmatpush1.bf16.msra.mxu0 0
        %1882 = vmatprep.subr.bf16.mxu0 0
        %1883 = vmatpush1.bf16.msra.mxu0 0
        %1884 = vmatprep.subr.bf16.mxu0 0
        %1885 = vmatpush1.bf16.msra.mxu0 0
        %1886 = vmatprep.subr.bf16.mxu0 0
        %1887 = vmatpush1.bf16.msra.mxu0 0
        %1888 = vmatprep.subr.bf16.mxu0 0
        %1889 = vmatpush1.bf16.msra.mxu0 0
        %1890 = vmatprep.subr.bf16.mxu0 0
        %1891 = vmatpush1.bf16.msra.mxu0 0
        %1892 = vmatprep.subr.bf16.mxu0 0
        %1893 = vmatpush1.bf16.msra.mxu0 0
        %1894 = vmatprep.subr.bf16.mxu0 0
        %1895 = vmatpush1.bf16.msra.mxu0 0
        %1896 = vmatprep.subr.bf16.mxu0 0
        %1897 = vmatpush1.bf16.msra.mxu0 0
        %1898 = vmatprep.mubr.bf16.mxu0 0
        %1899 = vmatmul.mubr.bf16.gmra.mrb[0].mxu0 %v1490
        %v1900 = vpop.f32.mrb[0].mxu0
        %v1901 = vadd.f32 %v1404, %v1900
        %v1902 = vpop.f32.mrb[0].mxu0
        %v1903 = vadd.f32 %v1406, %v1902
        %v1904 = vpop.f32.mrb[0].mxu0
        %v1905 = vadd.f32 %v1408, %v1904
        %v1906 = vpop.f32.mrb[0].mxu0
        %v1907 = vadd.f32 %v1410, %v1906
        %1908 = vmatprep.mubr.bf16.mxu0 0
        %1909 = vmatmul.mubr.bf16.gmra.mrb[0].mxu0 %v1493
        %v1910 = vpop.f32.mrb[0].mxu0
        %v1911 = vadd.f32 %v1414, %v1910
        %v1912 = vpop.f32.mrb[0].mxu0
        %v1913 = vadd.f32 %v1416, %v1912
        %v1914 = vpop.f32.mrb[0].mxu0
        %v1915 = vadd.f32 %v1418, %v1914
        %v1916 = vpop.f32.mrb[0].mxu0
        %v1917 = vadd.f32 %v1420, %v1916
        %1918 = vdwg.mxu0
        %v1919 = vmax.f32 %v1530, 0.0
        %v1920 = vmax.f32 %v1532, 0.0
        %v1921 = vmax.f32 %v1583, 0.0
        %v1922 = vmax.f32 %v1585, 0.0
        %v1923 = vmax.f32 %v1636, 0.0
        %v1924 = vmax.f32 %v1638, 0.0
        %v1925 = vmax.f32 %v1689, 0.0
        %v1926 = vmax.f32 %v1691, 0.0
        %v1927 = vmax.f32 %v1742, 0.0
        %v1928 = vmax.f32 %v1744, 0.0
        %v1929 = vmax.f32 %v1795, 0.0
        %v1930 = vmax.f32 %v1797, 0.0
        %v1931 = vmax.f32 %v1848, 0.0
        %v1932 = vmax.f32 %v1850, 0.0
        %v1933 = vmax.f32 %v1901, 0.0
        %v1934 = vmax.f32 %v1903, 0.0
        %v1935 = vmax.f32 %v1534, 0.0
        %v1936 = vmax.f32 %v1536, 0.0
        %v1937 = vmax.f32 %v1587, 0.0
        %v1938 = vmax.f32 %v1589, 0.0
        %v1939 = vmax.f32 %v1640, 0.0
        %v1940 = vmax.f32 %v1642, 0.0
        %v1941 = vmax.f32 %v1693, 0.0
        %v1942 = vmax.f32 %v1695, 0.0
        %v1943 = vmax.f32 %v1746, 0.0
        %v1944 = vmax.f32 %v1748, 0.0
        %v1945 = vmax.f32 %v1799, 0.0
        %v1946 = vmax.f32 %v1801, 0.0
        %v1947 = vmax.f32 %v1852, 0.0
        %v1948 = vmax.f32 %v1854, 0.0
        %v1949 = vmax.f32 %v1905, 0.0
        %v1950 = vmax.f32 %v1907, 0.0
        %v1951 = vmax.f32 %v1540, 0.0
        %v1952 = vmax.f32 %v1542, 0.0
        %v1953 = vmax.f32 %v1593, 0.0
        %v1954 = vmax.f32 %v1595, 0.0
        %v1955 = vmax.f32 %v1646, 0.0
        %v1956 = vmax.f32 %v1648, 0.0
        %v1957 = vmax.f32 %v1699, 0.0
        %v1958 = vmax.f32 %v1701, 0.0
        %v1959 = vmax.f32 %v1752, 0.0
        %v1960 = vmax.f32 %v1754, 0.0
        %v1961 = vmax.f32 %v1805, 0.0
        %v1962 = vmax.f32 %v1807, 0.0
        %v1963 = vmax.f32 %v1858, 0.0
        %v1964 = vmax.f32 %v1860, 0.0
        %v1965 = vmax.f32 %v1911, 0.0
        %v1966 = vmax.f32 %v1913, 0.0
        %v1967 = vmax.f32 %v1544, 0.0
        %v1968 = vmax.f32 %v1546, 0.0
        %v1969 = vmax.f32 %v1597, 0.0
        %v1970 = vmax.f32 %v1599, 0.0
        %v1971 = vmax.f32 %v1650, 0.0
        %v1972 = vmax.f32 %v1652, 0.0
        %v1973 = vmax.f32 %v1703, 0.0
        %v1974 = vmax.f32 %v1705, 0.0
        %v1975 = vmax.f32 %v1756, 0.0
        %v1976 = vmax.f32 %v1758, 0.0
        %v1977 = vmax.f32 %v1809, 0.0
        %v1978 = vmax.f32 %v1811, 0.0
        %v1979 = vmax.f32 %v1862, 0.0
        %v1980 = vmax.f32 %v1864, 0.0
        %v1981 = vmax.f32 %v1915, 0.0
        %v1982 = vmax.f32 %v1917, 0.0
        %v1983 = vmax.f32 %v773, 0.0
        %v1984 = vmax.f32 %v775, 0.0
        %v1985 = vmax.f32 %v866, 0.0
        %v1986 = vmax.f32 %v868, 0.0
        %v1987 = vmax.f32 %v959, 0.0
        %v1988 = vmax.f32 %v961, 0.0
        %v1989 = vmax.f32 %v1052, 0.0
        %v1990 = vmax.f32 %v1054, 0.0
        %v1991 = vmax.f32 %v1145, 0.0
        %v1992 = vmax.f32 %v1147, 0.0
        %v1993 = vmax.f32 %v1238, 0.0
        %v1994 = vmax.f32 %v1240, 0.0
        %v1995 = vmax.f32 %v1331, 0.0
        %v1996 = vmax.f32 %v1333, 0.0
        %v1997 = vmax.f32 %v1424, 0.0
        %v1998 = vmax.f32 %v1426, 0.0
        %v1999 = vmax.f32 %v777, 0.0
        %v2000 = vmax.f32 %v779, 0.0
        %v2001 = vmax.f32 %v870, 0.0
        %v2002 = vmax.f32 %v872, 0.0
        %v2003 = vmax.f32 %v963, 0.0
        %v2004 = vmax.f32 %v965, 0.0
        %v2005 = vmax.f32 %v1056, 0.0
        %v2006 = vmax.f32 %v1058, 0.0
        %v2007 = vmax.f32 %v1149, 0.0
        %v2008 = vmax.f32 %v1151, 0.0
        %v2009 = vmax.f32 %v1242, 0.0
        %v2010 = vmax.f32 %v1244, 0.0
        %v2011 = vmax.f32 %v1335, 0.0
        %v2012 = vmax.f32 %v1337, 0.0
        %v2013 = vmax.f32 %v1428, 0.0
        %v2014 = vmax.f32 %v1430, 0.0
        %v2015 = vmax.f32 %v783, 0.0
        %v2016 = vmax.f32 %v785, 0.0
        %v2017 = vmax.f32 %v876, 0.0
        %v2018 = vmax.f32 %v878, 0.0
        %v2019 = vmax.f32 %v969, 0.0
        %v2020 = vmax.f32 %v971, 0.0
        %v2021 = vmax.f32 %v1062, 0.0
        %v2022 = vmax.f32 %v1064, 0.0
        %v2023 = vmax.f32 %v1155, 0.0
        %v2024 = vmax.f32 %v1157, 0.0
        %v2025 = vmax.f32 %v1248, 0.0
        %v2026 = vmax.f32 %v1250, 0.0
        %v2027 = vmax.f32 %v1341, 0.0
        %v2028 = vmax.f32 %v1343, 0.0
        %v2029 = vmax.f32 %v1434, 0.0
        %v2030 = vmax.f32 %v1436, 0.0
        %v2031 = vmax.f32 %v787, 0.0
        %v2032 = vmax.f32 %v789, 0.0
        %v2033 = vmax.f32 %v880, 0.0
        %v2034 = vmax.f32 %v882, 0.0
        %v2035 = vmax.f32 %v973, 0.0
        %v2036 = vmax.f32 %v975, 0.0
        %v2037 = vmax.f32 %v1066, 0.0
        %v2038 = vmax.f32 %v1068, 0.0
        %v2039 = vmax.f32 %v1159, 0.0
        %v2040 = vmax.f32 %v1161, 0.0
        %v2041 = vmax.f32 %v1252, 0.0
        %v2042 = vmax.f32 %v1254, 0.0
        %v2043 = vmax.f32 %v1345, 0.0
        %v2044 = vmax.f32 %v1347, 0.0
        %v2045 = vmax.f32 %v1438, 0.0
        %v2046 = vmax.f32 %v1440, 0.0
        %v2047 = vadd.f32 %v1919, %v1983
        %v2048 = vadd.f32 %v1920, %v1984
        %v2049 = vadd.f32 %v1921, %v1985
        %v2050 = vadd.f32 %v1922, %v1986
        %v2051 = vadd.f32 %v1923, %v1987
        %v2052 = vadd.f32 %v1924, %v1988
        %v2053 = vadd.f32 %v1925, %v1989
        %v2054 = vadd.f32 %v1926, %v1990
        %v2055 = vadd.f32 %v1927, %v1991
        %v2056 = vadd.f32 %v1928, %v1992
        %v2057 = vadd.f32 %v1929, %v1993
        %v2058 = vadd.f32 %v1930, %v1994
        %v2059 = vadd.f32 %v1931, %v1995
        %v2060 = vadd.f32 %v1932, %v1996
        %v2061 = vadd.f32 %v1933, %v1997
        %v2062 = vadd.f32 %v1934, %v1998
        %v2063 = vadd.f32 %v1935, %v1999
        %v2064 = vadd.f32 %v1936, %v2000
        %v2065 = vadd.f32 %v1937, %v2001
        %v2066 = vadd.f32 %v1938, %v2002
        %v2067 = vadd.f32 %v1939, %v2003
        %v2068 = vadd.f32 %v1940, %v2004
        %v2069 = vadd.f32 %v1941, %v2005
        %v2070 = vadd.f32 %v1942, %v2006
        %v2071 = vadd.f32 %v1943, %v2007
        %v2072 = vadd.f32 %v1944, %v2008
        %v2073 = vadd.f32 %v1945, %v2009
        %v2074 = vadd.f32 %v1946, %v2010
        %v2075 = vadd.f32 %v1947, %v2011
        %v2076 = vadd.f32 %v1948, %v2012
        %v2077 = vadd.f32 %v1949, %v2013
        %v2078 = vadd.f32 %v1950, %v2014
        %v2079 = vadd.f32 %v1951, %v2015
        %v2080 = vadd.f32 %v1952, %v2016
        %v2081 = vadd.f32 %v1953, %v2017
        %v2082 = vadd.f32 %v1954, %v2018
        %v2083 = vadd.f32 %v1955, %v2019
        %v2084 = vadd.f32 %v1956, %v2020
        %v2085 = vadd.f32 %v1957, %v2021
        %v2086 = vadd.f32 %v1958, %v2022
        %v2087 = vadd.f32 %v1959, %v2023
        %v2088 = vadd.f32 %v1960, %v2024
        %v2089 = vadd.f32 %v1961, %v2025
        %v2090 = vadd.f32 %v1962, %v2026
        %v2091 = vadd.f32 %v1963, %v2027
        %v2092 = vadd.f32 %v1964, %v2028
        %v2093 = vadd.f32 %v1965, %v2029
        %v2094 = vadd.f32 %v1966, %v2030
        %v2095 = vadd.f32 %v1967, %v2031
        %v2096 = vadd.f32 %v1968, %v2032
        %v2097 = vadd.f32 %v1969, %v2033
        %v2098 = vadd.f32 %v1970, %v2034
        %v2099 = vadd.f32 %v1971, %v2035
        %v2100 = vadd.f32 %v1972, %v2036
        %v2101 = vadd.f32 %v1973, %v2037
        %v2102 = vadd.f32 %v1974, %v2038
        %v2103 = vadd.f32 %v1975, %v2039
        %v2104 = vadd.f32 %v1976, %v2040
        %v2105 = vadd.f32 %v1977, %v2041
        %v2106 = vadd.f32 %v1978, %v2042
        %v2107 = vadd.f32 %v1979, %v2043
        %v2108 = vadd.f32 %v1980, %v2044
        %v2109 = vadd.f32 %v1981, %v2045
        %v2110 = vadd.f32 %v1982, %v2046
        %v2111 = vld [vmem:[%s2 + $0x10] sm:$0xf]
        %v2112 = vld [vmem:[%s2 + $0x14] sm:$0xf]
        %v2113 = vld [vmem:[%s2 + $0x18] sm:$0xf]
        %v2114 = vld [vmem:[%s2 + $0x1c] sm:$0xf]
        %v2115 = vpack.c.bf16 %v2063, %v2047
        %v2116 = vpack.c.bf16 %v2064, %v2048
        %v2117 = vpack.c.bf16 %v2065, %v2049
        %v2118 = vpack.c.bf16 %v2066, %v2050
        %v2119 = vpack.c.bf16 %v2067, %v2051
        %v2120 = vpack.c.bf16 %v2068, %v2052
        %v2121 = vpack.c.bf16 %v2069, %v2053
        %v2122 = vpack.c.bf16 %v2070, %v2054
        %v2123 = vpack.c.bf16 %v2071, %v2055
        %v2124 = vpack.c.bf16 %v2072, %v2056
        %v2125 = vpack.c.bf16 %v2073, %v2057
        %v2126 = vpack.c.bf16 %v2074, %v2058
        %v2127 = vpack.c.bf16 %v2075, %v2059
        %v2128 = vpack.c.bf16 %v2076, %v2060
        %v2129 = vpack.c.bf16 %v2077, %v2061
        %v2130 = vpack.c.bf16 %v2078, %v2062
        %v2131 = vpack.c.bf16 %v2095, %v2079
        %v2132 = vpack.c.bf16 %v2096, %v2080
        %v2133 = vpack.c.bf16 %v2097, %v2081
        %v2134 = vpack.c.bf16 %v2098, %v2082
        %v2135 = vpack.c.bf16 %v2099, %v2083
        %v2136 = vpack.c.bf16 %v2100, %v2084
        %v2137 = vpack.c.bf16 %v2101, %v2085
        %v2138 = vpack.c.bf16 %v2102, %v2086
        %v2139 = vpack.c.bf16 %v2103, %v2087
        %v2140 = vpack.c.bf16 %v2104, %v2088
        %v2141 = vpack.c.bf16 %v2105, %v2089
        %v2142 = vpack.c.bf16 %v2106, %v2090
        %v2143 = vpack.c.bf16 %v2107, %v2091
        %v2144 = vpack.c.bf16 %v2108, %v2092
        %v2145 = vpack.c.bf16 %v2109, %v2093
        %v2146 = vpack.c.bf16 %v2110, %v2094
        %2148 = vset.pattern.permute.xlu0 0
        %2149 = vperm.xlu0 %2148, %v310
        %v2150 = vpop.permute.xlu0 %2149
        %2153 = vset.pattern.permute.xlu0 0
        %2154 = vperm.xlu0 %2153, %v311
        %v2155 = vpop.permute.xlu0 %2154
        %2158 = vset.pattern.permute.xlu0 0
        %2159 = vperm.xlu0 %2158, %v312
        %v2160 = vpop.permute.xlu0 %2159
        %2163 = vset.pattern.permute.xlu0 0
        %2164 = vperm.xlu0 %2163, %v313
        %v2165 = vpop.permute.xlu0 %2164
        %v2171 = vunpack.c.l.b16 %v2111
        %v2172 = vunpack.c.l.b16 %v2112
        %v2173 = vunpack.c.l.b16 %v2113
        %v2174 = vunpack.c.l.b16 %v2114
        %v2175 = vpack.c.b16 %v2172, %v2171
        %v2176 = vpack.c.b16 %v2174, %v2173
        %v2178 = vsel %vm1488, %v2175, 0
        %v2181 = vsel %vm1488, %v2176, 0
        %2183 = vmatprep.subr.bf16.mxu0 %v2116
        %2184 = vmatpush1.bf16.msra.mxu0 %v2115
        %2185 = vmatprep.subr.bf16.mxu0 %v2132
        %2186 = vmatpush1.bf16.msra.mxu0 %v2131
        %2187 = vmatprep.subr.bf16.mxu0 0
        %2188 = vmatpush1.bf16.msra.mxu0 0
        %2189 = vmatprep.subr.bf16.mxu0 0
        %2190 = vmatpush1.bf16.msra.mxu0 0
        %2191 = vmatprep.subr.bf16.mxu0 0
        %2192 = vmatpush1.bf16.msra.mxu0 0
        %2193 = vmatprep.subr.bf16.mxu0 0
        %2194 = vmatpush1.bf16.msra.mxu0 0
        %2195 = vmatprep.subr.bf16.mxu0 0
        %2196 = vmatpush1.bf16.msra.mxu0 0
        %2197 = vmatprep.subr.bf16.mxu0 0
        %2198 = vmatpush1.bf16.msra.mxu0 0
        %2199 = vmatprep.subr.bf16.mxu0 0
        %2200 = vmatpush1.bf16.msra.mxu0 0
        %2201 = vmatprep.subr.bf16.mxu0 0
        %2202 = vmatpush1.bf16.msra.mxu0 0
        %2203 = vmatprep.subr.bf16.mxu0 0
        %2204 = vmatpush1.bf16.msra.mxu0 0
        %2205 = vmatprep.subr.bf16.mxu0 0
        %2206 = vmatpush1.bf16.msra.mxu0 0
        %2207 = vmatprep.subr.bf16.mxu0 0
        %2208 = vmatpush1.bf16.msra.mxu0 0
        %2209 = vmatprep.subr.bf16.mxu0 0
        %2210 = vmatpush1.bf16.msra.mxu0 0
        %2211 = vmatprep.subr.bf16.mxu0 0
        %2212 = vmatpush1.bf16.msra.mxu0 0
        %2213 = vmatprep.subr.bf16.mxu0 0
        %2214 = vmatpush1.bf16.msra.mxu0 0
        %2215 = vmatprep.mubr.bf16.mxu0 0
        %2216 = vmatmul.mubr.bf16.gmra.mrb[0].mxu0 %v2178
        %v2217 = vpop.f32.mrb[0].mxu0
        %v2218 = vadd.f32 %v2150, %v2217
        %v2219 = vpop.f32.mrb[0].mxu0
        %v2220 = vadd.f32 %v2150, %v2219
        %v2221 = vpop.f32.mrb[0].mxu0
        %v2222 = vadd.f32 %v2155, %v2221
        %v2223 = vpop.f32.mrb[0].mxu0
        %v2224 = vadd.f32 %v2155, %v2223
        %2225 = vmatprep.mubr.bf16.mxu0 0
        %2226 = vmatmul.mubr.bf16.gmra.mrb[0].mxu0 %v2181
        %v2227 = vpop.f32.mrb[0].mxu0
        %v2228 = vadd.f32 %v2160, %v2227
        %v2229 = vpop.f32.mrb[0].mxu0
        %v2230 = vadd.f32 %v2160, %v2229
        %v2231 = vpop.f32.mrb[0].mxu0
        %v2232 = vadd.f32 %v2165, %v2231
        %v2233 = vpop.f32.mrb[0].mxu0
        %v2234 = vadd.f32 %v2165, %v2233
        %2235 = vdwg.mxu0
        %2236 = vmatprep.subr.bf16.mxu0 %v2118
        %2237 = vmatpush1.bf16.msra.mxu0 %v2117
        %2238 = vmatprep.subr.bf16.mxu0 %v2134
        %2239 = vmatpush1.bf16.msra.mxu0 %v2133
        %2240 = vmatprep.subr.bf16.mxu0 0
        %2241 = vmatpush1.bf16.msra.mxu0 0
        %2242 = vmatprep.subr.bf16.mxu0 0
        %2243 = vmatpush1.bf16.msra.mxu0 0
        %2244 = vmatprep.subr.bf16.mxu0 0
        %2245 = vmatpush1.bf16.msra.mxu0 0
        %2246 = vmatprep.subr.bf16.mxu0 0
        %2247 = vmatpush1.bf16.msra.mxu0 0
        %2248 = vmatprep.subr.bf16.mxu0 0
        %2249 = vmatpush1.bf16.msra.mxu0 0
        %2250 = vmatprep.subr.bf16.mxu0 0
        %2251 = vmatpush1.bf16.msra.mxu0 0
        %2252 = vmatprep.subr.bf16.mxu0 0
        %2253 = vmatpush1.bf16.msra.mxu0 0
        %2254 = vmatprep.subr.bf16.mxu0 0
        %2255 = vmatpush1.bf16.msra.mxu0 0
        %2256 = vmatprep.subr.bf16.mxu0 0
        %2257 = vmatpush1.bf16.msra.mxu0 0
        %2258 = vmatprep.subr.bf16.mxu0 0
        %2259 = vmatpush1.bf16.msra.mxu0 0
        %2260 = vmatprep.subr.bf16.mxu0 0
        %2261 = vmatpush1.bf16.msra.mxu0 0
        %2262 = vmatprep.subr.bf16.mxu0 0
        %2263 = vmatpush1.bf16.msra.mxu0 0
        %2264 = vmatprep.subr.bf16.mxu0 0
        %2265 = vmatpush1.bf16.msra.mxu0 0
        %2266 = vmatprep.subr.bf16.mxu0 0
        %2267 = vmatpush1.bf16.msra.mxu0 0
        %2268 = vmatprep.mubr.bf16.mxu0 0
        %2269 = vmatmul.mubr.bf16.gmra.mrb[0].mxu0 %v2178
        %v2270 = vpop.f32.mrb[0].mxu0
        %v2271 = vadd.f32 %v2150, %v2270
        %v2272 = vpop.f32.mrb[0].mxu0
        %v2273 = vadd.f32 %v2150, %v2272
        %v2274 = vpop.f32.mrb[0].mxu0
        %v2275 = vadd.f32 %v2155, %v2274
        %v2276 = vpop.f32.mrb[0].mxu0
        %v2277 = vadd.f32 %v2155, %v2276
        %2278 = vmatprep.mubr.bf16.mxu0 0
        %2279 = vmatmul.mubr.bf16.gmra.mrb[0].mxu0 %v2181
        %v2280 = vpop.f32.mrb[0].mxu0
        %v2281 = vadd.f32 %v2160, %v2280
        %v2282 = vpop.f32.mrb[0].mxu0
        %v2283 = vadd.f32 %v2160, %v2282
        %v2284 = vpop.f32.mrb[0].mxu0
        %v2285 = vadd.f32 %v2165, %v2284
        %v2286 = vpop.f32.mrb[0].mxu0
        %v2287 = vadd.f32 %v2165, %v2286
        %2288 = vdwg.mxu0
        %2289 = vmatprep.subr.bf16.mxu0 %v2120
        %2290 = vmatpush1.bf16.msra.mxu0 %v2119
        %2291 = vmatprep.subr.bf16.mxu0 %v2136
        %2292 = vmatpush1.bf16.msra.mxu0 %v2135
        %2293 = vmatprep.subr.bf16.mxu0 0
        %2294 = vmatpush1.bf16.msra.mxu0 0
        %2295 = vmatprep.subr.bf16.mxu0 0
        %2296 = vmatpush1.bf16.msra.mxu0 0
        %2297 = vmatprep.subr.bf16.mxu0 0
        %2298 = vmatpush1.bf16.msra.mxu0 0
        %2299 = vmatprep.subr.bf16.mxu0 0
        %2300 = vmatpush1.bf16.msra.mxu0 0
        %2301 = vmatprep.subr.bf16.mxu0 0
        %2302 = vmatpush1.bf16.msra.mxu0 0
        %2303 = vmatprep.subr.bf16.mxu0 0
        %2304 = vmatpush1.bf16.msra.mxu0 0
        %2305 = vmatprep.subr.bf16.mxu0 0
        %2306 = vmatpush1.bf16.msra.mxu0 0
        %2307 = vmatprep.subr.bf16.mxu0 0
        %2308 = vmatpush1.bf16.msra.mxu0 0
        %2309 = vmatprep.subr.bf16.mxu0 0
        %2310 = vmatpush1.bf16.msra.mxu0 0
        %2311 = vmatprep.subr.bf16.mxu0 0
        %2312 = vmatpush1.bf16.msra.mxu0 0
        %2313 = vmatprep.subr.bf16.mxu0 0
        %2314 = vmatpush1.bf16.msra.mxu0 0
        %2315 = vmatprep.subr.bf16.mxu0 0
        %2316 = vmatpush1.bf16.msra.mxu0 0
        %2317 = vmatprep.subr.bf16.mxu0 0
        %2318 = vmatpush1.bf16.msra.mxu0 0
        %2319 = vmatprep.subr.bf16.mxu0 0
        %2320 = vmatpush1.bf16.msra.mxu0 0
        %2321 = vmatprep.mubr.bf16.mxu0 0
        %2322 = vmatmul.mubr.bf16.gmra.mrb[0].mxu0 %v2178
        %v2323 = vpop.f32.mrb[0].mxu0
        %v2324 = vadd.f32 %v2150, %v2323
        %v2325 = vpop.f32.mrb[0].mxu0
        %v2326 = vadd.f32 %v2150, %v2325
        %v2327 = vpop.f32.mrb[0].mxu0
        %v2328 = vadd.f32 %v2155, %v2327
        %v2329 = vpop.f32.mrb[0].mxu0
        %v2330 = vadd.f32 %v2155, %v2329
        %2331 = vmatprep.mubr.bf16.mxu0 0
        %2332 = vmatmul.mubr.bf16.gmra.mrb[0].mxu0 %v2181
        %v2333 = vpop.f32.mrb[0].mxu0
        %v2334 = vadd.f32 %v2160, %v2333
        %v2335 = vpop.f32.mrb[0].mxu0
        %v2336 = vadd.f32 %v2160, %v2335
        %v2337 = vpop.f32.mrb[0].mxu0
        %v2338 = vadd.f32 %v2165, %v2337
        %v2339 = vpop.f32.mrb[0].mxu0
        %v2340 = vadd.f32 %v2165, %v2339
        %2341 = vdwg.mxu0
        %2342 = vmatprep.subr.bf16.mxu0 %v2122
        %2343 = vmatpush1.bf16.msra.mxu0 %v2121
        %2344 = vmatprep.subr.bf16.mxu0 %v2138
        %2345 = vmatpush1.bf16.msra.mxu0 %v2137
        %2346 = vmatprep.subr.bf16.mxu0 0
        %2347 = vmatpush1.bf16.msra.mxu0 0
        %2348 = vmatprep.subr.bf16.mxu0 0
        %2349 = vmatpush1.bf16.msra.mxu0 0
        %2350 = vmatprep.subr.bf16.mxu0 0
        %2351 = vmatpush1.bf16.msra.mxu0 0
        %2352 = vmatprep.subr.bf16.mxu0 0
        %2353 = vmatpush1.bf16.msra.mxu0 0
        %2354 = vmatprep.subr.bf16.mxu0 0
        %2355 = vmatpush1.bf16.msra.mxu0 0
        %2356 = vmatprep.subr.bf16.mxu0 0
        %2357 = vmatpush1.bf16.msra.mxu0 0
        %2358 = vmatprep.subr.bf16.mxu0 0
        %2359 = vmatpush1.bf16.msra.mxu0 0
        %2360 = vmatprep.subr.bf16.mxu0 0
        %2361 = vmatpush1.bf16.msra.mxu0 0
        %2362 = vmatprep.subr.bf16.mxu0 0
        %2363 = vmatpush1.bf16.msra.mxu0 0
        %2364 = vmatprep.subr.bf16.mxu0 0
        %2365 = vmatpush1.bf16.msra.mxu0 0
        %2366 = vmatprep.subr.bf16.mxu0 0
        %2367 = vmatpush1.bf16.msra.mxu0 0
        %2368 = vmatprep.subr.bf16.mxu0 0
        %2369 = vmatpush1.bf16.msra.mxu0 0
        %2370 = vmatprep.subr.bf16.mxu0 0
        %2371 = vmatpush1.bf16.msra.mxu0 0
        %2372 = vmatprep.subr.bf16.mxu0 0
        %2373 = vmatpush1.bf16.msra.mxu0 0
        %2374 = vmatprep.mubr.bf16.mxu0 0
        %2375 = vmatmul.mubr.bf16.gmra.mrb[0].mxu0 %v2178
        %v2376 = vpop.f32.mrb[0].mxu0
        %v2377 = vadd.f32 %v2150, %v2376
        %v2378 = vpop.f32.mrb[0].mxu0
        %v2379 = vadd.f32 %v2150, %v2378
        %v2380 = vpop.f32.mrb[0].mxu0
        %v2381 = vadd.f32 %v2155, %v2380
        %v2382 = vpop.f32.mrb[0].mxu0
        %v2383 = vadd.f32 %v2155, %v2382
        %2384 = vmatprep.mubr.bf16.mxu0 0
        %2385 = vmatmul.mubr.bf16.gmra.mrb[0].mxu0 %v2181
        %v2386 = vpop.f32.mrb[0].mxu0
        %v2387 = vadd.f32 %v2160, %v2386
        %v2388 = vpop.f32.mrb[0].mxu0
        %v2389 = vadd.f32 %v2160, %v2388
        %v2390 = vpop.f32.mrb[0].mxu0
        %v2391 = vadd.f32 %v2165, %v2390
        %v2392 = vpop.f32.mrb[0].mxu0
        %v2393 = vadd.f32 %v2165, %v2392
        %2394 = vdwg.mxu0
        %2395 = vmatprep.subr.bf16.mxu0 %v2124
        %2396 = vmatpush1.bf16.msra.mxu0 %v2123
        %2397 = vmatprep.subr.bf16.mxu0 %v2140
        %2398 = vmatpush1.bf16.msra.mxu0 %v2139
        %2399 = vmatprep.subr.bf16.mxu0 0
        %2400 = vmatpush1.bf16.msra.mxu0 0
        %2401 = vmatprep.subr.bf16.mxu0 0
        %2402 = vmatpush1.bf16.msra.mxu0 0
        %2403 = vmatprep.subr.bf16.mxu0 0
        %2404 = vmatpush1.bf16.msra.mxu0 0
        %2405 = vmatprep.subr.bf16.mxu0 0
        %2406 = vmatpush1.bf16.msra.mxu0 0
        %2407 = vmatprep.subr.bf16.mxu0 0
        %2408 = vmatpush1.bf16.msra.mxu0 0
        %2409 = vmatprep.subr.bf16.mxu0 0
        %2410 = vmatpush1.bf16.msra.mxu0 0
        %2411 = vmatprep.subr.bf16.mxu0 0
        %2412 = vmatpush1.bf16.msra.mxu0 0
        %2413 = vmatprep.subr.bf16.mxu0 0
        %2414 = vmatpush1.bf16.msra.mxu0 0
        %2415 = vmatprep.subr.bf16.mxu0 0
        %2416 = vmatpush1.bf16.msra.mxu0 0
        %2417 = vmatprep.subr.bf16.mxu0 0
        %2418 = vmatpush1.bf16.msra.mxu0 0
        %2419 = vmatprep.subr.bf16.mxu0 0
        %2420 = vmatpush1.bf16.msra.mxu0 0
        %2421 = vmatprep.subr.bf16.mxu0 0
        %2422 = vmatpush1.bf16.msra.mxu0 0
        %2423 = vmatprep.subr.bf16.mxu0 0
        %2424 = vmatpush1.bf16.msra.mxu0 0
        %2425 = vmatprep.subr.bf16.mxu0 0
        %2426 = vmatpush1.bf16.msra.mxu0 0
        %2427 = vmatprep.mubr.bf16.mxu0 0
        %2428 = vmatmul.mubr.bf16.gmra.mrb[0].mxu0 %v2178
        %v2429 = vpop.f32.mrb[0].mxu0
        %v2430 = vadd.f32 %v2150, %v2429
        %v2431 = vpop.f32.mrb[0].mxu0
        %v2432 = vadd.f32 %v2150, %v2431
        %v2433 = vpop.f32.mrb[0].mxu0
        %v2434 = vadd.f32 %v2155, %v2433
        %v2435 = vpop.f32.mrb[0].mxu0
        %v2436 = vadd.f32 %v2155, %v2435
        %2437 = vmatprep.mubr.bf16.mxu0 0
        %2438 = vmatmul.mubr.bf16.gmra.mrb[0].mxu0 %v2181
        %v2439 = vpop.f32.mrb[0].mxu0
        %v2440 = vadd.f32 %v2160, %v2439
        %v2441 = vpop.f32.mrb[0].mxu0
        %v2442 = vadd.f32 %v2160, %v2441
        %v2443 = vpop.f32.mrb[0].mxu0
        %v2444 = vadd.f32 %v2165, %v2443
        %v2445 = vpop.f32.mrb[0].mxu0
        %v2446 = vadd.f32 %v2165, %v2445
        %2447 = vdwg.mxu0
        %2448 = vmatprep.subr.bf16.mxu0 %v2126
        %2449 = vmatpush1.bf16.msra.mxu0 %v2125
        %2450 = vmatprep.subr.bf16.mxu0 %v2142
        %2451 = vmatpush1.bf16.msra.mxu0 %v2141
        %2452 = vmatprep.subr.bf16.mxu0 0
        %2453 = vmatpush1.bf16.msra.mxu0 0
        %2454 = vmatprep.subr.bf16.mxu0 0
        %2455 = vmatpush1.bf16.msra.mxu0 0
        %2456 = vmatprep.subr.bf16.mxu0 0
        %2457 = vmatpush1.bf16.msra.mxu0 0
        %2458 = vmatprep.subr.bf16.mxu0 0
        %2459 = vmatpush1.bf16.msra.mxu0 0
        %2460 = vmatprep.subr.bf16.mxu0 0
        %2461 = vmatpush1.bf16.msra.mxu0 0
        %2462 = vmatprep.subr.bf16.mxu0 0
        %2463 = vmatpush1.bf16.msra.mxu0 0
        %2464 = vmatprep.subr.bf16.mxu0 0
        %2465 = vmatpush1.bf16.msra.mxu0 0
        %2466 = vmatprep.subr.bf16.mxu0 0
        %2467 = vmatpush1.bf16.msra.mxu0 0
        %2468 = vmatprep.subr.bf16.mxu0 0
        %2469 = vmatpush1.bf16.msra.mxu0 0
        %2470 = vmatprep.subr.bf16.mxu0 0
        %2471 = vmatpush1.bf16.msra.mxu0 0
        %2472 = vmatprep.subr.bf16.mxu0 0
        %2473 = vmatpush1.bf16.msra.mxu0 0
        %2474 = vmatprep.subr.bf16.mxu0 0
        %2475 = vmatpush1.bf16.msra.mxu0 0
        %2476 = vmatprep.subr.bf16.mxu0 0
        %2477 = vmatpush1.bf16.msra.mxu0 0
        %2478 = vmatprep.subr.bf16.mxu0 0
        %2479 = vmatpush1.bf16.msra.mxu0 0
        %2480 = vmatprep.mubr.bf16.mxu0 0
        %2481 = vmatmul.mubr.bf16.gmra.mrb[0].mxu0 %v2178
        %v2482 = vpop.f32.mrb[0].mxu0
        %v2483 = vadd.f32 %v2150, %v2482
        %v2484 = vpop.f32.mrb[0].mxu0
        %v2485 = vadd.f32 %v2150, %v2484
        %v2486 = vpop.f32.mrb[0].mxu0
        %v2487 = vadd.f32 %v2155, %v2486
        %v2488 = vpop.f32.mrb[0].mxu0
        %v2489 = vadd.f32 %v2155, %v2488
        %2490 = vmatprep.mubr.bf16.mxu0 0
        %2491 = vmatmul.mubr.bf16.gmra.mrb[0].mxu0 %v2181
        %v2492 = vpop.f32.mrb[0].mxu0
        %v2493 = vadd.f32 %v2160, %v2492
        %v2494 = vpop.f32.mrb[0].mxu0
        %v2495 = vadd.f32 %v2160, %v2494
        %v2496 = vpop.f32.mrb[0].mxu0
        %v2497 = vadd.f32 %v2165, %v2496
        %v2498 = vpop.f32.mrb[0].mxu0
        %v2499 = vadd.f32 %v2165, %v2498
        %2500 = vdwg.mxu0
        %2501 = vmatprep.subr.bf16.mxu0 %v2128
        %2502 = vmatpush1.bf16.msra.mxu0 %v2127
        %2503 = vmatprep.subr.bf16.mxu0 %v2144
        %2504 = vmatpush1.bf16.msra.mxu0 %v2143
        %2505 = vmatprep.subr.bf16.mxu0 0
        %2506 = vmatpush1.bf16.msra.mxu0 0
        %2507 = vmatprep.subr.bf16.mxu0 0
        %2508 = vmatpush1.bf16.msra.mxu0 0
        %2509 = vmatprep.subr.bf16.mxu0 0
        %2510 = vmatpush1.bf16.msra.mxu0 0
        %2511 = vmatprep.subr.bf16.mxu0 0
        %2512 = vmatpush1.bf16.msra.mxu0 0
        %2513 = vmatprep.subr.bf16.mxu0 0
        %2514 = vmatpush1.bf16.msra.mxu0 0
        %2515 = vmatprep.subr.bf16.mxu0 0
        %2516 = vmatpush1.bf16.msra.mxu0 0
        %2517 = vmatprep.subr.bf16.mxu0 0
        %2518 = vmatpush1.bf16.msra.mxu0 0
        %2519 = vmatprep.subr.bf16.mxu0 0
        %2520 = vmatpush1.bf16.msra.mxu0 0
        %2521 = vmatprep.subr.bf16.mxu0 0
        %2522 = vmatpush1.bf16.msra.mxu0 0
        %2523 = vmatprep.subr.bf16.mxu0 0
        %2524 = vmatpush1.bf16.msra.mxu0 0
        %2525 = vmatprep.subr.bf16.mxu0 0
        %2526 = vmatpush1.bf16.msra.mxu0 0
        %2527 = vmatprep.subr.bf16.mxu0 0
        %2528 = vmatpush1.bf16.msra.mxu0 0
        %2529 = vmatprep.subr.bf16.mxu0 0
        %2530 = vmatpush1.bf16.msra.mxu0 0
        %2531 = vmatprep.subr.bf16.mxu0 0
        %2532 = vmatpush1.bf16.msra.mxu0 0
        %2533 = vmatprep.mubr.bf16.mxu0 0
        %2534 = vmatmul.mubr.bf16.gmra.mrb[0].mxu0 %v2178
        %v2535 = vpop.f32.mrb[0].mxu0
        %v2536 = vadd.f32 %v2150, %v2535
        %v2537 = vpop.f32.mrb[0].mxu0
        %v2538 = vadd.f32 %v2150, %v2537
        %v2539 = vpop.f32.mrb[0].mxu0
        %v2540 = vadd.f32 %v2155, %v2539
        %v2541 = vpop.f32.mrb[0].mxu0
        %v2542 = vadd.f32 %v2155, %v2541
        %2543 = vmatprep.mubr.bf16.mxu0 0
        %2544 = vmatmul.mubr.bf16.gmra.mrb[0].mxu0 %v2181
        %v2545 = vpop.f32.mrb[0].mxu0
        %v2546 = vadd.f32 %v2160, %v2545
        %v2547 = vpop.f32.mrb[0].mxu0
        %v2548 = vadd.f32 %v2160, %v2547
        %v2549 = vpop.f32.mrb[0].mxu0
        %v2550 = vadd.f32 %v2165, %v2549
        %v2551 = vpop.f32.mrb[0].mxu0
        %v2552 = vadd.f32 %v2165, %v2551
        %2553 = vdwg.mxu0
        %2554 = vmatprep.subr.bf16.mxu0 %v2130
        %2555 = vmatpush1.bf16.msra.mxu0 %v2129
        %2556 = vmatprep.subr.bf16.mxu0 %v2146
        %2557 = vmatpush1.bf16.msra.mxu0 %v2145
        %2558 = vmatprep.subr.bf16.mxu0 0
        %2559 = vmatpush1.bf16.msra.mxu0 0
        %2560 = vmatprep.subr.bf16.mxu0 0
        %2561 = vmatpush1.bf16.msra.mxu0 0
        %2562 = vmatprep.subr.bf16.mxu0 0
        %2563 = vmatpush1.bf16.msra.mxu0 0
        %2564 = vmatprep.subr.bf16.mxu0 0
        %2565 = vmatpush1.bf16.msra.mxu0 0
        %2566 = vmatprep.subr.bf16.mxu0 0
        %2567 = vmatpush1.bf16.msra.mxu0 0
        %2568 = vmatprep.subr.bf16.mxu0 0
        %2569 = vmatpush1.bf16.msra.mxu0 0
        %2570 = vmatprep.subr.bf16.mxu0 0
        %2571 = vmatpush1.bf16.msra.mxu0 0
        %2572 = vmatprep.subr.bf16.mxu0 0
        %2573 = vmatpush1.bf16.msra.mxu0 0
        %2574 = vmatprep.subr.bf16.mxu0 0
        %2575 = vmatpush1.bf16.msra.mxu0 0
        %2576 = vmatprep.subr.bf16.mxu0 0
        %2577 = vmatpush1.bf16.msra.mxu0 0
        %2578 = vmatprep.subr.bf16.mxu0 0
        %2579 = vmatpush1.bf16.msra.mxu0 0
        %2580 = vmatprep.subr.bf16.mxu0 0
        %2581 = vmatpush1.bf16.msra.mxu0 0
        %2582 = vmatprep.subr.bf16.mxu0 0
        %2583 = vmatpush1.bf16.msra.mxu0 0
        %2584 = vmatprep.subr.bf16.mxu0 0
        %2585 = vmatpush1.bf16.msra.mxu0 0
        %2586 = vmatprep.mubr.bf16.mxu0 0
        %2587 = vmatmul.mubr.bf16.gmra.mrb[0].mxu0 %v2178
        %v2588 = vpop.f32.mrb[0].mxu0
        %v2589 = vadd.f32 %v2150, %v2588
        %v2590 = vpop.f32.mrb[0].mxu0
        %v2591 = vadd.f32 %v2150, %v2590
        %v2592 = vpop.f32.mrb[0].mxu0
        %v2593 = vadd.f32 %v2155, %v2592
        %v2594 = vpop.f32.mrb[0].mxu0
        %v2595 = vadd.f32 %v2155, %v2594
        %2596 = vmatprep.mubr.bf16.mxu0 0
        %2597 = vmatmul.mubr.bf16.gmra.mrb[0].mxu0 %v2181
        %v2598 = vpop.f32.mrb[0].mxu0
        %v2599 = vadd.f32 %v2160, %v2598
        %v2600 = vpop.f32.mrb[0].mxu0
        %v2601 = vadd.f32 %v2160, %v2600
        %v2602 = vpop.f32.mrb[0].mxu0
        %v2603 = vadd.f32 %v2165, %v2602
        %v2604 = vpop.f32.mrb[0].mxu0
        %v2605 = vadd.f32 %v2165, %v2604
        %2606 = vdwg.mxu0
        %v2607 = vmax.f32 %v2218, 0.0
        %v2608 = vmax.f32 %v2220, 0.0
        %v2609 = vmax.f32 %v2271, 0.0
        %v2610 = vmax.f32 %v2273, 0.0
        %v2611 = vmax.f32 %v2324, 0.0
        %v2612 = vmax.f32 %v2326, 0.0
        %v2613 = vmax.f32 %v2377, 0.0
        %v2614 = vmax.f32 %v2379, 0.0
        %v2615 = vmax.f32 %v2430, 0.0
        %v2616 = vmax.f32 %v2432, 0.0
        %v2617 = vmax.f32 %v2483, 0.0
        %v2618 = vmax.f32 %v2485, 0.0
        %v2619 = vmax.f32 %v2536, 0.0
        %v2620 = vmax.f32 %v2538, 0.0
        %v2621 = vmax.f32 %v2589, 0.0
        %v2622 = vmax.f32 %v2591, 0.0
        %v2623 = vmax.f32 %v2222, 0.0
        %v2624 = vmax.f32 %v2224, 0.0
        %v2625 = vmax.f32 %v2275, 0.0
        %v2626 = vmax.f32 %v2277, 0.0
        %v2627 = vmax.f32 %v2328, 0.0
        %v2628 = vmax.f32 %v2330, 0.0
        %v2629 = vmax.f32 %v2381, 0.0
        %v2630 = vmax.f32 %v2383, 0.0
        %v2631 = vmax.f32 %v2434, 0.0
        %v2632 = vmax.f32 %v2436, 0.0
        %v2633 = vmax.f32 %v2487, 0.0
        %v2634 = vmax.f32 %v2489, 0.0
        %v2635 = vmax.f32 %v2540, 0.0
        %v2636 = vmax.f32 %v2542, 0.0
        %v2637 = vmax.f32 %v2593, 0.0
        %v2638 = vmax.f32 %v2595, 0.0
        %v2639 = vmax.f32 %v2228, 0.0
        %v2640 = vmax.f32 %v2230, 0.0
        %v2641 = vmax.f32 %v2281, 0.0
        %v2642 = vmax.f32 %v2283, 0.0
        %v2643 = vmax.f32 %v2334, 0.0
        %v2644 = vmax.f32 %v2336, 0.0
        %v2645 = vmax.f32 %v2387, 0.0
        %v2646 = vmax.f32 %v2389, 0.0
        %v2647 = vmax.f32 %v2440, 0.0
        %v2648 = vmax.f32 %v2442, 0.0
        %v2649 = vmax.f32 %v2493, 0.0
        %v2650 = vmax.f32 %v2495, 0.0
        %v2651 = vmax.f32 %v2546, 0.0
        %v2652 = vmax.f32 %v2548, 0.0
        %v2653 = vmax.f32 %v2599, 0.0
        %v2654 = vmax.f32 %v2601, 0.0
        %v2655 = vmax.f32 %v2232, 0.0
        %v2656 = vmax.f32 %v2234, 0.0
        %v2657 = vmax.f32 %v2285, 0.0
        %v2658 = vmax.f32 %v2287, 0.0
        %v2659 = vmax.f32 %v2338, 0.0
        %v2660 = vmax.f32 %v2340, 0.0
        %v2661 = vmax.f32 %v2391, 0.0
        %v2662 = vmax.f32 %v2393, 0.0
        %v2663 = vmax.f32 %v2444, 0.0
        %v2664 = vmax.f32 %v2446, 0.0
        %v2665 = vmax.f32 %v2497, 0.0
        %v2666 = vmax.f32 %v2499, 0.0
        %v2667 = vmax.f32 %v2550, 0.0
        %v2668 = vmax.f32 %v2552, 0.0
        %v2669 = vmax.f32 %v2603, 0.0
        %v2670 = vmax.f32 %v2605, 0.0
        %v2671 = vld [vmem:[%s2 + $0x20] sm:$0xf]
        %v2672 = vld [vmem:[%s2 + $0x24] sm:$0xf]
        %v2673 = vpack.c.bf16 %v2623, %v2607
        %v2674 = vpack.c.bf16 %v2624, %v2608
        %v2675 = vpack.c.bf16 %v2625, %v2609
        %v2676 = vpack.c.bf16 %v2626, %v2610
        %v2677 = vpack.c.bf16 %v2627, %v2611
        %v2678 = vpack.c.bf16 %v2628, %v2612
        %v2679 = vpack.c.bf16 %v2629, %v2613
        %v2680 = vpack.c.bf16 %v2630, %v2614
        %v2681 = vpack.c.bf16 %v2631, %v2615
        %v2682 = vpack.c.bf16 %v2632, %v2616
        %v2683 = vpack.c.bf16 %v2633, %v2617
        %v2684 = vpack.c.bf16 %v2634, %v2618
        %v2685 = vpack.c.bf16 %v2635, %v2619
        %v2686 = vpack.c.bf16 %v2636, %v2620
        %v2687 = vpack.c.bf16 %v2637, %v2621
        %v2688 = vpack.c.bf16 %v2638, %v2622
        %v2689 = vpack.c.bf16 %v2655, %v2639
        %v2690 = vpack.c.bf16 %v2656, %v2640
        %v2691 = vpack.c.bf16 %v2657, %v2641
        %v2692 = vpack.c.bf16 %v2658, %v2642
        %v2693 = vpack.c.bf16 %v2659, %v2643
        %v2694 = vpack.c.bf16 %v2660, %v2644
        %v2695 = vpack.c.bf16 %v2661, %v2645
        %v2696 = vpack.c.bf16 %v2662, %v2646
        %v2697 = vpack.c.bf16 %v2663, %v2647
        %v2698 = vpack.c.bf16 %v2664, %v2648
        %v2699 = vpack.c.bf16 %v2665, %v2649
        %v2700 = vpack.c.bf16 %v2666, %v2650
        %v2701 = vpack.c.bf16 %v2667, %v2651
        %v2702 = vpack.c.bf16 %v2668, %v2652
        %v2703 = vpack.c.bf16 %v2669, %v2653
        %v2704 = vpack.c.bf16 %v2670, %v2654
        %2706 = vset.pattern.permute.xlu0 0
        %2707 = vperm.xlu0 %2706, %v314
        %v2708 = vpop.permute.xlu0 %2707
        %2711 = vset.pattern.permute.xlu0 0
        %2712 = vperm.xlu0 %2711, %v315
        %v2713 = vpop.permute.xlu0 %2712
        %v2717 = vunpack.c.l.b16 %v2671
        %v2718 = vunpack.c.l.b16 %v2672
        %v2719 = vpack.c.b16 %v2718, %v2717
        %v2721 = vsel %vm1488, %v2719, 0
        %2723 = vmatprep.subr.bf16.mxu0 %v2674
        %2724 = vmatpush1.bf16.msra.mxu0 %v2673
        %2725 = vmatprep.subr.bf16.mxu0 %v2690
        %2726 = vmatpush1.bf16.msra.mxu0 %v2689
        %2727 = vmatprep.subr.bf16.mxu0 0
        %2728 = vmatpush1.bf16.msra.mxu0 0
        %2729 = vmatprep.subr.bf16.mxu0 0
        %2730 = vmatpush1.bf16.msra.mxu0 0
        %2731 = vmatprep.subr.bf16.mxu0 0
        %2732 = vmatpush1.bf16.msra.mxu0 0
        %2733 = vmatprep.subr.bf16.mxu0 0
        %2734 = vmatpush1.bf16.msra.mxu0 0
        %2735 = vmatprep.subr.bf16.mxu0 0
        %2736 = vmatpush1.bf16.msra.mxu0 0
        %2737 = vmatprep.subr.bf16.mxu0 0
        %2738 = vmatpush1.bf16.msra.mxu0 0
        %2739 = vmatprep.subr.bf16.mxu0 0
        %2740 = vmatpush1.bf16.msra.mxu0 0
        %2741 = vmatprep.subr.bf16.mxu0 0
        %2742 = vmatpush1.bf16.msra.mxu0 0
        %2743 = vmatprep.subr.bf16.mxu0 0
        %2744 = vmatpush1.bf16.msra.mxu0 0
        %2745 = vmatprep.subr.bf16.mxu0 0
        %2746 = vmatpush1.bf16.msra.mxu0 0
        %2747 = vmatprep.subr.bf16.mxu0 0
        %2748 = vmatpush1.bf16.msra.mxu0 0
        %2749 = vmatprep.subr.bf16.mxu0 0
        %2750 = vmatpush1.bf16.msra.mxu0 0
        %2751 = vmatprep.subr.bf16.mxu0 0
        %2752 = vmatpush1.bf16.msra.mxu0 0
        %2753 = vmatprep.subr.bf16.mxu0 0
        %2754 = vmatpush1.bf16.msra.mxu0 0
        %2755 = vmatprep.mubr.bf16.mxu0 0
        %2756 = vmatmul.mubr.bf16.gmra.mrb[0].mxu0 %v2721
        %v2757 = vpop.f32.mrb[0].mxu0
        %v2758 = vadd.f32 %v2708, %v2757
        %v2759 = vpop.f32.mrb[0].mxu0
        %v2760 = vadd.f32 %v2708, %v2759
        %v2761 = vpop.f32.mrb[0].mxu0
        %v2762 = vadd.f32 %v2713, %v2761
        %v2763 = vpop.f32.mrb[0].mxu0
        %v2764 = vadd.f32 %v2713, %v2763
        %2765 = vdwg.mxu0
        %2766 = vmatprep.subr.bf16.mxu0 %v2676
        %2767 = vmatpush1.bf16.msra.mxu0 %v2675
        %2768 = vmatprep.subr.bf16.mxu0 %v2692
        %2769 = vmatpush1.bf16.msra.mxu0 %v2691
        %2770 = vmatprep.subr.bf16.mxu0 0
        %2771 = vmatpush1.bf16.msra.mxu0 0
        %2772 = vmatprep.subr.bf16.mxu0 0
        %2773 = vmatpush1.bf16.msra.mxu0 0
        %2774 = vmatprep.subr.bf16.mxu0 0
        %2775 = vmatpush1.bf16.msra.mxu0 0
        %2776 = vmatprep.subr.bf16.mxu0 0
        %2777 = vmatpush1.bf16.msra.mxu0 0
        %2778 = vmatprep.subr.bf16.mxu0 0
        %2779 = vmatpush1.bf16.msra.mxu0 0
        %2780 = vmatprep.subr.bf16.mxu0 0
        %2781 = vmatpush1.bf16.msra.mxu0 0
        %2782 = vmatprep.subr.bf16.mxu0 0
        %2783 = vmatpush1.bf16.msra.mxu0 0
        %2784 = vmatprep.subr.bf16.mxu0 0
        %2785 = vmatpush1.bf16.msra.mxu0 0
        %2786 = vmatprep.subr.bf16.mxu0 0
        %2787 = vmatpush1.bf16.msra.mxu0 0
        %2788 = vmatprep.subr.bf16.mxu0 0
        %2789 = vmatpush1.bf16.msra.mxu0 0
        %2790 = vmatprep.subr.bf16.mxu0 0
        %2791 = vmatpush1.bf16.msra.mxu0 0
        %2792 = vmatprep.subr.bf16.mxu0 0
        %2793 = vmatpush1.bf16.msra.mxu0 0
        %2794 = vmatprep.subr.bf16.mxu0 0
        %2795 = vmatpush1.bf16.msra.mxu0 0
        %2796 = vmatprep.subr.bf16.mxu0 0
        %2797 = vmatpush1.bf16.msra.mxu0 0
        %2798 = vmatprep.mubr.bf16.mxu0 0
        %2799 = vmatmul.mubr.bf16.gmra.mrb[0].mxu0 %v2721
        %v2800 = vpop.f32.mrb[0].mxu0
        %v2801 = vadd.f32 %v2708, %v2800
        %v2802 = vpop.f32.mrb[0].mxu0
        %v2803 = vadd.f32 %v2708, %v2802
        %v2804 = vpop.f32.mrb[0].mxu0
        %v2805 = vadd.f32 %v2713, %v2804
        %v2806 = vpop.f32.mrb[0].mxu0
        %v2807 = vadd.f32 %v2713, %v2806
        %2808 = vdwg.mxu0
        %2809 = vmatprep.subr.bf16.mxu0 %v2678
        %2810 = vmatpush1.bf16.msra.mxu0 %v2677
        %2811 = vmatprep.subr.bf16.mxu0 %v2694
        %2812 = vmatpush1.bf16.msra.mxu0 %v2693
        %2813 = vmatprep.subr.bf16.mxu0 0
        %2814 = vmatpush1.bf16.msra.mxu0 0
        %2815 = vmatprep.subr.bf16.mxu0 0
        %2816 = vmatpush1.bf16.msra.mxu0 0
        %2817 = vmatprep.subr.bf16.mxu0 0
        %2818 = vmatpush1.bf16.msra.mxu0 0
        %2819 = vmatprep.subr.bf16.mxu0 0
        %2820 = vmatpush1.bf16.msra.mxu0 0
        %2821 = vmatprep.subr.bf16.mxu0 0
        %2822 = vmatpush1.bf16.msra.mxu0 0
        %2823 = vmatprep.subr.bf16.mxu0 0
        %2824 = vmatpush1.bf16.msra.mxu0 0
        %2825 = vmatprep.subr.bf16.mxu0 0
        %2826 = vmatpush1.bf16.msra.mxu0 0
        %2827 = vmatprep.subr.bf16.mxu0 0
        %2828 = vmatpush1.bf16.msra.mxu0 0
        %2829 = vmatprep.subr.bf16.mxu0 0
        %2830 = vmatpush1.bf16.msra.mxu0 0
        %2831 = vmatprep.subr.bf16.mxu0 0
        %2832 = vmatpush1.bf16.msra.mxu0 0
        %2833 = vmatprep.subr.bf16.mxu0 0
        %2834 = vmatpush1.bf16.msra.mxu0 0
        %2835 = vmatprep.subr.bf16.mxu0 0
        %2836 = vmatpush1.bf16.msra.mxu0 0
        %2837 = vmatprep.subr.bf16.mxu0 0
        %2838 = vmatpush1.bf16.msra.mxu0 0
        %2839 = vmatprep.subr.bf16.mxu0 0
        %2840 = vmatpush1.bf16.msra.mxu0 0
        %2841 = vmatprep.mubr.bf16.mxu0 0
        %2842 = vmatmul.mubr.bf16.gmra.mrb[0].mxu0 %v2721
        %v2843 = vpop.f32.mrb[0].mxu0
        %v2844 = vadd.f32 %v2708, %v2843
        %v2845 = vpop.f32.mrb[0].mxu0
        %v2846 = vadd.f32 %v2708, %v2845
        %v2847 = vpop.f32.mrb[0].mxu0
        %v2848 = vadd.f32 %v2713, %v2847
        %v2849 = vpop.f32.mrb[0].mxu0
        %v2850 = vadd.f32 %v2713, %v2849
        %2851 = vdwg.mxu0
        %2852 = vmatprep.subr.bf16.mxu0 %v2680
        %2853 = vmatpush1.bf16.msra.mxu0 %v2679
        %2854 = vmatprep.subr.bf16.mxu0 %v2696
        %2855 = vmatpush1.bf16.msra.mxu0 %v2695
        %2856 = vmatprep.subr.bf16.mxu0 0
        %2857 = vmatpush1.bf16.msra.mxu0 0
        %2858 = vmatprep.subr.bf16.mxu0 0
        %2859 = vmatpush1.bf16.msra.mxu0 0
        %2860 = vmatprep.subr.bf16.mxu0 0
        %2861 = vmatpush1.bf16.msra.mxu0 0
        %2862 = vmatprep.subr.bf16.mxu0 0
        %2863 = vmatpush1.bf16.msra.mxu0 0
        %2864 = vmatprep.subr.bf16.mxu0 0
        %2865 = vmatpush1.bf16.msra.mxu0 0
        %2866 = vmatprep.subr.bf16.mxu0 0
        %2867 = vmatpush1.bf16.msra.mxu0 0
        %2868 = vmatprep.subr.bf16.mxu0 0
        %2869 = vmatpush1.bf16.msra.mxu0 0
        %2870 = vmatprep.subr.bf16.mxu0 0
        %2871 = vmatpush1.bf16.msra.mxu0 0
        %2872 = vmatprep.subr.bf16.mxu0 0
        %2873 = vmatpush1.bf16.msra.mxu0 0
        %2874 = vmatprep.subr.bf16.mxu0 0
        %2875 = vmatpush1.bf16.msra.mxu0 0
        %2876 = vmatprep.subr.bf16.mxu0 0
        %2877 = vmatpush1.bf16.msra.mxu0 0
        %2878 = vmatprep.subr.bf16.mxu0 0
        %2879 = vmatpush1.bf16.msra.mxu0 0
        %2880 = vmatprep.subr.bf16.mxu0 0
        %2881 = vmatpush1.bf16.msra.mxu0 0
        %2882 = vmatprep.subr.bf16.mxu0 0
        %2883 = vmatpush1.bf16.msra.mxu0 0
        %2884 = vmatprep.mubr.bf16.mxu0 0
        %2885 = vmatmul.mubr.bf16.gmra.mrb[0].mxu0 %v2721
        %v2886 = vpop.f32.mrb[0].mxu0
        %v2887 = vadd.f32 %v2708, %v2886
        %v2888 = vpop.f32.mrb[0].mxu0
        %v2889 = vadd.f32 %v2708, %v2888
        %v2890 = vpop.f32.mrb[0].mxu0
        %v2891 = vadd.f32 %v2713, %v2890
        %v2892 = vpop.f32.mrb[0].mxu0
        %v2893 = vadd.f32 %v2713, %v2892
        %2894 = vdwg.mxu0
        %2895 = vmatprep.subr.bf16.mxu0 %v2682
        %2896 = vmatpush1.bf16.msra.mxu0 %v2681
        %2897 = vmatprep.subr.bf16.mxu0 %v2698
        %2898 = vmatpush1.bf16.msra.mxu0 %v2697
        %2899 = vmatprep.subr.bf16.mxu0 0
        %2900 = vmatpush1.bf16.msra.mxu0 0
        %2901 = vmatprep.subr.bf16.mxu0 0
        %2902 = vmatpush1.bf16.msra.mxu0 0
        %2903 = vmatprep.subr.bf16.mxu0 0
        %2904 = vmatpush1.bf16.msra.mxu0 0
        %2905 = vmatprep.subr.bf16.mxu0 0
        %2906 = vmatpush1.bf16.msra.mxu0 0
        %2907 = vmatprep.subr.bf16.mxu0 0
        %2908 = vmatpush1.bf16.msra.mxu0 0
        %2909 = vmatprep.subr.bf16.mxu0 0
        %2910 = vmatpush1.bf16.msra.mxu0 0
        %2911 = vmatprep.subr.bf16.mxu0 0
        %2912 = vmatpush1.bf16.msra.mxu0 0
        %2913 = vmatprep.subr.bf16.mxu0 0
        %2914 = vmatpush1.bf16.msra.mxu0 0
        %2915 = vmatprep.subr.bf16.mxu0 0
        %2916 = vmatpush1.bf16.msra.mxu0 0
        %2917 = vmatprep.subr.bf16.mxu0 0
        %2918 = vmatpush1.bf16.msra.mxu0 0
        %2919 = vmatprep.subr.bf16.mxu0 0
        %2920 = vmatpush1.bf16.msra.mxu0 0
        %2921 = vmatprep.subr.bf16.mxu0 0
        %2922 = vmatpush1.bf16.msra.mxu0 0
        %2923 = vmatprep.subr.bf16.mxu0 0
        %2924 = vmatpush1.bf16.msra.mxu0 0
        %2925 = vmatprep.subr.bf16.mxu0 0
        %2926 = vmatpush1.bf16.msra.mxu0 0
        %2927 = vmatprep.mubr.bf16.mxu0 0
        %2928 = vmatmul.mubr.bf16.gmra.mrb[0].mxu0 %v2721
        %v2929 = vpop.f32.mrb[0].mxu0
        %v2930 = vadd.f32 %v2708, %v2929
        %v2931 = vpop.f32.mrb[0].mxu0
        %v2932 = vadd.f32 %v2708, %v2931
        %v2933 = vpop.f32.mrb[0].mxu0
        %v2934 = vadd.f32 %v2713, %v2933
        %v2935 = vpop.f32.mrb[0].mxu0
        %v2936 = vadd.f32 %v2713, %v2935
        %2937 = vdwg.mxu0
        %2938 = vmatprep.subr.bf16.mxu0 %v2684
        %2939 = vmatpush1.bf16.msra.mxu0 %v2683
        %2940 = vmatprep.subr.bf16.mxu0 %v2700
        %2941 = vmatpush1.bf16.msra.mxu0 %v2699
        %2942 = vmatprep.subr.bf16.mxu0 0
        %2943 = vmatpush1.bf16.msra.mxu0 0
        %2944 = vmatprep.subr.bf16.mxu0 0
        %2945 = vmatpush1.bf16.msra.mxu0 0
        %2946 = vmatprep.subr.bf16.mxu0 0
        %2947 = vmatpush1.bf16.msra.mxu0 0
        %2948 = vmatprep.subr.bf16.mxu0 0
        %2949 = vmatpush1.bf16.msra.mxu0 0
        %2950 = vmatprep.subr.bf16.mxu0 0
        %2951 = vmatpush1.bf16.msra.mxu0 0
        %2952 = vmatprep.subr.bf16.mxu0 0
        %2953 = vmatpush1.bf16.msra.mxu0 0
        %2954 = vmatprep.subr.bf16.mxu0 0
        %2955 = vmatpush1.bf16.msra.mxu0 0
        %2956 = vmatprep.subr.bf16.mxu0 0
        %2957 = vmatpush1.bf16.msra.mxu0 0
        %2958 = vmatprep.subr.bf16.mxu0 0
        %2959 = vmatpush1.bf16.msra.mxu0 0
        %2960 = vmatprep.subr.bf16.mxu0 0
        %2961 = vmatpush1.bf16.msra.mxu0 0
        %2962 = vmatprep.subr.bf16.mxu0 0
        %2963 = vmatpush1.bf16.msra.mxu0 0
        %2964 = vmatprep.subr.bf16.mxu0 0
        %2965 = vmatpush1.bf16.msra.mxu0 0
        %2966 = vmatprep.subr.bf16.mxu0 0
        %2967 = vmatpush1.bf16.msra.mxu0 0
        %2968 = vmatprep.subr.bf16.mxu0 0
        %2969 = vmatpush1.bf16.msra.mxu0 0
        %2970 = vmatprep.mubr.bf16.mxu0 0
        %2971 = vmatmul.mubr.bf16.gmra.mrb[0].mxu0 %v2721
        %v2972 = vpop.f32.mrb[0].mxu0
        %v2973 = vadd.f32 %v2708, %v2972
        %v2974 = vpop.f32.mrb[0].mxu0
        %v2975 = vadd.f32 %v2708, %v2974
        %v2976 = vpop.f32.mrb[0].mxu0
        %v2977 = vadd.f32 %v2713, %v2976
        %v2978 = vpop.f32.mrb[0].mxu0
        %v2979 = vadd.f32 %v2713, %v2978
        %2980 = vdwg.mxu0
        %2981 = vmatprep.subr.bf16.mxu0 %v2686
        %2982 = vmatpush1.bf16.msra.mxu0 %v2685
        %2983 = vmatprep.subr.bf16.mxu0 %v2702
        %2984 = vmatpush1.bf16.msra.mxu0 %v2701
        %2985 = vmatprep.subr.bf16.mxu0 0
        %2986 = vmatpush1.bf16.msra.mxu0 0
        %2987 = vmatprep.subr.bf16.mxu0 0
        %2988 = vmatpush1.bf16.msra.mxu0 0
        %2989 = vmatprep.subr.bf16.mxu0 0
        %2990 = vmatpush1.bf16.msra.mxu0 0
        %2991 = vmatprep.subr.bf16.mxu0 0
        %2992 = vmatpush1.bf16.msra.mxu0 0
        %2993 = vmatprep.subr.bf16.mxu0 0
        %2994 = vmatpush1.bf16.msra.mxu0 0
        %2995 = vmatprep.subr.bf16.mxu0 0
        %2996 = vmatpush1.bf16.msra.mxu0 0
        %2997 = vmatprep.subr.bf16.mxu0 0
        %2998 = vmatpush1.bf16.msra.mxu0 0
        %2999 = vmatprep.subr.bf16.mxu0 0
        %3000 = vmatpush1.bf16.msra.mxu0 0
        %3001 = vmatprep.subr.bf16.mxu0 0
        %3002 = vmatpush1.bf16.msra.mxu0 0
        %3003 = vmatprep.subr.bf16.mxu0 0
        %3004 = vmatpush1.bf16.msra.mxu0 0
        %3005 = vmatprep.subr.bf16.mxu0 0
        %3006 = vmatpush1.bf16.msra.mxu0 0
        %3007 = vmatprep.subr.bf16.mxu0 0
        %3008 = vmatpush1.bf16.msra.mxu0 0
        %3009 = vmatprep.subr.bf16.mxu0 0
        %3010 = vmatpush1.bf16.msra.mxu0 0
        %3011 = vmatprep.subr.bf16.mxu0 0
        %3012 = vmatpush1.bf16.msra.mxu0 0
        %3013 = vmatprep.mubr.bf16.mxu0 0
        %3014 = vmatmul.mubr.bf16.gmra.mrb[0].mxu0 %v2721
        %v3015 = vpop.f32.mrb[0].mxu0
        %v3016 = vadd.f32 %v2708, %v3015
        %v3017 = vpop.f32.mrb[0].mxu0
        %v3018 = vadd.f32 %v2708, %v3017
        %v3019 = vpop.f32.mrb[0].mxu0
        %v3020 = vadd.f32 %v2713, %v3019
        %v3021 = vpop.f32.mrb[0].mxu0
        %v3022 = vadd.f32 %v2713, %v3021
        %3023 = vdwg.mxu0
        %3024 = vmatprep.subr.bf16.mxu0 %v2688
        %3025 = vmatpush1.bf16.msra.mxu0 %v2687
        %3026 = vmatprep.subr.bf16.mxu0 %v2704
        %3027 = vmatpush1.bf16.msra.mxu0 %v2703
        %3028 = vmatprep.subr.bf16.mxu0 0
        %3029 = vmatpush1.bf16.msra.mxu0 0
        %3030 = vmatprep.subr.bf16.mxu0 0
        %3031 = vmatpush1.bf16.msra.mxu0 0
        %3032 = vmatprep.subr.bf16.mxu0 0
        %3033 = vmatpush1.bf16.msra.mxu0 0
        %3034 = vmatprep.subr.bf16.mxu0 0
        %3035 = vmatpush1.bf16.msra.mxu0 0
        %3036 = vmatprep.subr.bf16.mxu0 0
        %3037 = vmatpush1.bf16.msra.mxu0 0
        %3038 = vmatprep.subr.bf16.mxu0 0
        %3039 = vmatpush1.bf16.msra.mxu0 0
        %3040 = vmatprep.subr.bf16.mxu0 0
        %3041 = vmatpush1.bf16.msra.mxu0 0
        %3042 = vmatprep.subr.bf16.mxu0 0
        %3043 = vmatpush1.bf16.msra.mxu0 0
        %3044 = vmatprep.subr.bf16.mxu0 0
        %3045 = vmatpush1.bf16.msra.mxu0 0
        %3046 = vmatprep.subr.bf16.mxu0 0
        %3047 = vmatpush1.bf16.msra.mxu0 0
        %3048 = vmatprep.subr.bf16.mxu0 0
        %3049 = vmatpush1.bf16.msra.mxu0 0
        %3050 = vmatprep.subr.bf16.mxu0 0
        %3051 = vmatpush1.bf16.msra.mxu0 0
        %3052 = vmatprep.subr.bf16.mxu0 0
        %3053 = vmatpush1.bf16.msra.mxu0 0
        %3054 = vmatprep.subr.bf16.mxu0 0
        %3055 = vmatpush1.bf16.msra.mxu0 0
        %3056 = vmatprep.mubr.bf16.mxu0 0
        %3057 = vmatmul.mubr.bf16.gmra.mrb[0].mxu0 %v2721
        %v3058 = vpop.f32.mrb[0].mxu0
        %v3059 = vadd.f32 %v2708, %v3058
        %v3060 = vpop.f32.mrb[0].mxu0
        %v3061 = vadd.f32 %v2708, %v3060
        %v3062 = vpop.f32.mrb[0].mxu0
        %v3063 = vadd.f32 %v2713, %v3062
        %v3064 = vpop.f32.mrb[0].mxu0
        %v3065 = vadd.f32 %v2713, %v3064
        %3066 = vdwg.mxu0
        %v3067 = vmax.f32 %v2758, 0.0
        %v3068 = vmax.f32 %v2760, 0.0
        %v3069 = vmax.f32 %v2801, 0.0
        %v3070 = vmax.f32 %v2803, 0.0
        %v3071 = vmax.f32 %v2844, 0.0
        %v3072 = vmax.f32 %v2846, 0.0
        %v3073 = vmax.f32 %v2887, 0.0
        %v3074 = vmax.f32 %v2889, 0.0
        %v3075 = vmax.f32 %v2930, 0.0
        %v3076 = vmax.f32 %v2932, 0.0
        %v3077 = vmax.f32 %v2973, 0.0
        %v3078 = vmax.f32 %v2975, 0.0
        %v3079 = vmax.f32 %v3016, 0.0
        %v3080 = vmax.f32 %v3018, 0.0
        %v3081 = vmax.f32 %v3059, 0.0
        %v3082 = vmax.f32 %v3061, 0.0
        %v3083 = vmax.f32 %v2762, 0.0
        %v3084 = vmax.f32 %v2764, 0.0
        %v3085 = vmax.f32 %v2805, 0.0
        %v3086 = vmax.f32 %v2807, 0.0
        %v3087 = vmax.f32 %v2848, 0.0
        %v3088 = vmax.f32 %v2850, 0.0
        %v3089 = vmax.f32 %v2891, 0.0
        %v3090 = vmax.f32 %v2893, 0.0
        %v3091 = vmax.f32 %v2934, 0.0
        %v3092 = vmax.f32 %v2936, 0.0
        %v3093 = vmax.f32 %v2977, 0.0
        %v3094 = vmax.f32 %v2979, 0.0
        %v3095 = vmax.f32 %v3020, 0.0
        %v3096 = vmax.f32 %v3022, 0.0
        %v3097 = vmax.f32 %v3063, 0.0
        %v3098 = vmax.f32 %v3065, 0.0
        %v3099 = vld [vmem:[%s3] sm:$0xf]
        %v3100 = vpack.c.bf16 %v3083, %v3067
        %v3101 = vpack.c.bf16 %v3084, %v3068
        %v3102 = vpack.c.bf16 %v3085, %v3069
        %v3103 = vpack.c.bf16 %v3086, %v3070
        %v3104 = vpack.c.bf16 %v3087, %v3071
        %v3105 = vpack.c.bf16 %v3088, %v3072
        %v3106 = vpack.c.bf16 %v3089, %v3073
        %v3107 = vpack.c.bf16 %v3090, %v3074
        %v3108 = vpack.c.bf16 %v3091, %v3075
        %v3109 = vpack.c.bf16 %v3092, %v3076
        %v3110 = vpack.c.bf16 %v3093, %v3077
        %v3111 = vpack.c.bf16 %v3094, %v3078
        %v3112 = vpack.c.bf16 %v3095, %v3079
        %v3113 = vpack.c.bf16 %v3096, %v3080
        %v3114 = vpack.c.bf16 %v3097, %v3081
        %v3115 = vpack.c.bf16 %v3098, %v3082
        %3117 = vset.pattern.permute.xlu0 0
        %3118 = vperm.xlu0 %3117, %v316
        %v3119 = vpop.permute.xlu0 %3118
        %vm3121 = vcmask 130048
        %v3123 = vsel %vm3121, %v3099, 0
        %3125 = vmatprep.subr.bf16.mxu0 %v3101
        %3126 = vmatpush1.bf16.msra.mxu0 %v3100
        %3127 = vmatprep.subr.bf16.mxu0 0
        %3128 = vmatpush1.bf16.msra.mxu0 0
        %3129 = vmatprep.subr.bf16.mxu0 0
        %3130 = vmatpush1.bf16.msra.mxu0 0
        %3131 = vmatprep.subr.bf16.mxu0 0
        %3132 = vmatpush1.bf16.msra.mxu0 0
        %3133 = vmatprep.subr.bf16.mxu0 0
        %3134 = vmatpush1.bf16.msra.mxu0 0
        %3135 = vmatprep.subr.bf16.mxu0 0
        %3136 = vmatpush1.bf16.msra.mxu0 0
        %3137 = vmatprep.subr.bf16.mxu0 0
        %3138 = vmatpush1.bf16.msra.mxu0 0
        %3139 = vmatprep.subr.bf16.mxu0 0
        %3140 = vmatpush1.bf16.msra.mxu0 0
        %3141 = vmatprep.subr.bf16.mxu0 0
        %3142 = vmatpush1.bf16.msra.mxu0 0
        %3143 = vmatprep.subr.bf16.mxu0 0
        %3144 = vmatpush1.bf16.msra.mxu0 0
        %3145 = vmatprep.subr.bf16.mxu0 0
        %3146 = vmatpush1.bf16.msra.mxu0 0
        %3147 = vmatprep.subr.bf16.mxu0 0
        %3148 = vmatpush1.bf16.msra.mxu0 0
        %3149 = vmatprep.subr.bf16.mxu0 0
        %3150 = vmatpush1.bf16.msra.mxu0 0
        %3151 = vmatprep.subr.bf16.mxu0 0
        %3152 = vmatpush1.bf16.msra.mxu0 0
        %3153 = vmatprep.subr.bf16.mxu0 0
        %3154 = vmatpush1.bf16.msra.mxu0 0
        %3155 = vmatprep.subr.bf16.mxu0 0
        %3156 = vmatpush1.bf16.msra.mxu0 0
        %3157 = vmatprep.mubr.bf16.mxu0 0
        %3158 = vmatmul.mubr.bf16.gmra.mrb[0].mxu0 %v3123
        %v3159 = vpop.f32.mrb[0].mxu0
        %v3160 = vadd.f32 %v3119, %v3159
        %v3161 = vpop.f32.mrb[0].mxu0
        %v3162 = vadd.f32 %v3119, %v3161
        %v3163 = vpop.f32.mrb[0].mxu0
        %v3164 = vpop.f32.mrb[0].mxu0
        %3165 = vdwg.mxu0
        %3166 = vmatprep.subr.bf16.mxu0 %v3103
        %3167 = vmatpush1.bf16.msra.mxu0 %v3102
        %3168 = vmatprep.subr.bf16.mxu0 0
        %3169 = vmatpush1.bf16.msra.mxu0 0
        %3170 = vmatprep.subr.bf16.mxu0 0
        %3171 = vmatpush1.bf16.msra.mxu0 0
        %3172 = vmatprep.subr.bf16.mxu0 0
        %3173 = vmatpush1.bf16.msra.mxu0 0
        %3174 = vmatprep.subr.bf16.mxu0 0
        %3175 = vmatpush1.bf16.msra.mxu0 0
        %3176 = vmatprep.subr.bf16.mxu0 0
        %3177 = vmatpush1.bf16.msra.mxu0 0
        %3178 = vmatprep.subr.bf16.mxu0 0
        %3179 = vmatpush1.bf16.msra.mxu0 0
        %3180 = vmatprep.subr.bf16.mxu0 0
        %3181 = vmatpush1.bf16.msra.mxu0 0
        %3182 = vmatprep.subr.bf16.mxu0 0
        %3183 = vmatpush1.bf16.msra.mxu0 0
        %3184 = vmatprep.subr.bf16.mxu0 0
        %3185 = vmatpush1.bf16.msra.mxu0 0
        %3186 = vmatprep.subr.bf16.mxu0 0
        %3187 = vmatpush1.bf16.msra.mxu0 0
        %3188 = vmatprep.subr.bf16.mxu0 0
        %3189 = vmatpush1.bf16.msra.mxu0 0
        %3190 = vmatprep.subr.bf16.mxu0 0
        %3191 = vmatpush1.bf16.msra.mxu0 0
        %3192 = vmatprep.subr.bf16.mxu0 0
        %3193 = vmatpush1.bf16.msra.mxu0 0
        %3194 = vmatprep.subr.bf16.mxu0 0
        %3195 = vmatpush1.bf16.msra.mxu0 0
        %3196 = vmatprep.subr.bf16.mxu0 0
        %3197 = vmatpush1.bf16.msra.mxu0 0
        %3198 = vmatprep.mubr.bf16.mxu0 0
        %3199 = vmatmul.mubr.bf16.gmra.mrb[0].mxu0 %v3123
        %v3200 = vpop.f32.mrb[0].mxu0
        %v3201 = vadd.f32 %v3119, %v3200
        %v3202 = vpop.f32.mrb[0].mxu0
        %v3203 = vadd.f32 %v3119, %v3202
        %v3204 = vpop.f32.mrb[0].mxu0
        %v3205 = vpop.f32.mrb[0].mxu0
        %3206 = vdwg.mxu0
        %3207 = vmatprep.subr.bf16.mxu0 %v3105
        %3208 = vmatpush1.bf16.msra.mxu0 %v3104
        %3209 = vmatprep.subr.bf16.mxu0 0
        %3210 = vmatpush1.bf16.msra.mxu0 0
        %3211 = vmatprep.subr.bf16.mxu0 0
        %3212 = vmatpush1.bf16.msra.mxu0 0
        %3213 = vmatprep.subr.bf16.mxu0 0
        %3214 = vmatpush1.bf16.msra.mxu0 0
        %3215 = vmatprep.subr.bf16.mxu0 0
        %3216 = vmatpush1.bf16.msra.mxu0 0
        %3217 = vmatprep.subr.bf16.mxu0 0
        %3218 = vmatpush1.bf16.msra.mxu0 0
        %3219 = vmatprep.subr.bf16.mxu0 0
        %3220 = vmatpush1.bf16.msra.mxu0 0
        %3221 = vmatprep.subr.bf16.mxu0 0
        %3222 = vmatpush1.bf16.msra.mxu0 0
        %3223 = vmatprep.subr.bf16.mxu0 0
        %3224 = vmatpush1.bf16.msra.mxu0 0
        %3225 = vmatprep.subr.bf16.mxu0 0
        %3226 = vmatpush1.bf16.msra.mxu0 0
        %3227 = vmatprep.subr.bf16.mxu0 0
        %3228 = vmatpush1.bf16.msra.mxu0 0
        %3229 = vmatprep.subr.bf16.mxu0 0
        %3230 = vmatpush1.bf16.msra.mxu0 0
        %3231 = vmatprep.subr.bf16.mxu0 0
        %3232 = vmatpush1.bf16.msra.mxu0 0
        %3233 = vmatprep.subr.bf16.mxu0 0
        %3234 = vmatpush1.bf16.msra.mxu0 0
        %3235 = vmatprep.subr.bf16.mxu0 0
        %3236 = vmatpush1.bf16.msra.mxu0 0
        %3237 = vmatprep.subr.bf16.mxu0 0
        %3238 = vmatpush1.bf16.msra.mxu0 0
        %3239 = vmatprep.mubr.bf16.mxu0 0
        %3240 = vmatmul.mubr.bf16.gmra.mrb[0].mxu0 %v3123
        %v3241 = vpop.f32.mrb[0].mxu0
        %v3242 = vadd.f32 %v3119, %v3241
        %v3243 = vpop.f32.mrb[0].mxu0
        %v3244 = vadd.f32 %v3119, %v3243
        %v3245 = vpop.f32.mrb[0].mxu0
        %v3246 = vpop.f32.mrb[0].mxu0
        %3247 = vdwg.mxu0
        %3248 = vmatprep.subr.bf16.mxu0 %v3107
        %3249 = vmatpush1.bf16.msra.mxu0 %v3106
        %3250 = vmatprep.subr.bf16.mxu0 0
        %3251 = vmatpush1.bf16.msra.mxu0 0
        %3252 = vmatprep.subr.bf16.mxu0 0
        %3253 = vmatpush1.bf16.msra.mxu0 0
        %3254 = vmatprep.subr.bf16.mxu0 0
        %3255 = vmatpush1.bf16.msra.mxu0 0
        %3256 = vmatprep.subr.bf16.mxu0 0
        %3257 = vmatpush1.bf16.msra.mxu0 0
        %3258 = vmatprep.subr.bf16.mxu0 0
        %3259 = vmatpush1.bf16.msra.mxu0 0
        %3260 = vmatprep.subr.bf16.mxu0 0
        %3261 = vmatpush1.bf16.msra.mxu0 0
        %3262 = vmatprep.subr.bf16.mxu0 0
        %3263 = vmatpush1.bf16.msra.mxu0 0
        %3264 = vmatprep.subr.bf16.mxu0 0
        %3265 = vmatpush1.bf16.msra.mxu0 0
        %3266 = vmatprep.subr.bf16.mxu0 0
        %3267 = vmatpush1.bf16.msra.mxu0 0
        %3268 = vmatprep.subr.bf16.mxu0 0
        %3269 = vmatpush1.bf16.msra.mxu0 0
        %3270 = vmatprep.subr.bf16.mxu0 0
        %3271 = vmatpush1.bf16.msra.mxu0 0
        %3272 = vmatprep.subr.bf16.mxu0 0
        %3273 = vmatpush1.bf16.msra.mxu0 0
        %3274 = vmatprep.subr.bf16.mxu0 0
        %3275 = vmatpush1.bf16.msra.mxu0 0
        %3276 = vmatprep.subr.bf16.mxu0 0
        %3277 = vmatpush1.bf16.msra.mxu0 0
        %3278 = vmatprep.subr.bf16.mxu0 0
        %3279 = vmatpush1.bf16.msra.mxu0 0
        %3280 = vmatprep.mubr.bf16.mxu0 0
        %3281 = vmatmul.mubr.bf16.gmra.mrb[0].mxu0 %v3123
        %v3282 = vpop.f32.mrb[0].mxu0
        %v3283 = vadd.f32 %v3119, %v3282
        %v3284 = vpop.f32.mrb[0].mxu0
        %v3285 = vadd.f32 %v3119, %v3284
        %v3286 = vpop.f32.mrb[0].mxu0
        %v3287 = vpop.f32.mrb[0].mxu0
        %3288 = vdwg.mxu0
        %3289 = vmatprep.subr.bf16.mxu0 %v3109
        %3290 = vmatpush1.bf16.msra.mxu0 %v3108
        %3291 = vmatprep.subr.bf16.mxu0 0
        %3292 = vmatpush1.bf16.msra.mxu0 0
        %3293 = vmatprep.subr.bf16.mxu0 0
        %3294 = vmatpush1.bf16.msra.mxu0 0
        %3295 = vmatprep.subr.bf16.mxu0 0
        %3296 = vmatpush1.bf16.msra.mxu0 0
        %3297 = vmatprep.subr.bf16.mxu0 0
        %3298 = vmatpush1.bf16.msra.mxu0 0
        %3299 = vmatprep.subr.bf16.mxu0 0
        %3300 = vmatpush1.bf16.msra.mxu0 0
        %3301 = vmatprep.subr.bf16.mxu0 0
        %3302 = vmatpush1.bf16.msra.mxu0 0
        %3303 = vmatprep.subr.bf16.mxu0 0
        %3304 = vmatpush1.bf16.msra.mxu0 0
        %3305 = vmatprep.subr.bf16.mxu0 0
        %3306 = vmatpush1.bf16.msra.mxu0 0
        %3307 = vmatprep.subr.bf16.mxu0 0
        %3308 = vmatpush1.bf16.msra.mxu0 0
        %3309 = vmatprep.subr.bf16.mxu0 0
        %3310 = vmatpush1.bf16.msra.mxu0 0
        %3311 = vmatprep.subr.bf16.mxu0 0
        %3312 = vmatpush1.bf16.msra.mxu0 0
        %3313 = vmatprep.subr.bf16.mxu0 0
        %3314 = vmatpush1.bf16.msra.mxu0 0
        %3315 = vmatprep.subr.bf16.mxu0 0
        %3316 = vmatpush1.bf16.msra.mxu0 0
        %3317 = vmatprep.subr.bf16.mxu0 0
        %3318 = vmatpush1.bf16.msra.mxu0 0
        %3319 = vmatprep.subr.bf16.mxu0 0
        %3320 = vmatpush1.bf16.msra.mxu0 0
        %3321 = vmatprep.mubr.bf16.mxu0 0
        %3322 = vmatmul.mubr.bf16.gmra.mrb[0].mxu0 %v3123
        %v3323 = vpop.f32.mrb[0].mxu0
        %v3324 = vadd.f32 %v3119, %v3323
        %v3325 = vpop.f32.mrb[0].mxu0
        %v3326 = vadd.f32 %v3119, %v3325
        %v3327 = vpop.f32.mrb[0].mxu0
        %v3328 = vpop.f32.mrb[0].mxu0
        %3329 = vdwg.mxu0
        %3330 = vmatprep.subr.bf16.mxu0 %v3111
        %3331 = vmatpush1.bf16.msra.mxu0 %v3110
        %3332 = vmatprep.subr.bf16.mxu0 0
        %3333 = vmatpush1.bf16.msra.mxu0 0
        %3334 = vmatprep.subr.bf16.mxu0 0
        %3335 = vmatpush1.bf16.msra.mxu0 0
        %3336 = vmatprep.subr.bf16.mxu0 0
        %3337 = vmatpush1.bf16.msra.mxu0 0
        %3338 = vmatprep.subr.bf16.mxu0 0
        %3339 = vmatpush1.bf16.msra.mxu0 0
        %3340 = vmatprep.subr.bf16.mxu0 0
        %3341 = vmatpush1.bf16.msra.mxu0 0
        %3342 = vmatprep.subr.bf16.mxu0 0
        %3343 = vmatpush1.bf16.msra.mxu0 0
        %3344 = vmatprep.subr.bf16.mxu0 0
        %3345 = vmatpush1.bf16.msra.mxu0 0
        %3346 = vmatprep.subr.bf16.mxu0 0
        %3347 = vmatpush1.bf16.msra.mxu0 0
        %3348 = vmatprep.subr.bf16.mxu0 0
        %3349 = vmatpush1.bf16.msra.mxu0 0
        %3350 = vmatprep.subr.bf16.mxu0 0
        %3351 = vmatpush1.bf16.msra.mxu0 0
        %3352 = vmatprep.subr.bf16.mxu0 0
        %3353 = vmatpush1.bf16.msra.mxu0 0
        %3354 = vmatprep.subr.bf16.mxu0 0
        %3355 = vmatpush1.bf16.msra.mxu0 0
        %3356 = vmatprep.subr.bf16.mxu0 0
        %3357 = vmatpush1.bf16.msra.mxu0 0
        %3358 = vmatprep.subr.bf16.mxu0 0
        %3359 = vmatpush1.bf16.msra.mxu0 0
        %3360 = vmatprep.subr.bf16.mxu0 0
        %3361 = vmatpush1.bf16.msra.mxu0 0
        %3362 = vmatprep.mubr.bf16.mxu0 0
        %3363 = vmatmul.mubr.bf16.gmra.mrb[0].mxu0 %v3123
        %v3364 = vpop.f32.mrb[0].mxu0
        %v3365 = vadd.f32 %v3119, %v3364
        %v3366 = vpop.f32.mrb[0].mxu0
        %v3367 = vadd.f32 %v3119, %v3366
        %v3368 = vpop.f32.mrb[0].mxu0
        %v3369 = vpop.f32.mrb[0].mxu0
        %3370 = vdwg.mxu0
        %3371 = vmatprep.subr.bf16.mxu0 %v3113
        %3372 = vmatpush1.bf16.msra.mxu0 %v3112
        %3373 = vmatprep.subr.bf16.mxu0 0
        %3374 = vmatpush1.bf16.msra.mxu0 0
        %3375 = vmatprep.subr.bf16.mxu0 0
        %3376 = vmatpush1.bf16.msra.mxu0 0
        %3377 = vmatprep.subr.bf16.mxu0 0
        %3378 = vmatpush1.bf16.msra.mxu0 0
        %3379 = vmatprep.subr.bf16.mxu0 0
        %3380 = vmatpush1.bf16.msra.mxu0 0
        %3381 = vmatprep.subr.bf16.mxu0 0
        %3382 = vmatpush1.bf16.msra.mxu0 0
        %3383 = vmatprep.subr.bf16.mxu0 0
        %3384 = vmatpush1.bf16.msra.mxu0 0
        %3385 = vmatprep.subr.bf16.mxu0 0
        %3386 = vmatpush1.bf16.msra.mxu0 0
        %3387 = vmatprep.subr.bf16.mxu0 0
        %3388 = vmatpush1.bf16.msra.mxu0 0
        %3389 = vmatprep.subr.bf16.mxu0 0
        %3390 = vmatpush1.bf16.msra.mxu0 0
        %3391 = vmatprep.subr.bf16.mxu0 0
        %3392 = vmatpush1.bf16.msra.mxu0 0
        %3393 = vmatprep.subr.bf16.mxu0 0
        %3394 = vmatpush1.bf16.msra.mxu0 0
        %3395 = vmatprep.subr.bf16.mxu0 0
        %3396 = vmatpush1.bf16.msra.mxu0 0
        %3397 = vmatprep.subr.bf16.mxu0 0
        %3398 = vmatpush1.bf16.msra.mxu0 0
        %3399 = vmatprep.subr.bf16.mxu0 0
        %3400 = vmatpush1.bf16.msra.mxu0 0
        %3401 = vmatprep.subr.bf16.mxu0 0
        %3402 = vmatpush1.bf16.msra.mxu0 0
        %3403 = vmatprep.mubr.bf16.mxu0 0
        %3404 = vmatmul.mubr.bf16.gmra.mrb[0].mxu0 %v3123
        %v3405 = vpop.f32.mrb[0].mxu0
        %v3406 = vadd.f32 %v3119, %v3405
        %v3407 = vpop.f32.mrb[0].mxu0
        %v3408 = vadd.f32 %v3119, %v3407
        %v3409 = vpop.f32.mrb[0].mxu0
        %v3410 = vpop.f32.mrb[0].mxu0
        %3411 = vdwg.mxu0
        %3412 = vmatprep.subr.bf16.mxu0 %v3115
        %3413 = vmatpush1.bf16.msra.mxu0 %v3114
        %3414 = vmatprep.subr.bf16.mxu0 0
        %3415 = vmatpush1.bf16.msra.mxu0 0
        %3416 = vmatprep.subr.bf16.mxu0 0
        %3417 = vmatpush1.bf16.msra.mxu0 0
        %3418 = vmatprep.subr.bf16.mxu0 0
        %3419 = vmatpush1.bf16.msra.mxu0 0
        %3420 = vmatprep.subr.bf16.mxu0 0
        %3421 = vmatpush1.bf16.msra.mxu0 0
        %3422 = vmatprep.subr.bf16.mxu0 0
        %3423 = vmatpush1.bf16.msra.mxu0 0
        %3424 = vmatprep.subr.bf16.mxu0 0
        %3425 = vmatpush1.bf16.msra.mxu0 0
        %3426 = vmatprep.subr.bf16.mxu0 0
        %3427 = vmatpush1.bf16.msra.mxu0 0
        %3428 = vmatprep.subr.bf16.mxu0 0
        %3429 = vmatpush1.bf16.msra.mxu0 0
        %3430 = vmatprep.subr.bf16.mxu0 0
        %3431 = vmatpush1.bf16.msra.mxu0 0
        %3432 = vmatprep.subr.bf16.mxu0 0
        %3433 = vmatpush1.bf16.msra.mxu0 0
        %3434 = vmatprep.subr.bf16.mxu0 0
        %3435 = vmatpush1.bf16.msra.mxu0 0
        %3436 = vmatprep.subr.bf16.mxu0 0
        %3437 = vmatpush1.bf16.msra.mxu0 0
        %3438 = vmatprep.subr.bf16.mxu0 0
        %3439 = vmatpush1.bf16.msra.mxu0 0
        %3440 = vmatprep.subr.bf16.mxu0 0
        %3441 = vmatpush1.bf16.msra.mxu0 0
        %3442 = vmatprep.subr.bf16.mxu0 0
        %3443 = vmatpush1.bf16.msra.mxu0 0
        %3444 = vmatprep.mubr.bf16.mxu0 0
        %3445 = vmatmul.mubr.bf16.gmra.mrb[0].mxu0 %v3123
        %v3446 = vpop.f32.mrb[0].mxu0
        %v3447 = vadd.f32 %v3119, %v3446
        %v3448 = vpop.f32.mrb[0].mxu0
        %v3449 = vadd.f32 %v3119, %v3448
        %v3450 = vpop.f32.mrb[0].mxu0
        %v3451 = vpop.f32.mrb[0].mxu0
        %3452 = vdwg.mxu0
        %v3453 = vxor.u32 %v3160, 2147483648
        %v3454 = vxor.u32 %v3162, 2147483648
        %v3455 = vxor.u32 %v3201, 2147483648
        %v3456 = vxor.u32 %v3203, 2147483648
        %v3457 = vxor.u32 %v3242, 2147483648
        %v3458 = vxor.u32 %v3244, 2147483648
        %v3459 = vxor.u32 %v3283, 2147483648
        %v3460 = vxor.u32 %v3285, 2147483648
        %v3461 = vxor.u32 %v3324, 2147483648
        %v3462 = vxor.u32 %v3326, 2147483648
        %v3463 = vxor.u32 %v3365, 2147483648
        %v3464 = vxor.u32 %v3367, 2147483648
        %v3465 = vxor.u32 %v3406, 2147483648
        %v3466 = vxor.u32 %v3408, 2147483648
        %v3467 = vxor.u32 %v3447, 2147483648
        %v3468 = vxor.u32 %v3449, 2147483648
        %v3469 = vmul.f32 %v3453, 1.442695
        %v3470 = vpow.pop %v3469
        %v3471 = vmul.f32 %v3454, 1.442695
        %v3472 = vpow.pop %v3471
        %v3473 = vmul.f32 %v3455, 1.442695
        %v3474 = vpow.pop %v3473
        %v3475 = vmul.f32 %v3456, 1.442695
        %v3476 = vpow.pop %v3475
        %v3477 = vmul.f32 %v3457, 1.442695
        %v3478 = vpow.pop %v3477
        %v3479 = vmul.f32 %v3458, 1.442695
        %v3480 = vpow.pop %v3479
        %v3481 = vmul.f32 %v3459, 1.442695
        %v3482 = vpow.pop %v3481
        %v3483 = vmul.f32 %v3460, 1.442695
        %v3484 = vpow.pop %v3483
        %v3485 = vmul.f32 %v3461, 1.442695
        %v3486 = vpow.pop %v3485
        %v3487 = vmul.f32 %v3462, 1.442695
        %v3488 = vpow.pop %v3487
        %v3489 = vmul.f32 %v3463, 1.442695
        %v3490 = vpow.pop %v3489
        %v3491 = vmul.f32 %v3464, 1.442695
        %v3492 = vpow.pop %v3491
        %v3493 = vmul.f32 %v3465, 1.442695
        %v3494 = vpow.pop %v3493
        %v3495 = vmul.f32 %v3466, 1.442695
        %v3496 = vpow.pop %v3495
        %v3497 = vmul.f32 %v3467, 1.442695
        %v3498 = vpow.pop %v3497
        %v3499 = vmul.f32 %v3468, 1.442695
        %v3500 = vpow.pop %v3499
        %v3501 = vadd.f32 %v3470, 1.0
        %v3502 = vadd.f32 %v3472, 1.0
        %v3503 = vadd.f32 %v3474, 1.0
        %v3504 = vadd.f32 %v3476, 1.0
        %v3505 = vadd.f32 %v3478, 1.0
        %v3506 = vadd.f32 %v3480, 1.0
        %v3507 = vadd.f32 %v3482, 1.0
        %v3508 = vadd.f32 %v3484, 1.0
        %v3509 = vadd.f32 %v3486, 1.0
        %v3510 = vadd.f32 %v3488, 1.0
        %v3511 = vadd.f32 %v3490, 1.0
        %v3512 = vadd.f32 %v3492, 1.0
        %v3513 = vadd.f32 %v3494, 1.0
        %v3514 = vadd.f32 %v3496, 1.0
        %v3515 = vadd.f32 %v3498, 1.0
        %v3516 = vadd.f32 %v3500, 1.0
        %v3517 = vrcp.pop %v3501
        %v3518 = vmul.f32 1.0, %v3517
        %v3519 = vrcp.pop %v3502
        %v3520 = vmul.f32 1.0, %v3519
        %v3521 = vrcp.pop %v3503
        %v3522 = vmul.f32 1.0, %v3521
        %v3523 = vrcp.pop %v3504
        %v3524 = vmul.f32 1.0, %v3523
        %v3525 = vrcp.pop %v3505
        %v3526 = vmul.f32 1.0, %v3525
        %v3527 = vrcp.pop %v3506
        %v3528 = vmul.f32 1.0, %v3527
        %v3529 = vrcp.pop %v3507
        %v3530 = vmul.f32 1.0, %v3529
        %v3531 = vrcp.pop %v3508
        %v3532 = vmul.f32 1.0, %v3531
        %v3533 = vrcp.pop %v3509
        %v3534 = vmul.f32 1.0, %v3533
        %v3535 = vrcp.pop %v3510
        %v3536 = vmul.f32 1.0, %v3535
        %v3537 = vrcp.pop %v3511
        %v3538 = vmul.f32 1.0, %v3537
        %v3539 = vrcp.pop %v3512
        %v3540 = vmul.f32 1.0, %v3539
        %v3541 = vrcp.pop %v3513
        %v3542 = vmul.f32 1.0, %v3541
        %v3543 = vrcp.pop %v3514
        %v3544 = vmul.f32 1.0, %v3543
        %v3545 = vrcp.pop %v3515
        %v3546 = vmul.f32 1.0, %v3545
        %v3547 = vrcp.pop %v3516
        %v3548 = vmul.f32 1.0, %v3547
        %3549 = vst [vmem:[%s242] sm:$0xff] %v3518
        %3550 = vst [vmem:[%s242 + $0x8] sm:$0xff] %v3520
        %3551 = vst [vmem:[%s242 + $0x10] sm:$0xff] %v3522
        %3552 = vst [vmem:[%s242 + $0x18] sm:$0xff] %v3524
        %3553 = vst [vmem:[%s242 + $0x20] sm:$0xff] %v3526
        %3554 = vst [vmem:[%s242 + $0x28] sm:$0xff] %v3528
        %3555 = vst [vmem:[%s242 + $0x30] sm:$0xff] %v3530
        %3556 = vst [vmem:[%s242 + $0x38] sm:$0xff] %v3532
        %3557 = vst [vmem:[%s242 + $0x40] sm:$0xff] %v3534
        %3558 = vst [vmem:[%s242 + $0x48] sm:$0xff] %v3536
        %3559 = vst [vmem:[%s242 + $0x50] sm:$0xff] %v3538
        %3560 = vst [vmem:[%s242 + $0x58] sm:$0xff] %v3540
        %3561 = vst [vmem:[%s242 + $0x60] sm:$0xff] %v3542
        %3562 = vst [vmem:[%s242 + $0x68] sm:$0xff] %v3544
        %3563 = vst [vmem:[%s242 + $0x70] sm:$0xff] %v3546
        %3564 = vst [vmem:[%s242 + $0x78] sm:$0xff] %v3548
        %s3565 = sand.u32 %s140, 1
        %s3566 = scalar_lea.sflag [#allocation4], %s3565
        %s3567 = sand.u32 %s140, 1
        %s3568 = smul.addr %s3567, 128
        %s3569 = scalar_lea.vmem [#allocation5], %s3568
        // Predicated region
        $region45: #{tpu_custom_call.1} parent=39 // pred_check
          %p3570 = pneg %p150
        $region46: #{tpu_custom_call.1} parent=39 // pred_check_branch
          %3572 = sbr.rel (%p3570) target = $region48
        $region47: #{tpu_custom_call.1} parent=39 // pred_region
          %s3573 = smul.u32 16, %s22
          %s3575 = ssub.s32 2048, 2048
          %3576 = vsyncadd %s3566, %s3575
          %s3577 = smul.addr %s3573, 128
          %s3578 = scalar_lea.hbm %s5, %s3577
          %s3580 = sshll.u32 %s3569, 4
          %s3581 = int_to_ptr.vmem [resolvable:$true] %s3580
          %3583 = dma.vmem_to_hbm [thread:$0]  %s3581, 2048, %s3578, %s3566
        $region48: #{tpu_custom_call.1} parent=39 // pred_fallthru
          _
      $region40: #{tpu_custom_call.1} parent=5 // pred_fallthru
        _
      %p3584 = scmp.le.s32.totalorder 2, %s17
      // Predicated region
      $region49: #{tpu_custom_call.1} parent=5 // pred_check
        %p3585 = pneg %p3584
      $region50: #{tpu_custom_call.1} parent=5 // pred_check_branch
        %3587 = sbr.rel (%p3585) target = $region52
      $region51: #{tpu_custom_call.1} parent=5 // pred_region
        %s3588 = ssub.s32 %s17, 2
        // Predicated region
        $region53: #{tpu_custom_call.1} parent=51 // pred_check
          %p3589 = pneg %p156
        $region54: #{tpu_custom_call.1} parent=51 // pred_check_branch
          %3591 = sbr.rel (%p3589) target = $region56
        $region55: #{tpu_custom_call.1} parent=51 // pred_region
          %s3592 = sand.u32 %s141, 1
          %s3593 = scalar_lea.sflag [#allocation4], %s3592
          %s3594 = sand.u32 %s141, 1
          %s3595 = smul.addr %s3594, 128
          %s3596 = scalar_lea.vmem [#allocation5], %s3595
          %3597 = dma.done %s3593, 2048
        $region56: #{tpu_custom_call.1} parent=51 // pred_fallthru
          _
      $region52: #{tpu_custom_call.1} parent=5 // pred_fallthru
        _
    $region6: #{tpu_custom_call.1} parent=1 // loop_footer
      %s21 = sadd.s32 1, %s17
    $region7: #{tpu_custom_call.1} parent=1 // loop_footer_branch
      %16 = sbr.rel target = $region3
    $region8: #{tpu_custom_call.1} parent=1 // loop_exit
      _
    %3598 = vsyncpa [#allocation3], 1
    %s3599 = scalar_lea.sflag [#allocation3], 1
    %3600 = vsyncpa %s3599, 1
    %3601 = vsyncpa [#allocation4], 1
    %s3602 = scalar_lea.sflag [#allocation4], 1
    %3603 = vsyncpa %s3602, 1

</llo_original>
